<compile_context>
chip_gen: v7x
topology: tpu7x:2x2x1
jax: 0.10.0
libtpu: 0.0.40
codegen_flags: <defaults>
</compile_context>

<pallas_src>
import math
from functools import partial

import jax
import jax.numpy as jnp
from jax import lax
from jax.experimental import pallas as pl
from jax.experimental.pallas import tpu as pltpu

F32 = jnp.float32
BN_EPS = 1e-5
_VMEM_LIMIT = 32 * 1024 * 1024   # working set is KBs; explicit + safe on v5e/v6e/v7x


# ----------------------------------------------------------------------------
# Single fused kernel:
#   (Conv3x3(width==1) + BN + ReLU) x N  ->  Linear+Sigmoid heads -> power norm
#   -> NI = I + H^H diag(q) H -> complex Gauss-Jordan solve NI X = H^H
#   -> beamforming -> sum-rate.
# ----------------------------------------------------------------------------
def make_fused_kernel(nlayers, batch, num_user, num_ant, p_pow):
    U, A, B = num_user, num_ant, batch
    L = 2 * U * A
    BL = B * L
    n_cnn_refs = 6 * nlayers

    def kernel(*refs):
        x_ref, prev_ref, next_ref = refs[0], refs[1], refs[2]
        w_refs = refs[3:3 + n_cnn_refs]
        (wpq_ref, bpq_ref, hr_ref, hi_ref,
         hrt_ref, hit_ref) = refs[3 + n_cnn_refs:3 + n_cnn_refs + 6]
        vout_ref, rate_ref = refs[-2], refs[-1]

        # -------- fused CNN stack, activations laid out (C, B*L) ----------------
        x = x_ref[...]                       # (1, B*L): positions on lanes
        prev_ok = prev_ref[...]              # 0 where l == 0 inside a sample
        next_ok = next_ref[...]              # 0 where l == L-1 inside a sample

        for li in range(nlayers):            # unrolled at trace time
            w0, w1, w2, bias, gamma, beta = (w_refs[6 * li + k][...] for k in range(6))
            cin = x.shape[0]
            cout = w0.shape[0]
            # +/-1 shift along the flattened (batch, L) axis via XLU rotate;
            # wrapped / cross-sample elements are zeroed by the edge masks.
            x_prev = pltpu.roll(x, shift=1, axis=1) * prev_ok
            x_next = pltpu.roll(x, shift=BL - 1, axis=1) * next_ok
            # Conv (only the centre column of the 3x3 kernel acts; width == 1)
            # as rank-1 accumulation over input channels (pure VALU).
            acc = bias + jnp.zeros((cout, BL), F32)
            for c in range(cin):
                acc = (acc
                       + w0[:, c:c + 1] * x_prev[c:c + 1, :]
                       + w1[:, c:c + 1] * x[c:c + 1, :]
                       + w2[:, c:c + 1] * x_next[c:c + 1, :])
            # BatchNorm2d, training mode: per-channel stats over N*H*W (axis 1),
            # biased variance, eps = 1e-5.
            mean = jnp.mean(acc, axis=1, keepdims=True)
            var = jnp.mean((acc - mean) ** 2, axis=1, keepdims=True)
            y = (acc - mean) * lax.rsqrt(var + BN_EPS) * gamma + beta
            x = jnp.maximum(y, 0.0)                       # ReLU

        # last layer has Cout == 1: x is (1, B*L).  Split back per sample.
        feat3 = jnp.concatenate(
            [x[:, b * L:(b + 1) * L][None] for b in range(B)], axis=0)  # (B,1,L)

        # -------- Linear + Sigmoid heads, power normalization (D_out) -----------
        wpq = wpq_ref[...]                                # (L, 2U)
        z = bpq_ref[...] + jnp.zeros((B, 1, 2 * U), F32)  # (B,1,2U)
        for l in range(L):                                # rank-1 over features
            z = z + feat3[:, :, l:l + 1] * wpq[l:l + 1, :]
        pq = 1.0 / (1.0 + jnp.exp(-z))                    # exact sigmoid
        p3 = pq[:, :, :U]
        q3 = pq[:, :, U:]
        dp = p_pow * p3 / jnp.sum(p3, axis=2, keepdims=True)   # (B,1,U), exact div
        dq = p_pow * q3 / jnp.sum(q3, axis=2, keepdims=True)

        hr = hr_ref[...]                                  # (B, U, A)
        hi = hi_ref[...]
        hrt = hrt_ref[...]                                # (B, A, U) = real(H)^T
        hit = hit_ref[...]                                # (B, A, U) = imag(H)^T

        # -------- NI = I + H^H diag(dq) H  (complex, Hermitian PD) --------------
        mr = jnp.zeros((B, A, A), F32)
        mi = jnp.zeros((B, A, A), F32)
        for u in range(U):                                # rank-1 update per user
            w = dq[:, :, u:u + 1]                         # (B,1,1)
            rc = hrt[:, :, u:u + 1]                       # (B,A,1)
            ic = hit[:, :, u:u + 1]
            rr = hr[:, u:u + 1, :]                        # (B,1,A)
            ir = hi[:, u:u + 1, :]
            mr = mr + w * (rc * rr + ic * ir)
            mi = mi + w * (rc * ir - ic * rr)
        eye_a = (lax.broadcasted_iota(jnp.int32, (A, A), 0)
                 == lax.broadcasted_iota(jnp.int32, (A, A), 1)).astype(F32)
        nir = eye_a + mr
        nii = mi

        # -------- solve NI X = H^H by complex Gauss-Jordan (A sweeps) -----------
        # NI is Hermitian PD (dq > 0) -> no pivoting needed.
        aug_r = jnp.concatenate([nir, hrt], axis=2)       # (B, A, A+U)
        aug_i = jnp.concatenate([nii, -hit], axis=2)      # imag(H^H) = -hit
        riota = lax.broadcasted_iota(jnp.int32, (A, A + U), 0)
        for k in range(A):                                # A == 4, unrolled
            pr = aug_r[:, k:k + 1, k:k + 1]               # (B,1,1) pivot
            pi = aug_i[:, k:k + 1, k:k + 1]
            den = pr * pr + pi * pi
            inv_r = pr / den                              # exact complex reciprocal
            inv_i = -pi / den
            row_r = aug_r[:, k:k + 1, :]                  # (B,1,A+U)
            row_i = aug_i[:, k:k + 1, :]
            nrow_r = row_r * inv_r - row_i * inv_i        # normalized pivot row
            nrow_i = row_r * inv_i + row_i * inv_r
            col_r = aug_r[:, :, k:k + 1]                  # (B,A,1)
            col_i = aug_i[:, :, k:k + 1]
            elim_r = aug_r - (col_r * nrow_r - col_i * nrow_i)
            elim_i = aug_i - (col_r * nrow_i + col_i * nrow_r)
            sel = riota == k
            aug_r = jnp.where(sel, nrow_r, elim_r)
            aug_i = jnp.where(sel, nrow_i, elim_i)
        ur = aug_r[:, :, A:]                              # (B,A,U) = NI^{-1} H^H
        ui = aug_i[:, :, A:]

        # -------- beamforming: V[:,u] = sqrt(dp_u)/||NI^{-1}h_u^H|| * NI^{-1}h_u^H
        nrm2 = jnp.sum(ur * ur + ui * ui, axis=1, keepdims=True)   # (B,1,U)
        scale = jnp.sqrt(dp / nrm2)
        vr = ur * scale
        vi = ui * scale
        vout_ref[...] = jnp.concatenate([vr, vi], axis=2)          # merged (B,A,2U)

        # -------- FD_Sum_rate ----------------------------------------------------
        hv_r = jnp.zeros((B, U, U), F32)
        hv_i = jnp.zeros((B, U, U), F32)
        for a in range(A):                                # rank-1 over antennas
            hc_r = hr[:, :, a:a + 1]                      # (B,U,1)
            hc_i = hi[:, :, a:a + 1]
            vrow_r = vr[:, a:a + 1, :]                    # (B,1,U)
            vrow_i = vi[:, a:a + 1, :]
            hv_r = hv_r + hc_r * vrow_r - hc_i * vrow_i
            hv_i = hv_i + hc_r * vrow_i + hc_i * vrow_r
        pw = hv_r * hv_r + hv_i * hv_i
        eye_u = (lax.broadcasted_iota(jnp.int32, (U, U), 0)
                 == lax.broadcasted_iota(jnp.int32, (U, U), 1)).astype(F32)
        signal = jnp.sum(pw * eye_u, axis=2, keepdims=True)        # (B,U,1)
        total = jnp.sum(pw, axis=2, keepdims=True)
        sinr = signal / (total - signal + 1.0)
        rate_u = jnp.log(1.0 + sinr) * (1.0 / math.log(2.0))
        rate_ref[...] = jnp.sum(rate_u, axis=1, keepdims=True)     # (B,1,1)

    return kernel


# ----------------------------------------------------------------------------
# Parameter init (deterministic, mirrors the module's __init__ shapes) and the
# one-time conversion into kernel-friendly layouts.
# ----------------------------------------------------------------------------
def init_params(key, num_user, num_ant, cnn_channel):
    L = 2 * num_user * num_ant
    channels = list(cnn_channel) + [1]            # module appends a 1-channel conv head
    params = {'cnn': []}
    for i in range(1, len(channels)):
        cin, cout = channels[i - 1], channels[i]
        key, kw, kb = jax.random.split(key, 3)
        w = jax.random.normal(kw, (cout, cin, 3, 3), F32) / math.sqrt(cin * 9)
        b = jax.random.normal(kb, (cout,), F32) * 0.1
        gamma = jnp.ones((cout,), F32)            # BatchNorm2d defaults
        beta = jnp.zeros((cout,), F32)
        params['cnn'].append((w, b, gamma, beta))
    key, kp, kbp, kq, kbq = jax.random.split(key, 5)
    params['wp'] = jax.random.normal(kp, (num_user, L), F32) / math.sqrt(L)
    params['bp'] = jax.random.normal(kbp, (num_user,), F32) * 0.1
    params['wq'] = jax.random.normal(kq, (num_user, L), F32) / math.sqrt(L)
    params['bq'] = jax.random.normal(kbq, (num_user,), F32) * 0.1
    return params


def pack_params(params):
    """One-time reshape of module parameters into kernel layouts."""
    packed_cnn = []
    for (w, b, gamma, beta) in params['cnn']:
        cout = w.shape[0]
        wc = w[:, :, :, 1]                        # width==1 -> only centre column acts
        packed_cnn.append((wc[:, :, 0],           # multiplies x[l-1]   (Cout, Cin)
                           wc[:, :, 1],           # multiplies x[l]
                           wc[:, :, 2],           # multiplies x[l+1]
                           b.reshape(cout, 1),
                           gamma.reshape(cout, 1),
                           beta.reshape(cout, 1)))
    w_pq = jnp.concatenate([params['wp'].T, params['wq'].T], axis=1)   # (L, 2U)
    b_pq = jnp.concatenate([params['bp'], params['bq']])[None, :]      # (1, 2U)
    return {'cnn': tuple(packed_cnn), 'w_pq': w_pq, 'b_pq': b_pq}


# ----------------------------------------------------------------------------
# Forward pass (host glue + one fused Pallas kernel)
# ----------------------------------------------------------------------------
def db_fc_cnn_forward(h_real, h_imag, packed, p_pow):
    B, U, A = h_real.shape
    L = 2 * U * A
    BL = B * L

    # H_input = [vec(real(H)), vec(imag(H))] -> (B, L), laid out (1, B*L) with
    # B*L on the lane axis.
    h_input = jnp.concatenate([h_real.reshape(B, -1), h_imag.reshape(B, -1)], axis=1)
    x = h_input.reshape(1, BL)

    # O(BL) intra-sample edge masks for the +/-1 roll (constant-folded under jit).
    pos = jnp.arange(BL, dtype=jnp.int32) % L
    prev_ok = (pos > 0).astype(F32).reshape(1, BL)
    next_ok = (pos < L - 1).astype(F32).reshape(1, BL)

    hrt = jnp.transpose(h_real, (0, 2, 1))        # (B, A, U)
    hit = jnp.transpose(h_imag, (0, 2, 1))

    args = [x, prev_ok, next_ok]
    for layer in packed['cnn']:
        args.extend(layer)
    args.extend([packed['w_pq'], packed['b_pq'], h_real, h_imag, hrt, hit])

    vout, rate = pl.pallas_call(
        make_fused_kernel(len(packed['cnn']), B, U, A, float(p_pow)),
        out_shape=(jax.ShapeDtypeStruct((B, A, 2 * U), F32),
                   jax.ShapeDtypeStruct((B, 1, 1), F32)),
        compiler_params=pltpu.CompilerParams(vmem_limit_bytes=_VMEM_LIMIT),
    )(*args)

    V = vout[:, :, :U] + 1j * vout[:, :, U:]      # (B, A, U) complex64
    return V, rate.reshape(B, 1)


if __name__ == "__main__":
    num_user, num_ant = 4, 4
    batch = 2
    p_pow = 10.0
    cnn_channel = [1, 4, 8]                       # first entry is the input channel count (1)

    key = jax.random.PRNGKey(0)
    kparams, kh1, kh2 = jax.random.split(key, 3)
    params = init_params(kparams, num_user, num_ant, cnn_channel)
    packed = pack_params(params)                  # one-time weight layout conversion

    h_real = jax.random.normal(kh1, (batch, num_user, num_ant), F32)
    h_imag = jax.random.normal(kh2, (batch, num_user, num_ant), F32)

    fwd = jax.jit(partial(db_fc_cnn_forward, p_pow=float(p_pow)))
    V, rate = fwd(h_real, h_imag, packed)
    jax.block_until_ready((V, rate))
    assert V.shape == (batch, num_ant, num_user)
    assert rate.shape == (batch, 1)
    print("KERNEL_OK")
</pallas_src>

<mosaic_0001>
module attributes {stable_mosaic.version = 11 : i64} {
  func.func @kernel(%arg0: memref<1x64xf32, #tpu.memory_space<vmem>>, %arg1: memref<1x64xf32, #tpu.memory_space<vmem>>, %arg2: memref<1x64xf32, #tpu.memory_space<vmem>>, %arg3: memref<4x1xf32, #tpu.memory_space<vmem>>, %arg4: memref<4x1xf32, #tpu.memory_space<vmem>>, %arg5: memref<4x1xf32, #tpu.memory_space<vmem>>, %arg6: memref<4x1xf32, #tpu.memory_space<vmem>>, %arg7: memref<4x1xf32, #tpu.memory_space<vmem>>, %arg8: memref<4x1xf32, #tpu.memory_space<vmem>>, %arg9: memref<8x4xf32, #tpu.memory_space<vmem>>, %arg10: memref<8x4xf32, #tpu.memory_space<vmem>>, %arg11: memref<8x4xf32, #tpu.memory_space<vmem>>, %arg12: memref<8x1xf32, #tpu.memory_space<vmem>>, %arg13: memref<8x1xf32, #tpu.memory_space<vmem>>, %arg14: memref<8x1xf32, #tpu.memory_space<vmem>>, %arg15: memref<1x8xf32, #tpu.memory_space<vmem>>, %arg16: memref<1x8xf32, #tpu.memory_space<vmem>>, %arg17: memref<1x8xf32, #tpu.memory_space<vmem>>, %arg18: memref<1x1xf32, #tpu.memory_space<vmem>>, %arg19: memref<1x1xf32, #tpu.memory_space<vmem>>, %arg20: memref<1x1xf32, #tpu.memory_space<vmem>>, %arg21: memref<32x8xf32, #tpu.memory_space<vmem>>, %arg22: memref<1x8xf32, #tpu.memory_space<vmem>>, %arg23: memref<2x4x4xf32, #tpu.memory_space<vmem>>, %arg24: memref<2x4x4xf32, #tpu.memory_space<vmem>>, %arg25: memref<2x4x4xf32, #tpu.memory_space<vmem>>, %arg26: memref<2x4x4xf32, #tpu.memory_space<vmem>>, %arg27: memref<2x4x8xf32, #tpu.memory_space<vmem>>, %arg28: memref<2x1x1xf32, #tpu.memory_space<vmem>>) attributes {dimension_semantics = [], scalar_prefetch = 0 : i64, scratch_operands = 0 : i64, tpu.core_type = #tpu.core_type<tc>} {
    %c0 = arith.constant 0 : index
    %c0_0 = arith.constant 0 : index
    %0 = vector.load %arg0[%c0, %c0_0] : memref<1x64xf32, #tpu.memory_space<vmem>>, vector<1x64xf32>
    %c0_1 = arith.constant 0 : index
    %c0_2 = arith.constant 0 : index
    %1 = vector.load %arg1[%c0_1, %c0_2] : memref<1x64xf32, #tpu.memory_space<vmem>>, vector<1x64xf32>
    %c0_3 = arith.constant 0 : index
    %c0_4 = arith.constant 0 : index
    %2 = vector.load %arg2[%c0_3, %c0_4] : memref<1x64xf32, #tpu.memory_space<vmem>>, vector<1x64xf32>
    %c0_5 = arith.constant 0 : index
    %c0_6 = arith.constant 0 : index
    %3 = vector.load %arg3[%c0_5, %c0_6] : memref<4x1xf32, #tpu.memory_space<vmem>>, vector<4x1xf32>
    %c0_7 = arith.constant 0 : index
    %c0_8 = arith.constant 0 : index
    %4 = vector.load %arg4[%c0_7, %c0_8] : memref<4x1xf32, #tpu.memory_space<vmem>>, vector<4x1xf32>
    %c0_9 = arith.constant 0 : index
    %c0_10 = arith.constant 0 : index
    %5 = vector.load %arg5[%c0_9, %c0_10] : memref<4x1xf32, #tpu.memory_space<vmem>>, vector<4x1xf32>
    %c0_11 = arith.constant 0 : index
    %c0_12 = arith.constant 0 : index
    %6 = vector.load %arg6[%c0_11, %c0_12] : memref<4x1xf32, #tpu.memory_space<vmem>>, vector<4x1xf32>
    %c0_13 = arith.constant 0 : index
    %c0_14 = arith.constant 0 : index
    %7 = vector.load %arg7[%c0_13, %c0_14] : memref<4x1xf32, #tpu.memory_space<vmem>>, vector<4x1xf32>
    %c0_15 = arith.constant 0 : index
    %c0_16 = arith.constant 0 : index
    %8 = vector.load %arg8[%c0_15, %c0_16] : memref<4x1xf32, #tpu.memory_space<vmem>>, vector<4x1xf32>
    %c1_i32 = arith.constant 1 : i32
    %9 = tpu.dynamic_rotate %0 by %c1_i32 dim 1 : vector<1x64xf32>, i32 -> vector<1x64xf32>
    %10 = arith.mulf %9, %1 : vector<1x64xf32>
    %c63_i32 = arith.constant 63 : i32
    %11 = tpu.dynamic_rotate %0 by %c63_i32 dim 1 : vector<1x64xf32>, i32 -> vector<1x64xf32>
    %12 = arith.mulf %11, %2 : vector<1x64xf32>
    %cst = arith.constant 0.000000e+00 : f32
    %13 = vector.broadcast %cst : f32 to vector<4x64xf32>
    %14 = vector.broadcast %6 : vector<4x1xf32> to vector<4x64xf32>
    %15 = arith.addf %14, %13 : vector<4x64xf32>
    %16 = vector.broadcast %3 : vector<4x1xf32> to vector<4x64xf32>
    %17 = vector.broadcast %10 : vector<1x64xf32> to vector<4x64xf32>
    %18 = arith.mulf %16, %17 : vector<4x64xf32>
    %19 = arith.addf %15, %18 : vector<4x64xf32>
    %20 = vector.broadcast %4 : vector<4x1xf32> to vector<4x64xf32>
    %21 = vector.broadcast %0 : vector<1x64xf32> to vector<4x64xf32>
    %22 = arith.mulf %20, %21 : vector<4x64xf32>
    %23 = arith.addf %19, %22 : vector<4x64xf32>
    %24 = vector.broadcast %5 : vector<4x1xf32> to vector<4x64xf32>
    %25 = vector.broadcast %12 : vector<1x64xf32> to vector<4x64xf32>
    %26 = arith.mulf %24, %25 : vector<4x64xf32>
    %27 = arith.addf %23, %26 : vector<4x64xf32>
    %cst_17 = arith.constant dense<0.000000e+00> : vector<4xf32>
    %28 = vector.multi_reduction <add>, %27, %cst_17 [1] : vector<4x64xf32> to vector<4xf32>
    %29 = vector.shape_cast %28 : vector<4xf32> to vector<4x1xf32>
    %cst_18 = arith.constant 6.400000e+01 : f32
    %30 = vector.broadcast %cst_18 : f32 to vector<4x1xf32>
    %31 = arith.divf %29, %30 : vector<4x1xf32>
    %32 = vector.broadcast %31 : vector<4x1xf32> to vector<4x64xf32>
    %33 = arith.subf %27, %32 : vector<4x64xf32>
    %34 = arith.mulf %33, %33 : vector<4x64xf32>
    %cst_19 = arith.constant dense<0.000000e+00> : vector<4xf32>
    %35 = vector.multi_reduction <add>, %34, %cst_19 [1] : vector<4x64xf32> to vector<4xf32>
    %36 = vector.shape_cast %35 : vector<4xf32> to vector<4x1xf32>
    %cst_20 = arith.constant 6.400000e+01 : f32
    %37 = vector.broadcast %cst_20 : f32 to vector<4x1xf32>
    %38 = arith.divf %36, %37 : vector<4x1xf32>
    %39 = vector.broadcast %31 : vector<4x1xf32> to vector<4x64xf32>
    %40 = arith.subf %27, %39 : vector<4x64xf32>
    %cst_21 = arith.constant 9.99999974E-6 : f32
    %41 = vector.broadcast %cst_21 : f32 to vector<4x1xf32>
    %42 = arith.addf %38, %41 : vector<4x1xf32>
    %43 = math.rsqrt %42 : vector<4x1xf32>
    %44 = vector.broadcast %43 : vector<4x1xf32> to vector<4x64xf32>
    %45 = arith.mulf %40, %44 : vector<4x64xf32>
    %46 = vector.broadcast %7 : vector<4x1xf32> to vector<4x64xf32>
    %47 = arith.mulf %45, %46 : vector<4x64xf32>
    %48 = vector.broadcast %8 : vector<4x1xf32> to vector<4x64xf32>
    %49 = arith.addf %47, %48 : vector<4x64xf32>
    %cst_22 = arith.constant 0.000000e+00 : f32
    %50 = vector.broadcast %cst_22 : f32 to vector<4x64xf32>
    %51 = arith.maximumf %49, %50 : vector<4x64xf32>
    %c0_23 = arith.constant 0 : index
    %c0_24 = arith.constant 0 : index
    %52 = vector.load %arg9[%c0_23, %c0_24] : memref<8x4xf32, #tpu.memory_space<vmem>>, vector<8x4xf32>
    %c0_25 = arith.constant 0 : index
    %c0_26 = arith.constant 0 : index
    %53 = vector.load %arg10[%c0_25, %c0_26] : memref<8x4xf32, #tpu.memory_space<vmem>>, vector<8x4xf32>
    %c0_27 = arith.constant 0 : index
    %c0_28 = arith.constant 0 : index
    %54 = vector.load %arg11[%c0_27, %c0_28] : memref<8x4xf32, #tpu.memory_space<vmem>>, vector<8x4xf32>
    %c0_29 = arith.constant 0 : index
    %c0_30 = arith.constant 0 : index
    %55 = vector.load %arg12[%c0_29, %c0_30] : memref<8x1xf32, #tpu.memory_space<vmem>>, vector<8x1xf32>
    %c0_31 = arith.constant 0 : index
    %c0_32 = arith.constant 0 : index
    %56 = vector.load %arg13[%c0_31, %c0_32] : memref<8x1xf32, #tpu.memory_space<vmem>>, vector<8x1xf32>
    %c0_33 = arith.constant 0 : index
    %c0_34 = arith.constant 0 : index
    %57 = vector.load %arg14[%c0_33, %c0_34] : memref<8x1xf32, #tpu.memory_space<vmem>>, vector<8x1xf32>
    %c1_i32_35 = arith.constant 1 : i32
    %58 = tpu.dynamic_rotate %51 by %c1_i32_35 dim 1 : vector<4x64xf32>, i32 -> vector<4x64xf32>
    %59 = vector.broadcast %1 : vector<1x64xf32> to vector<4x64xf32>
    %60 = arith.mulf %58, %59 : vector<4x64xf32>
    %c63_i32_36 = arith.constant 63 : i32
    %61 = tpu.dynamic_rotate %51 by %c63_i32_36 dim 1 : vector<4x64xf32>, i32 -> vector<4x64xf32>
    %62 = vector.broadcast %2 : vector<1x64xf32> to vector<4x64xf32>
    %63 = arith.mulf %61, %62 : vector<4x64xf32>
    %cst_37 = arith.constant 0.000000e+00 : f32
    %64 = vector.broadcast %cst_37 : f32 to vector<8x64xf32>
    %65 = vector.broadcast %55 : vector<8x1xf32> to vector<8x64xf32>
    %66 = arith.addf %65, %64 : vector<8x64xf32>
    %67 = vector.extract_strided_slice %52 {offsets = [0, 0], sizes = [8, 1], strides = [1, 1]} : vector<8x4xf32> to vector<8x1xf32>
    %68 = vector.extract_strided_slice %60 {offsets = [0, 0], sizes = [1, 64], strides = [1, 1]} : vector<4x64xf32> to vector<1x64xf32>
    %69 = vector.broadcast %67 : vector<8x1xf32> to vector<8x64xf32>
    %70 = vector.broadcast %68 : vector<1x64xf32> to vector<8x64xf32>
    %71 = arith.mulf %69, %70 : vector<8x64xf32>
    %72 = arith.addf %66, %71 : vector<8x64xf32>
    %73 = vector.extract_strided_slice %53 {offsets = [0, 0], sizes = [8, 1], strides = [1, 1]} : vector<8x4xf32> to vector<8x1xf32>
    %74 = vector.extract_strided_slice %51 {offsets = [0, 0], sizes = [1, 64], strides = [1, 1]} : vector<4x64xf32> to vector<1x64xf32>
    %75 = vector.broadcast %73 : vector<8x1xf32> to vector<8x64xf32>
    %76 = vector.broadcast %74 : vector<1x64xf32> to vector<8x64xf32>
    %77 = arith.mulf %75, %76 : vector<8x64xf32>
    %78 = arith.addf %72, %77 : vector<8x64xf32>
    %79 = vector.extract_strided_slice %54 {offsets = [0, 0], sizes = [8, 1], strides = [1, 1]} : vector<8x4xf32> to vector<8x1xf32>
    %80 = vector.extract_strided_slice %63 {offsets = [0, 0], sizes = [1, 64], strides = [1, 1]} : vector<4x64xf32> to vector<1x64xf32>
    %81 = vector.broadcast %79 : vector<8x1xf32> to vector<8x64xf32>
    %82 = vector.broadcast %80 : vector<1x64xf32> to vector<8x64xf32>
    %83 = arith.mulf %81, %82 : vector<8x64xf32>
    %84 = arith.addf %78, %83 : vector<8x64xf32>
    %85 = vector.extract_strided_slice %52 {offsets = [0, 1], sizes = [8, 1], strides = [1, 1]} : vector<8x4xf32> to vector<8x1xf32>
    %86 = vector.extract_strided_slice %60 {offsets = [1, 0], sizes = [1, 64], strides = [1, 1]} : vector<4x64xf32> to vector<1x64xf32>
    %87 = vector.broadcast %85 : vector<8x1xf32> to vector<8x64xf32>
    %88 = vector.broadcast %86 : vector<1x64xf32> to vector<8x64xf32>
    %89 = arith.mulf %87, %88 : vector<8x64xf32>
    %90 = arith.addf %84, %89 : vector<8x64xf32>
    %91 = vector.extract_strided_slice %53 {offsets = [0, 1], sizes = [8, 1], strides = [1, 1]} : vector<8x4xf32> to vector<8x1xf32>
    %92 = vector.extract_strided_slice %51 {offsets = [1, 0], sizes = [1, 64], strides = [1, 1]} : vector<4x64xf32> to vector<1x64xf32>
    %93 = vector.broadcast %91 : vector<8x1xf32> to vector<8x64xf32>
    %94 = vector.broadcast %92 : vector<1x64xf32> to vector<8x64xf32>
    %95 = arith.mulf %93, %94 : vector<8x64xf32>
    %96 = arith.addf %90, %95 : vector<8x64xf32>
    %97 = vector.extract_strided_slice %54 {offsets = [0, 1], sizes = [8, 1], strides = [1, 1]} : vector<8x4xf32> to vector<8x1xf32>
    %98 = vector.extract_strided_slice %63 {offsets = [1, 0], sizes = [1, 64], strides = [1, 1]} : vector<4x64xf32> to vector<1x64xf32>
    %99 = vector.broadcast %97 : vector<8x1xf32> to vector<8x64xf32>
    %100 = vector.broadcast %98 : vector<1x64xf32> to vector<8x64xf32>
    %101 = arith.mulf %99, %100 : vector<8x64xf32>
    %102 = arith.addf %96, %101 : vector<8x64xf32>
    %103 = vector.extract_strided_slice %52 {offsets = [0, 2], sizes = [8, 1], strides = [1, 1]} : vector<8x4xf32> to vector<8x1xf32>
    %104 = vector.extract_strided_slice %60 {offsets = [2, 0], sizes = [1, 64], strides = [1, 1]} : vector<4x64xf32> to vector<1x64xf32>
    %105 = vector.broadcast %103 : vector<8x1xf32> to vector<8x64xf32>
    %106 = vector.broadcast %104 : vector<1x64xf32> to vector<8x64xf32>
    %107 = arith.mulf %105, %106 : vector<8x64xf32>
    %108 = arith.addf %102, %107 : vector<8x64xf32>
    %109 = vector.extract_strided_slice %53 {offsets = [0, 2], sizes = [8, 1], strides = [1, 1]} : vector<8x4xf32> to vector<8x1xf32>
    %110 = vector.extract_strided_slice %51 {offsets = [2, 0], sizes = [1, 64], strides = [1, 1]} : vector<4x64xf32> to vector<1x64xf32>
    %111 = vector.broadcast %109 : vector<8x1xf32> to vector<8x64xf32>
    %112 = vector.broadcast %110 : vector<1x64xf32> to vector<8x64xf32>
    %113 = arith.mulf %111, %112 : vector<8x64xf32>
    %114 = arith.addf %108, %113 : vector<8x64xf32>
    %115 = vector.extract_strided_slice %54 {offsets = [0, 2], sizes = [8, 1], strides = [1, 1]} : vector<8x4xf32> to vector<8x1xf32>
    %116 = vector.extract_strided_slice %63 {offsets = [2, 0], sizes = [1, 64], strides = [1, 1]} : vector<4x64xf32> to vector<1x64xf32>
    %117 = vector.broadcast %115 : vector<8x1xf32> to vector<8x64xf32>
    %118 = vector.broadcast %116 : vector<1x64xf32> to vector<8x64xf32>
    %119 = arith.mulf %117, %118 : vector<8x64xf32>
    %120 = arith.addf %114, %119 : vector<8x64xf32>
    %121 = vector.extract_strided_slice %52 {offsets = [0, 3], sizes = [8, 1], strides = [1, 1]} : vector<8x4xf32> to vector<8x1xf32>
    %122 = vector.extract_strided_slice %60 {offsets = [3, 0], sizes = [1, 64], strides = [1, 1]} : vector<4x64xf32> to vector<1x64xf32>
    %123 = vector.broadcast %121 : vector<8x1xf32> to vector<8x64xf32>
    %124 = vector.broadcast %122 : vector<1x64xf32> to vector<8x64xf32>
    %125 = arith.mulf %123, %124 : vector<8x64xf32>
    %126 = arith.addf %120, %125 : vector<8x64xf32>
    %127 = vector.extract_strided_slice %53 {offsets = [0, 3], sizes = [8, 1], strides = [1, 1]} : vector<8x4xf32> to vector<8x1xf32>
    %128 = vector.extract_strided_slice %51 {offsets = [3, 0], sizes = [1, 64], strides = [1, 1]} : vector<4x64xf32> to vector<1x64xf32>
    %129 = vector.broadcast %127 : vector<8x1xf32> to vector<8x64xf32>
    %130 = vector.broadcast %128 : vector<1x64xf32> to vector<8x64xf32>
    %131 = arith.mulf %129, %130 : vector<8x64xf32>
    %132 = arith.addf %126, %131 : vector<8x64xf32>
    %133 = vector.extract_strided_slice %54 {offsets = [0, 3], sizes = [8, 1], strides = [1, 1]} : vector<8x4xf32> to vector<8x1xf32>
    %134 = vector.extract_strided_slice %63 {offsets = [3, 0], sizes = [1, 64], strides = [1, 1]} : vector<4x64xf32> to vector<1x64xf32>
    %135 = vector.broadcast %133 : vector<8x1xf32> to vector<8x64xf32>
    %136 = vector.broadcast %134 : vector<1x64xf32> to vector<8x64xf32>
    %137 = arith.mulf %135, %136 : vector<8x64xf32>
    %138 = arith.addf %132, %137 : vector<8x64xf32>
    %cst_38 = arith.constant dense<0.000000e+00> : vector<8xf32>
    %139 = vector.multi_reduction <add>, %138, %cst_38 [1] : vector<8x64xf32> to vector<8xf32>
    %140 = vector.shape_cast %139 : vector<8xf32> to vector<8x1xf32>
    %cst_39 = arith.constant 6.400000e+01 : f32
    %141 = vector.broadcast %cst_39 : f32 to vector<8x1xf32>
    %142 = arith.divf %140, %141 : vector<8x1xf32>
    %143 = vector.broadcast %142 : vector<8x1xf32> to vector<8x64xf32>
    %144 = arith.subf %138, %143 : vector<8x64xf32>
    %145 = arith.mulf %144, %144 : vector<8x64xf32>
    %cst_40 = arith.constant dense<0.000000e+00> : vector<8xf32>
    %146 = vector.multi_reduction <add>, %145, %cst_40 [1] : vector<8x64xf32> to vector<8xf32>
    %147 = vector.shape_cast %146 : vector<8xf32> to vector<8x1xf32>
    %cst_41 = arith.constant 6.400000e+01 : f32
    %148 = vector.broadcast %cst_41 : f32 to vector<8x1xf32>
    %149 = arith.divf %147, %148 : vector<8x1xf32>
    %150 = vector.broadcast %142 : vector<8x1xf32> to vector<8x64xf32>
    %151 = arith.subf %138, %150 : vector<8x64xf32>
    %cst_42 = arith.constant 9.99999974E-6 : f32
    %152 = vector.broadcast %cst_42 : f32 to vector<8x1xf32>
    %153 = arith.addf %149, %152 : vector<8x1xf32>
    %154 = math.rsqrt %153 : vector<8x1xf32>
    %155 = vector.broadcast %154 : vector<8x1xf32> to vector<8x64xf32>
    %156 = arith.mulf %151, %155 : vector<8x64xf32>
    %157 = vector.broadcast %56 : vector<8x1xf32> to vector<8x64xf32>
    %158 = arith.mulf %156, %157 : vector<8x64xf32>
    %159 = vector.broadcast %57 : vector<8x1xf32> to vector<8x64xf32>
    %160 = arith.addf %158, %159 : vector<8x64xf32>
    %cst_43 = arith.constant 0.000000e+00 : f32
    %161 = vector.broadcast %cst_43 : f32 to vector<8x64xf32>
    %162 = arith.maximumf %160, %161 : vector<8x64xf32>
    %c0_44 = arith.constant 0 : index
    %c0_45 = arith.constant 0 : index
    %163 = vector.load %arg15[%c0_44, %c0_45] : memref<1x8xf32, #tpu.memory_space<vmem>>, vector<1x8xf32>
    %c0_46 = arith.constant 0 : index
    %c0_47 = arith.constant 0 : index
    %164 = vector.load %arg16[%c0_46, %c0_47] : memref<1x8xf32, #tpu.memory_space<vmem>>, vector<1x8xf32>
    %c0_48 = arith.constant 0 : index
    %c0_49 = arith.constant 0 : index
    %165 = vector.load %arg17[%c0_48, %c0_49] : memref<1x8xf32, #tpu.memory_space<vmem>>, vector<1x8xf32>
    %c0_50 = arith.constant 0 : index
    %c0_51 = arith.constant 0 : index
    %166 = vector.load %arg18[%c0_50, %c0_51] : memref<1x1xf32, #tpu.memory_space<vmem>>, vector<1x1xf32>
    %c0_52 = arith.constant 0 : index
    %c0_53 = arith.constant 0 : index
    %167 = vector.load %arg19[%c0_52, %c0_53] : memref<1x1xf32, #tpu.memory_space<vmem>>, vector<1x1xf32>
    %c0_54 = arith.constant 0 : index
    %c0_55 = arith.constant 0 : index
    %168 = vector.load %arg20[%c0_54, %c0_55] : memref<1x1xf32, #tpu.memory_space<vmem>>, vector<1x1xf32>
    %c1_i32_56 = arith.constant 1 : i32
    %169 = tpu.dynamic_rotate %162 by %c1_i32_56 dim 1 : vector<8x64xf32>, i32 -> vector<8x64xf32>
    %170 = vector.broadcast %1 : vector<1x64xf32> to vector<8x64xf32>
    %171 = arith.mulf %169, %170 : vector<8x64xf32>
    %c63_i32_57 = arith.constant 63 : i32
    %172 = tpu.dynamic_rotate %162 by %c63_i32_57 dim 1 : vector<8x64xf32>, i32 -> vector<8x64xf32>
    %173 = vector.broadcast %2 : vector<1x64xf32> to vector<8x64xf32>
    %174 = arith.mulf %172, %173 : vector<8x64xf32>
    %cst_58 = arith.constant 0.000000e+00 : f32
    %175 = vector.broadcast %cst_58 : f32 to vector<1x64xf32>
    %176 = vector.broadcast %166 : vector<1x1xf32> to vector<1x64xf32>
    %177 = arith.addf %176, %175 : vector<1x64xf32>
    %178 = vector.extract_strided_slice %163 {offsets = [0, 0], sizes = [1, 1], strides = [1, 1]} : vector<1x8xf32> to vector<1x1xf32>
    %179 = vector.extract_strided_slice %171 {offsets = [0, 0], sizes = [1, 64], strides = [1, 1]} : vector<8x64xf32> to vector<1x64xf32>
    %180 = vector.broadcast %178 : vector<1x1xf32> to vector<1x64xf32>
    %181 = arith.mulf %180, %179 : vector<1x64xf32>
    %182 = arith.addf %177, %181 : vector<1x64xf32>
    %183 = vector.extract_strided_slice %164 {offsets = [0, 0], sizes = [1, 1], strides = [1, 1]} : vector<1x8xf32> to vector<1x1xf32>
    %184 = vector.extract_strided_slice %162 {offsets = [0, 0], sizes = [1, 64], strides = [1, 1]} : vector<8x64xf32> to vector<1x64xf32>
    %185 = vector.broadcast %183 : vector<1x1xf32> to vector<1x64xf32>
    %186 = arith.mulf %185, %184 : vector<1x64xf32>
    %187 = arith.addf %182, %186 : vector<1x64xf32>
    %188 = vector.extract_strided_slice %165 {offsets = [0, 0], sizes = [1, 1], strides = [1, 1]} : vector<1x8xf32> to vector<1x1xf32>
    %189 = vector.extract_strided_slice %174 {offsets = [0, 0], sizes = [1, 64], strides = [1, 1]} : vector<8x64xf32> to vector<1x64xf32>
    %190 = vector.broadcast %188 : vector<1x1xf32> to vector<1x64xf32>
    %191 = arith.mulf %190, %189 : vector<1x64xf32>
    %192 = arith.addf %187, %191 : vector<1x64xf32>
    %193 = vector.extract_strided_slice %163 {offsets = [0, 1], sizes = [1, 1], strides = [1, 1]} : vector<1x8xf32> to vector<1x1xf32>
    %194 = vector.extract_strided_slice %171 {offsets = [1, 0], sizes = [1, 64], strides = [1, 1]} : vector<8x64xf32> to vector<1x64xf32>
    %195 = vector.broadcast %193 : vector<1x1xf32> to vector<1x64xf32>
    %196 = arith.mulf %195, %194 : vector<1x64xf32>
    %197 = arith.addf %192, %196 : vector<1x64xf32>
    %198 = vector.extract_strided_slice %164 {offsets = [0, 1], sizes = [1, 1], strides = [1, 1]} : vector<1x8xf32> to vector<1x1xf32>
    %199 = vector.extract_strided_slice %162 {offsets = [1, 0], sizes = [1, 64], strides = [1, 1]} : vector<8x64xf32> to vector<1x64xf32>
    %200 = vector.broadcast %198 : vector<1x1xf32> to vector<1x64xf32>
    %201 = arith.mulf %200, %199 : vector<1x64xf32>
    %202 = arith.addf %197, %201 : vector<1x64xf32>
    %203 = vector.extract_strided_slice %165 {offsets = [0, 1], sizes = [1, 1], strides = [1, 1]} : vector<1x8xf32> to vector<1x1xf32>
    %204 = vector.extract_strided_slice %174 {offsets = [1, 0], sizes = [1, 64], strides = [1, 1]} : vector<8x64xf32> to vector<1x64xf32>
    %205 = vector.broadcast %203 : vector<1x1xf32> to vector<1x64xf32>
    %206 = arith.mulf %205, %204 : vector<1x64xf32>
    %207 = arith.addf %202, %206 : vector<1x64xf32>
    %208 = vector.extract_strided_slice %163 {offsets = [0, 2], sizes = [1, 1], strides = [1, 1]} : vector<1x8xf32> to vector<1x1xf32>
    %209 = vector.extract_strided_slice %171 {offsets = [2, 0], sizes = [1, 64], strides = [1, 1]} : vector<8x64xf32> to vector<1x64xf32>
    %210 = vector.broadcast %208 : vector<1x1xf32> to vector<1x64xf32>
    %211 = arith.mulf %210, %209 : vector<1x64xf32>
    %212 = arith.addf %207, %211 : vector<1x64xf32>
    %213 = vector.extract_strided_slice %164 {offsets = [0, 2], sizes = [1, 1], strides = [1, 1]} : vector<1x8xf32> to vector<1x1xf32>
    %214 = vector.extract_strided_slice %162 {offsets = [2, 0], sizes = [1, 64], strides = [1, 1]} : vector<8x64xf32> to vector<1x64xf32>
    %215 = vector.broadcast %213 : vector<1x1xf32> to vector<1x64xf32>
    %216 = arith.mulf %215, %214 : vector<1x64xf32>
    %217 = arith.addf %212, %216 : vector<1x64xf32>
    %218 = vector.extract_strided_slice %165 {offsets = [0, 2], sizes = [1, 1], strides = [1, 1]} : vector<1x8xf32> to vector<1x1xf32>
    %219 = vector.extract_strided_slice %174 {offsets = [2, 0], sizes = [1, 64], strides = [1, 1]} : vector<8x64xf32> to vector<1x64xf32>
    %220 = vector.broadcast %218 : vector<1x1xf32> to vector<1x64xf32>
    %221 = arith.mulf %220, %219 : vector<1x64xf32>
    %222 = arith.addf %217, %221 : vector<1x64xf32>
    %223 = vector.extract_strided_slice %163 {offsets = [0, 3], sizes = [1, 1], strides = [1, 1]} : vector<1x8xf32> to vector<1x1xf32>
    %224 = vector.extract_strided_slice %171 {offsets = [3, 0], sizes = [1, 64], strides = [1, 1]} : vector<8x64xf32> to vector<1x64xf32>
    %225 = vector.broadcast %223 : vector<1x1xf32> to vector<1x64xf32>
    %226 = arith.mulf %225, %224 : vector<1x64xf32>
    %227 = arith.addf %222, %226 : vector<1x64xf32>
    %228 = vector.extract_strided_slice %164 {offsets = [0, 3], sizes = [1, 1], strides = [1, 1]} : vector<1x8xf32> to vector<1x1xf32>
    %229 = vector.extract_strided_slice %162 {offsets = [3, 0], sizes = [1, 64], strides = [1, 1]} : vector<8x64xf32> to vector<1x64xf32>
    %230 = vector.broadcast %228 : vector<1x1xf32> to vector<1x64xf32>
    %231 = arith.mulf %230, %229 : vector<1x64xf32>
    %232 = arith.addf %227, %231 : vector<1x64xf32>
    %233 = vector.extract_strided_slice %165 {offsets = [0, 3], sizes = [1, 1], strides = [1, 1]} : vector<1x8xf32> to vector<1x1xf32>
    %234 = vector.extract_strided_slice %174 {offsets = [3, 0], sizes = [1, 64], strides = [1, 1]} : vector<8x64xf32> to vector<1x64xf32>
    %235 = vector.broadcast %233 : vector<1x1xf32> to vector<1x64xf32>
    %236 = arith.mulf %235, %234 : vector<1x64xf32>
    %237 = arith.addf %232, %236 : vector<1x64xf32>
    %238 = vector.extract_strided_slice %163 {offsets = [0, 4], sizes = [1, 1], strides = [1, 1]} : vector<1x8xf32> to vector<1x1xf32>
    %239 = vector.extract_strided_slice %171 {offsets = [4, 0], sizes = [1, 64], strides = [1, 1]} : vector<8x64xf32> to vector<1x64xf32>
    %240 = vector.broadcast %238 : vector<1x1xf32> to vector<1x64xf32>
    %241 = arith.mulf %240, %239 : vector<1x64xf32>
    %242 = arith.addf %237, %241 : vector<1x64xf32>
    %243 = vector.extract_strided_slice %164 {offsets = [0, 4], sizes = [1, 1], strides = [1, 1]} : vector<1x8xf32> to vector<1x1xf32>
    %244 = vector.extract_strided_slice %162 {offsets = [4, 0], sizes = [1, 64], strides = [1, 1]} : vector<8x64xf32> to vector<1x64xf32>
    %245 = vector.broadcast %243 : vector<1x1xf32> to vector<1x64xf32>
    %246 = arith.mulf %245, %244 : vector<1x64xf32>
    %247 = arith.addf %242, %246 : vector<1x64xf32>
    %248 = vector.extract_strided_slice %165 {offsets = [0, 4], sizes = [1, 1], strides = [1, 1]} : vector<1x8xf32> to vector<1x1xf32>
    %249 = vector.extract_strided_slice %174 {offsets = [4, 0], sizes = [1, 64], strides = [1, 1]} : vector<8x64xf32> to vector<1x64xf32>
    %250 = vector.broadcast %248 : vector<1x1xf32> to vector<1x64xf32>
    %251 = arith.mulf %250, %249 : vector<1x64xf32>
    %252 = arith.addf %247, %251 : vector<1x64xf32>
    %253 = vector.extract_strided_slice %163 {offsets = [0, 5], sizes = [1, 1], strides = [1, 1]} : vector<1x8xf32> to vector<1x1xf32>
    %254 = vector.extract_strided_slice %171 {offsets = [5, 0], sizes = [1, 64], strides = [1, 1]} : vector<8x64xf32> to vector<1x64xf32>
    %255 = vector.broadcast %253 : vector<1x1xf32> to vector<1x64xf32>
    %256 = arith.mulf %255, %254 : vector<1x64xf32>
    %257 = arith.addf %252, %256 : vector<1x64xf32>
    %258 = vector.extract_strided_slice %164 {offsets = [0, 5], sizes = [1, 1], strides = [1, 1]} : vector<1x8xf32> to vector<1x1xf32>
    %259 = vector.extract_strided_slice %162 {offsets = [5, 0], sizes = [1, 64], strides = [1, 1]} : vector<8x64xf32> to vector<1x64xf32>
    %260 = vector.broadcast %258 : vector<1x1xf32> to vector<1x64xf32>
    %261 = arith.mulf %260, %259 : vector<1x64xf32>
    %262 = arith.addf %257, %261 : vector<1x64xf32>
    %263 = vector.extract_strided_slice %165 {offsets = [0, 5], sizes = [1, 1], strides = [1, 1]} : vector<1x8xf32> to vector<1x1xf32>
    %264 = vector.extract_strided_slice %174 {offsets = [5, 0], sizes = [1, 64], strides = [1, 1]} : vector<8x64xf32> to vector<1x64xf32>
    %265 = vector.broadcast %263 : vector<1x1xf32> to vector<1x64xf32>
    %266 = arith.mulf %265, %264 : vector<1x64xf32>
    %267 = arith.addf %262, %266 : vector<1x64xf32>
    %268 = vector.extract_strided_slice %163 {offsets = [0, 6], sizes = [1, 1], strides = [1, 1]} : vector<1x8xf32> to vector<1x1xf32>
    %269 = vector.extract_strided_slice %171 {offsets = [6, 0], sizes = [1, 64], strides = [1, 1]} : vector<8x64xf32> to vector<1x64xf32>
    %270 = vector.broadcast %268 : vector<1x1xf32> to vector<1x64xf32>
    %271 = arith.mulf %270, %269 : vector<1x64xf32>
    %272 = arith.addf %267, %271 : vector<1x64xf32>
    %273 = vector.extract_strided_slice %164 {offsets = [0, 6], sizes = [1, 1], strides = [1, 1]} : vector<1x8xf32> to vector<1x1xf32>
    %274 = vector.extract_strided_slice %162 {offsets = [6, 0], sizes = [1, 64], strides = [1, 1]} : vector<8x64xf32> to vector<1x64xf32>
    %275 = vector.broadcast %273 : vector<1x1xf32> to vector<1x64xf32>
    %276 = arith.mulf %275, %274 : vector<1x64xf32>
    %277 = arith.addf %272, %276 : vector<1x64xf32>
    %278 = vector.extract_strided_slice %165 {offsets = [0, 6], sizes = [1, 1], strides = [1, 1]} : vector<1x8xf32> to vector<1x1xf32>
    %279 = vector.extract_strided_slice %174 {offsets = [6, 0], sizes = [1, 64], strides = [1, 1]} : vector<8x64xf32> to vector<1x64xf32>
    %280 = vector.broadcast %278 : vector<1x1xf32> to vector<1x64xf32>
    %281 = arith.mulf %280, %279 : vector<1x64xf32>
    %282 = arith.addf %277, %281 : vector<1x64xf32>
    %283 = vector.extract_strided_slice %163 {offsets = [0, 7], sizes = [1, 1], strides = [1, 1]} : vector<1x8xf32> to vector<1x1xf32>
    %284 = vector.extract_strided_slice %171 {offsets = [7, 0], sizes = [1, 64], strides = [1, 1]} : vector<8x64xf32> to vector<1x64xf32>
    %285 = vector.broadcast %283 : vector<1x1xf32> to vector<1x64xf32>
    %286 = arith.mulf %285, %284 : vector<1x64xf32>
    %287 = arith.addf %282, %286 : vector<1x64xf32>
    %288 = vector.extract_strided_slice %164 {offsets = [0, 7], sizes = [1, 1], strides = [1, 1]} : vector<1x8xf32> to vector<1x1xf32>
    %289 = vector.extract_strided_slice %162 {offsets = [7, 0], sizes = [1, 64], strides = [1, 1]} : vector<8x64xf32> to vector<1x64xf32>
    %290 = vector.broadcast %288 : vector<1x1xf32> to vector<1x64xf32>
    %291 = arith.mulf %290, %289 : vector<1x64xf32>
    %292 = arith.addf %287, %291 : vector<1x64xf32>
    %293 = vector.extract_strided_slice %165 {offsets = [0, 7], sizes = [1, 1], strides = [1, 1]} : vector<1x8xf32> to vector<1x1xf32>
    %294 = vector.extract_strided_slice %174 {offsets = [7, 0], sizes = [1, 64], strides = [1, 1]} : vector<8x64xf32> to vector<1x64xf32>
    %295 = vector.broadcast %293 : vector<1x1xf32> to vector<1x64xf32>
    %296 = arith.mulf %295, %294 : vector<1x64xf32>
    %297 = arith.addf %292, %296 : vector<1x64xf32>
    %cst_59 = arith.constant dense<0.000000e+00> : vector<1xf32>
    %298 = vector.multi_reduction <add>, %297, %cst_59 [1] : vector<1x64xf32> to vector<1xf32>
    %299 = vector.shape_cast %298 : vector<1xf32> to vector<1x1xf32>
    %cst_60 = arith.constant 6.400000e+01 : f32
    %300 = vector.broadcast %cst_60 : f32 to vector<1x1xf32>
    %301 = arith.divf %299, %300 : vector<1x1xf32>
    %302 = vector.broadcast %301 : vector<1x1xf32> to vector<1x64xf32>
    %303 = arith.subf %297, %302 : vector<1x64xf32>
    %304 = arith.mulf %303, %303 : vector<1x64xf32>
    %cst_61 = arith.constant dense<0.000000e+00> : vector<1xf32>
    %305 = vector.multi_reduction <add>, %304, %cst_61 [1] : vector<1x64xf32> to vector<1xf32>
    %306 = vector.shape_cast %305 : vector<1xf32> to vector<1x1xf32>
    %cst_62 = arith.constant 6.400000e+01 : f32
    %307 = vector.broadcast %cst_62 : f32 to vector<1x1xf32>
    %308 = arith.divf %306, %307 : vector<1x1xf32>
    %309 = vector.broadcast %301 : vector<1x1xf32> to vector<1x64xf32>
    %310 = arith.subf %297, %309 : vector<1x64xf32>
    %cst_63 = arith.constant 9.99999974E-6 : f32
    %311 = vector.broadcast %cst_63 : f32 to vector<1x1xf32>
    %312 = arith.addf %308, %311 : vector<1x1xf32>
    %313 = math.rsqrt %312 : vector<1x1xf32>
    %314 = vector.broadcast %313 : vector<1x1xf32> to vector<1x64xf32>
    %315 = arith.mulf %310, %314 : vector<1x64xf32>
    %316 = vector.broadcast %167 : vector<1x1xf32> to vector<1x64xf32>
    %317 = arith.mulf %315, %316 : vector<1x64xf32>
    %318 = vector.broadcast %168 : vector<1x1xf32> to vector<1x64xf32>
    %319 = arith.addf %317, %318 : vector<1x64xf32>
    %cst_64 = arith.constant 0.000000e+00 : f32
    %320 = vector.broadcast %cst_64 : f32 to vector<1x64xf32>
    %321 = arith.maximumf %319, %320 : vector<1x64xf32>
    %322 = vector.extract_strided_slice %321 {offsets = [0, 0], sizes = [1, 32], strides = [1, 1]} : vector<1x64xf32> to vector<1x32xf32>
    %323 = vector.shape_cast %322 : vector<1x32xf32> to vector<1x1x32xf32>
    %324 = vector.extract_strided_slice %321 {offsets = [0, 32], sizes = [1, 32], strides = [1, 1]} : vector<1x64xf32> to vector<1x32xf32>
    %325 = vector.shape_cast %324 : vector<1x32xf32> to vector<1x1x32xf32>
    %326 = tpu.concatenate %323, %325 in 0 : vector<1x1x32xf32>, vector<1x1x32xf32> -> vector<2x1x32xf32>
    %c0_65 = arith.constant 0 : index
    %c0_66 = arith.constant 0 : index
    %327 = vector.load %arg21[%c0_65, %c0_66] : memref<32x8xf32, #tpu.memory_space<vmem>>, vector<32x8xf32>
    %c0_67 = arith.constant 0 : index
    %c0_68 = arith.constant 0 : index
    %328 = vector.load %arg22[%c0_67, %c0_68] : memref<1x8xf32, #tpu.memory_space<vmem>>, vector<1x8xf32>
    %cst_69 = arith.constant 0.000000e+00 : f32
    %329 = vector.broadcast %cst_69 : f32 to vector<2x1x8xf32>
    %330 = vector.shape_cast %328 : vector<1x8xf32> to vector<1x1x8xf32>
    %331 = vector.broadcast %330 : vector<1x1x8xf32> to vector<2x1x8xf32>
    %332 = arith.addf %331, %329 : vector<2x1x8xf32>
    %333 = vector.extract_strided_slice %326 {offsets = [0, 0, 0], sizes = [2, 1, 1], strides = [1, 1, 1]} : vector<2x1x32xf32> to vector<2x1x1xf32>
    %334 = vector.extract_strided_slice %327 {offsets = [0, 0], sizes = [1, 8], strides = [1, 1]} : vector<32x8xf32> to vector<1x8xf32>
    %335 = vector.shape_cast %334 : vector<1x8xf32> to vector<1x1x8xf32>
    %336 = vector.broadcast %333 : vector<2x1x1xf32> to vector<2x1x8xf32>
    %337 = vector.broadcast %335 : vector<1x1x8xf32> to vector<2x1x8xf32>
    %338 = arith.mulf %336, %337 : vector<2x1x8xf32>
    %339 = arith.addf %332, %338 : vector<2x1x8xf32>
    %340 = vector.extract_strided_slice %326 {offsets = [0, 0, 1], sizes = [2, 1, 1], strides = [1, 1, 1]} : vector<2x1x32xf32> to vector<2x1x1xf32>
    %341 = vector.extract_strided_slice %327 {offsets = [1, 0], sizes = [1, 8], strides = [1, 1]} : vector<32x8xf32> to vector<1x8xf32>
    %342 = vector.shape_cast %341 : vector<1x8xf32> to vector<1x1x8xf32>
    %343 = vector.broadcast %340 : vector<2x1x1xf32> to vector<2x1x8xf32>
    %344 = vector.broadcast %342 : vector<1x1x8xf32> to vector<2x1x8xf32>
    %345 = arith.mulf %343, %344 : vector<2x1x8xf32>
    %346 = arith.addf %339, %345 : vector<2x1x8xf32>
    %347 = vector.extract_strided_slice %326 {offsets = [0, 0, 2], sizes = [2, 1, 1], strides = [1, 1, 1]} : vector<2x1x32xf32> to vector<2x1x1xf32>
    %348 = vector.extract_strided_slice %327 {offsets = [2, 0], sizes = [1, 8], strides = [1, 1]} : vector<32x8xf32> to vector<1x8xf32>
    %349 = vector.shape_cast %348 : vector<1x8xf32> to vector<1x1x8xf32>
    %350 = vector.broadcast %347 : vector<2x1x1xf32> to vector<2x1x8xf32>
    %351 = vector.broadcast %349 : vector<1x1x8xf32> to vector<2x1x8xf32>
    %352 = arith.mulf %350, %351 : vector<2x1x8xf32>
    %353 = arith.addf %346, %352 : vector<2x1x8xf32>
    %354 = vector.extract_strided_slice %326 {offsets = [0, 0, 3], sizes = [2, 1, 1], strides = [1, 1, 1]} : vector<2x1x32xf32> to vector<2x1x1xf32>
    %355 = vector.extract_strided_slice %327 {offsets = [3, 0], sizes = [1, 8], strides = [1, 1]} : vector<32x8xf32> to vector<1x8xf32>
    %356 = vector.shape_cast %355 : vector<1x8xf32> to vector<1x1x8xf32>
    %357 = vector.broadcast %354 : vector<2x1x1xf32> to vector<2x1x8xf32>
    %358 = vector.broadcast %356 : vector<1x1x8xf32> to vector<2x1x8xf32>
    %359 = arith.mulf %357, %358 : vector<2x1x8xf32>
    %360 = arith.addf %353, %359 : vector<2x1x8xf32>
    %361 = vector.extract_strided_slice %326 {offsets = [0, 0, 4], sizes = [2, 1, 1], strides = [1, 1, 1]} : vector<2x1x32xf32> to vector<2x1x1xf32>
    %362 = vector.extract_strided_slice %327 {offsets = [4, 0], sizes = [1, 8], strides = [1, 1]} : vector<32x8xf32> to vector<1x8xf32>
    %363 = vector.shape_cast %362 : vector<1x8xf32> to vector<1x1x8xf32>
    %364 = vector.broadcast %361 : vector<2x1x1xf32> to vector<2x1x8xf32>
    %365 = vector.broadcast %363 : vector<1x1x8xf32> to vector<2x1x8xf32>
    %366 = arith.mulf %364, %365 : vector<2x1x8xf32>
    %367 = arith.addf %360, %366 : vector<2x1x8xf32>
    %368 = vector.extract_strided_slice %326 {offsets = [0, 0, 5], sizes = [2, 1, 1], strides = [1, 1, 1]} : vector<2x1x32xf32> to vector<2x1x1xf32>
    %369 = vector.extract_strided_slice %327 {offsets = [5, 0], sizes = [1, 8], strides = [1, 1]} : vector<32x8xf32> to vector<1x8xf32>
    %370 = vector.shape_cast %369 : vector<1x8xf32> to vector<1x1x8xf32>
    %371 = vector.broadcast %368 : vector<2x1x1xf32> to vector<2x1x8xf32>
    %372 = vector.broadcast %370 : vector<1x1x8xf32> to vector<2x1x8xf32>
    %373 = arith.mulf %371, %372 : vector<2x1x8xf32>
    %374 = arith.addf %367, %373 : vector<2x1x8xf32>
    %375 = vector.extract_strided_slice %326 {offsets = [0, 0, 6], sizes = [2, 1, 1], strides = [1, 1, 1]} : vector<2x1x32xf32> to vector<2x1x1xf32>
    %376 = vector.extract_strided_slice %327 {offsets = [6, 0], sizes = [1, 8], strides = [1, 1]} : vector<32x8xf32> to vector<1x8xf32>
    %377 = vector.shape_cast %376 : vector<1x8xf32> to vector<1x1x8xf32>
    %378 = vector.broadcast %375 : vector<2x1x1xf32> to vector<2x1x8xf32>
    %379 = vector.broadcast %377 : vector<1x1x8xf32> to vector<2x1x8xf32>
    %380 = arith.mulf %378, %379 : vector<2x1x8xf32>
    %381 = arith.addf %374, %380 : vector<2x1x8xf32>
    %382 = vector.extract_strided_slice %326 {offsets = [0, 0, 7], sizes = [2, 1, 1], strides = [1, 1, 1]} : vector<2x1x32xf32> to vector<2x1x1xf32>
    %383 = vector.extract_strided_slice %327 {offsets = [7, 0], sizes = [1, 8], strides = [1, 1]} : vector<32x8xf32> to vector<1x8xf32>
    %384 = vector.shape_cast %383 : vector<1x8xf32> to vector<1x1x8xf32>
    %385 = vector.broadcast %382 : vector<2x1x1xf32> to vector<2x1x8xf32>
    %386 = vector.broadcast %384 : vector<1x1x8xf32> to vector<2x1x8xf32>
    %387 = arith.mulf %385, %386 : vector<2x1x8xf32>
    %388 = arith.addf %381, %387 : vector<2x1x8xf32>
    %389 = vector.extract_strided_slice %326 {offsets = [0, 0, 8], sizes = [2, 1, 1], strides = [1, 1, 1]} : vector<2x1x32xf32> to vector<2x1x1xf32>
    %390 = vector.extract_strided_slice %327 {offsets = [8, 0], sizes = [1, 8], strides = [1, 1]} : vector<32x8xf32> to vector<1x8xf32>
    %391 = vector.shape_cast %390 : vector<1x8xf32> to vector<1x1x8xf32>
    %392 = vector.broadcast %389 : vector<2x1x1xf32> to vector<2x1x8xf32>
    %393 = vector.broadcast %391 : vector<1x1x8xf32> to vector<2x1x8xf32>
    %394 = arith.mulf %392, %393 : vector<2x1x8xf32>
    %395 = arith.addf %388, %394 : vector<2x1x8xf32>
    %396 = vector.extract_strided_slice %326 {offsets = [0, 0, 9], sizes = [2, 1, 1], strides = [1, 1, 1]} : vector<2x1x32xf32> to vector<2x1x1xf32>
    %397 = vector.extract_strided_slice %327 {offsets = [9, 0], sizes = [1, 8], strides = [1, 1]} : vector<32x8xf32> to vector<1x8xf32>
    %398 = vector.shape_cast %397 : vector<1x8xf32> to vector<1x1x8xf32>
    %399 = vector.broadcast %396 : vector<2x1x1xf32> to vector<2x1x8xf32>
    %400 = vector.broadcast %398 : vector<1x1x8xf32> to vector<2x1x8xf32>
    %401 = arith.mulf %399, %400 : vector<2x1x8xf32>
    %402 = arith.addf %395, %401 : vector<2x1x8xf32>
    %403 = vector.extract_strided_slice %326 {offsets = [0, 0, 10], sizes = [2, 1, 1], strides = [1, 1, 1]} : vector<2x1x32xf32> to vector<2x1x1xf32>
    %404 = vector.extract_strided_slice %327 {offsets = [10, 0], sizes = [1, 8], strides = [1, 1]} : vector<32x8xf32> to vector<1x8xf32>
    %405 = vector.shape_cast %404 : vector<1x8xf32> to vector<1x1x8xf32>
    %406 = vector.broadcast %403 : vector<2x1x1xf32> to vector<2x1x8xf32>
    %407 = vector.broadcast %405 : vector<1x1x8xf32> to vector<2x1x8xf32>
    %408 = arith.mulf %406, %407 : vector<2x1x8xf32>
    %409 = arith.addf %402, %408 : vector<2x1x8xf32>
    %410 = vector.extract_strided_slice %326 {offsets = [0, 0, 11], sizes = [2, 1, 1], strides = [1, 1, 1]} : vector<2x1x32xf32> to vector<2x1x1xf32>
    %411 = vector.extract_strided_slice %327 {offsets = [11, 0], sizes = [1, 8], strides = [1, 1]} : vector<32x8xf32> to vector<1x8xf32>
    %412 = vector.shape_cast %411 : vector<1x8xf32> to vector<1x1x8xf32>
    %413 = vector.broadcast %410 : vector<2x1x1xf32> to vector<2x1x8xf32>
    %414 = vector.broadcast %412 : vector<1x1x8xf32> to vector<2x1x8xf32>
    %415 = arith.mulf %413, %414 : vector<2x1x8xf32>
    %416 = arith.addf %409, %415 : vector<2x1x8xf32>
    %417 = vector.extract_strided_slice %326 {offsets = [0, 0, 12], sizes = [2, 1, 1], strides = [1, 1, 1]} : vector<2x1x32xf32> to vector<2x1x1xf32>
    %418 = vector.extract_strided_slice %327 {offsets = [12, 0], sizes = [1, 8], strides = [1, 1]} : vector<32x8xf32> to vector<1x8xf32>
    %419 = vector.shape_cast %418 : vector<1x8xf32> to vector<1x1x8xf32>
    %420 = vector.broadcast %417 : vector<2x1x1xf32> to vector<2x1x8xf32>
    %421 = vector.broadcast %419 : vector<1x1x8xf32> to vector<2x1x8xf32>
    %422 = arith.mulf %420, %421 : vector<2x1x8xf32>
    %423 = arith.addf %416, %422 : vector<2x1x8xf32>
    %424 = vector.extract_strided_slice %326 {offsets = [0, 0, 13], sizes = [2, 1, 1], strides = [1, 1, 1]} : vector<2x1x32xf32> to vector<2x1x1xf32>
    %425 = vector.extract_strided_slice %327 {offsets = [13, 0], sizes = [1, 8], strides = [1, 1]} : vector<32x8xf32> to vector<1x8xf32>
    %426 = vector.shape_cast %425 : vector<1x8xf32> to vector<1x1x8xf32>
    %427 = vector.broadcast %424 : vector<2x1x1xf32> to vector<2x1x8xf32>
    %428 = vector.broadcast %426 : vector<1x1x8xf32> to vector<2x1x8xf32>
    %429 = arith.mulf %427, %428 : vector<2x1x8xf32>
    %430 = arith.addf %423, %429 : vector<2x1x8xf32>
    %431 = vector.extract_strided_slice %326 {offsets = [0, 0, 14], sizes = [2, 1, 1], strides = [1, 1, 1]} : vector<2x1x32xf32> to vector<2x1x1xf32>
    %432 = vector.extract_strided_slice %327 {offsets = [14, 0], sizes = [1, 8], strides = [1, 1]} : vector<32x8xf32> to vector<1x8xf32>
    %433 = vector.shape_cast %432 : vector<1x8xf32> to vector<1x1x8xf32>
    %434 = vector.broadcast %431 : vector<2x1x1xf32> to vector<2x1x8xf32>
    %435 = vector.broadcast %433 : vector<1x1x8xf32> to vector<2x1x8xf32>
    %436 = arith.mulf %434, %435 : vector<2x1x8xf32>
    %437 = arith.addf %430, %436 : vector<2x1x8xf32>
    %438 = vector.extract_strided_slice %326 {offsets = [0, 0, 15], sizes = [2, 1, 1], strides = [1, 1, 1]} : vector<2x1x32xf32> to vector<2x1x1xf32>
    %439 = vector.extract_strided_slice %327 {offsets = [15, 0], sizes = [1, 8], strides = [1, 1]} : vector<32x8xf32> to vector<1x8xf32>
    %440 = vector.shape_cast %439 : vector<1x8xf32> to vector<1x1x8xf32>
    %441 = vector.broadcast %438 : vector<2x1x1xf32> to vector<2x1x8xf32>
    %442 = vector.broadcast %440 : vector<1x1x8xf32> to vector<2x1x8xf32>
    %443 = arith.mulf %441, %442 : vector<2x1x8xf32>
    %444 = arith.addf %437, %443 : vector<2x1x8xf32>
    %445 = vector.extract_strided_slice %326 {offsets = [0, 0, 16], sizes = [2, 1, 1], strides = [1, 1, 1]} : vector<2x1x32xf32> to vector<2x1x1xf32>
    %446 = vector.extract_strided_slice %327 {offsets = [16, 0], sizes = [1, 8], strides = [1, 1]} : vector<32x8xf32> to vector<1x8xf32>
    %447 = vector.shape_cast %446 : vector<1x8xf32> to vector<1x1x8xf32>
    %448 = vector.broadcast %445 : vector<2x1x1xf32> to vector<2x1x8xf32>
    %449 = vector.broadcast %447 : vector<1x1x8xf32> to vector<2x1x8xf32>
    %450 = arith.mulf %448, %449 : vector<2x1x8xf32>
    %451 = arith.addf %444, %450 : vector<2x1x8xf32>
    %452 = vector.extract_strided_slice %326 {offsets = [0, 0, 17], sizes = [2, 1, 1], strides = [1, 1, 1]} : vector<2x1x32xf32> to vector<2x1x1xf32>
    %453 = vector.extract_strided_slice %327 {offsets = [17, 0], sizes = [1, 8], strides = [1, 1]} : vector<32x8xf32> to vector<1x8xf32>
    %454 = vector.shape_cast %453 : vector<1x8xf32> to vector<1x1x8xf32>
    %455 = vector.broadcast %452 : vector<2x1x1xf32> to vector<2x1x8xf32>
    %456 = vector.broadcast %454 : vector<1x1x8xf32> to vector<2x1x8xf32>
    %457 = arith.mulf %455, %456 : vector<2x1x8xf32>
    %458 = arith.addf %451, %457 : vector<2x1x8xf32>
    %459 = vector.extract_strided_slice %326 {offsets = [0, 0, 18], sizes = [2, 1, 1], strides = [1, 1, 1]} : vector<2x1x32xf32> to vector<2x1x1xf32>
    %460 = vector.extract_strided_slice %327 {offsets = [18, 0], sizes = [1, 8], strides = [1, 1]} : vector<32x8xf32> to vector<1x8xf32>
    %461 = vector.shape_cast %460 : vector<1x8xf32> to vector<1x1x8xf32>
    %462 = vector.broadcast %459 : vector<2x1x1xf32> to vector<2x1x8xf32>
    %463 = vector.broadcast %461 : vector<1x1x8xf32> to vector<2x1x8xf32>
    %464 = arith.mulf %462, %463 : vector<2x1x8xf32>
    %465 = arith.addf %458, %464 : vector<2x1x8xf32>
    %466 = vector.extract_strided_slice %326 {offsets = [0, 0, 19], sizes = [2, 1, 1], strides = [1, 1, 1]} : vector<2x1x32xf32> to vector<2x1x1xf32>
    %467 = vector.extract_strided_slice %327 {offsets = [19, 0], sizes = [1, 8], strides = [1, 1]} : vector<32x8xf32> to vector<1x8xf32>
    %468 = vector.shape_cast %467 : vector<1x8xf32> to vector<1x1x8xf32>
    %469 = vector.broadcast %466 : vector<2x1x1xf32> to vector<2x1x8xf32>
    %470 = vector.broadcast %468 : vector<1x1x8xf32> to vector<2x1x8xf32>
    %471 = arith.mulf %469, %470 : vector<2x1x8xf32>
    %472 = arith.addf %465, %471 : vector<2x1x8xf32>
    %473 = vector.extract_strided_slice %326 {offsets = [0, 0, 20], sizes = [2, 1, 1], strides = [1, 1, 1]} : vector<2x1x32xf32> to vector<2x1x1xf32>
    %474 = vector.extract_strided_slice %327 {offsets = [20, 0], sizes = [1, 8], strides = [1, 1]} : vector<32x8xf32> to vector<1x8xf32>
    %475 = vector.shape_cast %474 : vector<1x8xf32> to vector<1x1x8xf32>
    %476 = vector.broadcast %473 : vector<2x1x1xf32> to vector<2x1x8xf32>
    %477 = vector.broadcast %475 : vector<1x1x8xf32> to vector<2x1x8xf32>
    %478 = arith.mulf %476, %477 : vector<2x1x8xf32>
    %479 = arith.addf %472, %478 : vector<2x1x8xf32>
    %480 = vector.extract_strided_slice %326 {offsets = [0, 0, 21], sizes = [2, 1, 1], strides = [1, 1, 1]} : vector<2x1x32xf32> to vector<2x1x1xf32>
    %481 = vector.extract_strided_slice %327 {offsets = [21, 0], sizes = [1, 8], strides = [1, 1]} : vector<32x8xf32> to vector<1x8xf32>
    %482 = vector.shape_cast %481 : vector<1x8xf32> to vector<1x1x8xf32>
    %483 = vector.broadcast %480 : vector<2x1x1xf32> to vector<2x1x8xf32>
    %484 = vector.broadcast %482 : vector<1x1x8xf32> to vector<2x1x8xf32>
    %485 = arith.mulf %483, %484 : vector<2x1x8xf32>
    %486 = arith.addf %479, %485 : vector<2x1x8xf32>
    %487 = vector.extract_strided_slice %326 {offsets = [0, 0, 22], sizes = [2, 1, 1], strides = [1, 1, 1]} : vector<2x1x32xf32> to vector<2x1x1xf32>
    %488 = vector.extract_strided_slice %327 {offsets = [22, 0], sizes = [1, 8], strides = [1, 1]} : vector<32x8xf32> to vector<1x8xf32>
    %489 = vector.shape_cast %488 : vector<1x8xf32> to vector<1x1x8xf32>
    %490 = vector.broadcast %487 : vector<2x1x1xf32> to vector<2x1x8xf32>
    %491 = vector.broadcast %489 : vector<1x1x8xf32> to vector<2x1x8xf32>
    %492 = arith.mulf %490, %491 : vector<2x1x8xf32>
    %493 = arith.addf %486, %492 : vector<2x1x8xf32>
    %494 = vector.extract_strided_slice %326 {offsets = [0, 0, 23], sizes = [2, 1, 1], strides = [1, 1, 1]} : vector<2x1x32xf32> to vector<2x1x1xf32>
    %495 = vector.extract_strided_slice %327 {offsets = [23, 0], sizes = [1, 8], strides = [1, 1]} : vector<32x8xf32> to vector<1x8xf32>
    %496 = vector.shape_cast %495 : vector<1x8xf32> to vector<1x1x8xf32>
    %497 = vector.broadcast %494 : vector<2x1x1xf32> to vector<2x1x8xf32>
    %498 = vector.broadcast %496 : vector<1x1x8xf32> to vector<2x1x8xf32>
    %499 = arith.mulf %497, %498 : vector<2x1x8xf32>
    %500 = arith.addf %493, %499 : vector<2x1x8xf32>
    %501 = vector.extract_strided_slice %326 {offsets = [0, 0, 24], sizes = [2, 1, 1], strides = [1, 1, 1]} : vector<2x1x32xf32> to vector<2x1x1xf32>
    %502 = vector.extract_strided_slice %327 {offsets = [24, 0], sizes = [1, 8], strides = [1, 1]} : vector<32x8xf32> to vector<1x8xf32>
    %503 = vector.shape_cast %502 : vector<1x8xf32> to vector<1x1x8xf32>
    %504 = vector.broadcast %501 : vector<2x1x1xf32> to vector<2x1x8xf32>
    %505 = vector.broadcast %503 : vector<1x1x8xf32> to vector<2x1x8xf32>
    %506 = arith.mulf %504, %505 : vector<2x1x8xf32>
    %507 = arith.addf %500, %506 : vector<2x1x8xf32>
    %508 = vector.extract_strided_slice %326 {offsets = [0, 0, 25], sizes = [2, 1, 1], strides = [1, 1, 1]} : vector<2x1x32xf32> to vector<2x1x1xf32>
    %509 = vector.extract_strided_slice %327 {offsets = [25, 0], sizes = [1, 8], strides = [1, 1]} : vector<32x8xf32> to vector<1x8xf32>
    %510 = vector.shape_cast %509 : vector<1x8xf32> to vector<1x1x8xf32>
    %511 = vector.broadcast %508 : vector<2x1x1xf32> to vector<2x1x8xf32>
    %512 = vector.broadcast %510 : vector<1x1x8xf32> to vector<2x1x8xf32>
    %513 = arith.mulf %511, %512 : vector<2x1x8xf32>
    %514 = arith.addf %507, %513 : vector<2x1x8xf32>
    %515 = vector.extract_strided_slice %326 {offsets = [0, 0, 26], sizes = [2, 1, 1], strides = [1, 1, 1]} : vector<2x1x32xf32> to vector<2x1x1xf32>
    %516 = vector.extract_strided_slice %327 {offsets = [26, 0], sizes = [1, 8], strides = [1, 1]} : vector<32x8xf32> to vector<1x8xf32>
    %517 = vector.shape_cast %516 : vector<1x8xf32> to vector<1x1x8xf32>
    %518 = vector.broadcast %515 : vector<2x1x1xf32> to vector<2x1x8xf32>
    %519 = vector.broadcast %517 : vector<1x1x8xf32> to vector<2x1x8xf32>
    %520 = arith.mulf %518, %519 : vector<2x1x8xf32>
    %521 = arith.addf %514, %520 : vector<2x1x8xf32>
    %522 = vector.extract_strided_slice %326 {offsets = [0, 0, 27], sizes = [2, 1, 1], strides = [1, 1, 1]} : vector<2x1x32xf32> to vector<2x1x1xf32>
    %523 = vector.extract_strided_slice %327 {offsets = [27, 0], sizes = [1, 8], strides = [1, 1]} : vector<32x8xf32> to vector<1x8xf32>
    %524 = vector.shape_cast %523 : vector<1x8xf32> to vector<1x1x8xf32>
    %525 = vector.broadcast %522 : vector<2x1x1xf32> to vector<2x1x8xf32>
    %526 = vector.broadcast %524 : vector<1x1x8xf32> to vector<2x1x8xf32>
    %527 = arith.mulf %525, %526 : vector<2x1x8xf32>
    %528 = arith.addf %521, %527 : vector<2x1x8xf32>
    %529 = vector.extract_strided_slice %326 {offsets = [0, 0, 28], sizes = [2, 1, 1], strides = [1, 1, 1]} : vector<2x1x32xf32> to vector<2x1x1xf32>
    %530 = vector.extract_strided_slice %327 {offsets = [28, 0], sizes = [1, 8], strides = [1, 1]} : vector<32x8xf32> to vector<1x8xf32>
    %531 = vector.shape_cast %530 : vector<1x8xf32> to vector<1x1x8xf32>
    %532 = vector.broadcast %529 : vector<2x1x1xf32> to vector<2x1x8xf32>
    %533 = vector.broadcast %531 : vector<1x1x8xf32> to vector<2x1x8xf32>
    %534 = arith.mulf %532, %533 : vector<2x1x8xf32>
    %535 = arith.addf %528, %534 : vector<2x1x8xf32>
    %536 = vector.extract_strided_slice %326 {offsets = [0, 0, 29], sizes = [2, 1, 1], strides = [1, 1, 1]} : vector<2x1x32xf32> to vector<2x1x1xf32>
    %537 = vector.extract_strided_slice %327 {offsets = [29, 0], sizes = [1, 8], strides = [1, 1]} : vector<32x8xf32> to vector<1x8xf32>
    %538 = vector.shape_cast %537 : vector<1x8xf32> to vector<1x1x8xf32>
    %539 = vector.broadcast %536 : vector<2x1x1xf32> to vector<2x1x8xf32>
    %540 = vector.broadcast %538 : vector<1x1x8xf32> to vector<2x1x8xf32>
    %541 = arith.mulf %539, %540 : vector<2x1x8xf32>
    %542 = arith.addf %535, %541 : vector<2x1x8xf32>
    %543 = vector.extract_strided_slice %326 {offsets = [0, 0, 30], sizes = [2, 1, 1], strides = [1, 1, 1]} : vector<2x1x32xf32> to vector<2x1x1xf32>
    %544 = vector.extract_strided_slice %327 {offsets = [30, 0], sizes = [1, 8], strides = [1, 1]} : vector<32x8xf32> to vector<1x8xf32>
    %545 = vector.shape_cast %544 : vector<1x8xf32> to vector<1x1x8xf32>
    %546 = vector.broadcast %543 : vector<2x1x1xf32> to vector<2x1x8xf32>
    %547 = vector.broadcast %545 : vector<1x1x8xf32> to vector<2x1x8xf32>
    %548 = arith.mulf %546, %547 : vector<2x1x8xf32>
    %549 = arith.addf %542, %548 : vector<2x1x8xf32>
    %550 = vector.extract_strided_slice %326 {offsets = [0, 0, 31], sizes = [2, 1, 1], strides = [1, 1, 1]} : vector<2x1x32xf32> to vector<2x1x1xf32>
    %551 = vector.extract_strided_slice %327 {offsets = [31, 0], sizes = [1, 8], strides = [1, 1]} : vector<32x8xf32> to vector<1x8xf32>
    %552 = vector.shape_cast %551 : vector<1x8xf32> to vector<1x1x8xf32>
    %553 = vector.broadcast %550 : vector<2x1x1xf32> to vector<2x1x8xf32>
    %554 = vector.broadcast %552 : vector<1x1x8xf32> to vector<2x1x8xf32>
    %555 = arith.mulf %553, %554 : vector<2x1x8xf32>
    %556 = arith.addf %549, %555 : vector<2x1x8xf32>
    %cst_70 = arith.constant 0.000000e+00 : f32
    %557 = vector.broadcast %cst_70 : f32 to vector<2x1x8xf32>
    %558 = arith.subf %557, %556 : vector<2x1x8xf32>
    %559 = math.exp %558 : vector<2x1x8xf32>
    %cst_71 = arith.constant 1.000000e+00 : f32
    %560 = vector.broadcast %cst_71 : f32 to vector<2x1x8xf32>
    %561 = arith.addf %560, %559 : vector<2x1x8xf32>
    %cst_72 = arith.constant 1.000000e+00 : f32
    %562 = vector.broadcast %cst_72 : f32 to vector<2x1x8xf32>
    %563 = arith.divf %562, %561 : vector<2x1x8xf32>
    %564 = vector.extract_strided_slice %563 {offsets = [0, 0, 0], sizes = [2, 1, 4], strides = [1, 1, 1]} : vector<2x1x8xf32> to vector<2x1x4xf32>
    %565 = vector.extract_strided_slice %563 {offsets = [0, 0, 4], sizes = [2, 1, 4], strides = [1, 1, 1]} : vector<2x1x8xf32> to vector<2x1x4xf32>
    %cst_73 = arith.constant 1.000000e+01 : f32
    %566 = vector.broadcast %cst_73 : f32 to vector<2x1x4xf32>
    %567 = arith.mulf %566, %564 : vector<2x1x4xf32>
    %cst_74 = arith.constant dense<0.000000e+00> : vector<2x1xf32>
    %568 = vector.multi_reduction <add>, %564, %cst_74 [2] : vector<2x1x4xf32> to vector<2x1xf32>
    %569 = vector.shape_cast %568 : vector<2x1xf32> to vector<2x1x1xf32>
    %570 = vector.broadcast %569 : vector<2x1x1xf32> to vector<2x1x4xf32>
    %571 = arith.divf %567, %570 : vector<2x1x4xf32>
    %cst_75 = arith.constant 1.000000e+01 : f32
    %572 = vector.broadcast %cst_75 : f32 to vector<2x1x4xf32>
    %573 = arith.mulf %572, %565 : vector<2x1x4xf32>
    %cst_76 = arith.constant dense<0.000000e+00> : vector<2x1xf32>
    %574 = vector.multi_reduction <add>, %565, %cst_76 [2] : vector<2x1x4xf32> to vector<2x1xf32>
    %575 = vector.shape_cast %574 : vector<2x1xf32> to vector<2x1x1xf32>
    %576 = vector.broadcast %575 : vector<2x1x1xf32> to vector<2x1x4xf32>
    %577 = arith.divf %573, %576 : vector<2x1x4xf32>
    %c0_77 = arith.constant 0 : index
    %c0_78 = arith.constant 0 : index
    %c0_79 = arith.constant 0 : index
    %578 = vector.load %arg23[%c0_77, %c0_78, %c0_79] : memref<2x4x4xf32, #tpu.memory_space<vmem>>, vector<2x4x4xf32>
    %c0_80 = arith.constant 0 : index
    %c0_81 = arith.constant 0 : index
    %c0_82 = arith.constant 0 : index
    %579 = vector.load %arg24[%c0_80, %c0_81, %c0_82] : memref<2x4x4xf32, #tpu.memory_space<vmem>>, vector<2x4x4xf32>
    %c0_83 = arith.constant 0 : index
    %c0_84 = arith.constant 0 : index
    %c0_85 = arith.constant 0 : index
    %580 = vector.load %arg25[%c0_83, %c0_84, %c0_85] : memref<2x4x4xf32, #tpu.memory_space<vmem>>, vector<2x4x4xf32>
    %c0_86 = arith.constant 0 : index
    %c0_87 = arith.constant 0 : index
    %c0_88 = arith.constant 0 : index
    %581 = vector.load %arg26[%c0_86, %c0_87, %c0_88] : memref<2x4x4xf32, #tpu.memory_space<vmem>>, vector<2x4x4xf32>
    %cst_89 = arith.constant 0.000000e+00 : f32
    %582 = vector.broadcast %cst_89 : f32 to vector<2x4x4xf32>
    %cst_90 = arith.constant 0.000000e+00 : f32
    %583 = vector.broadcast %cst_90 : f32 to vector<2x4x4xf32>
    %584 = vector.extract_strided_slice %577 {offsets = [0, 0, 0], sizes = [2, 1, 1], strides = [1, 1, 1]} : vector<2x1x4xf32> to vector<2x1x1xf32>
    %585 = vector.extract_strided_slice %580 {offsets = [0, 0, 0], sizes = [2, 4, 1], strides = [1, 1, 1]} : vector<2x4x4xf32> to vector<2x4x1xf32>
    %586 = vector.extract_strided_slice %581 {offsets = [0, 0, 0], sizes = [2, 4, 1], strides = [1, 1, 1]} : vector<2x4x4xf32> to vector<2x4x1xf32>
    %587 = vector.extract_strided_slice %578 {offsets = [0, 0, 0], sizes = [2, 1, 4], strides = [1, 1, 1]} : vector<2x4x4xf32> to vector<2x1x4xf32>
    %588 = vector.extract_strided_slice %579 {offsets = [0, 0, 0], sizes = [2, 1, 4], strides = [1, 1, 1]} : vector<2x4x4xf32> to vector<2x1x4xf32>
    %589 = vector.broadcast %585 : vector<2x4x1xf32> to vector<2x4x4xf32>
    %590 = vector.broadcast %587 : vector<2x1x4xf32> to vector<2x4x4xf32>
    %591 = arith.mulf %589, %590 : vector<2x4x4xf32>
    %592 = vector.broadcast %586 : vector<2x4x1xf32> to vector<2x4x4xf32>
    %593 = vector.broadcast %588 : vector<2x1x4xf32> to vector<2x4x4xf32>
    %594 = arith.mulf %592, %593 : vector<2x4x4xf32>
    %595 = arith.addf %591, %594 : vector<2x4x4xf32>
    %596 = vector.broadcast %584 : vector<2x1x1xf32> to vector<2x4x4xf32>
    %597 = arith.mulf %596, %595 : vector<2x4x4xf32>
    %598 = arith.addf %582, %597 : vector<2x4x4xf32>
    %599 = vector.broadcast %585 : vector<2x4x1xf32> to vector<2x4x4xf32>
    %600 = vector.broadcast %588 : vector<2x1x4xf32> to vector<2x4x4xf32>
    %601 = arith.mulf %599, %600 : vector<2x4x4xf32>
    %602 = vector.broadcast %586 : vector<2x4x1xf32> to vector<2x4x4xf32>
    %603 = vector.broadcast %587 : vector<2x1x4xf32> to vector<2x4x4xf32>
    %604 = arith.mulf %602, %603 : vector<2x4x4xf32>
    %605 = arith.subf %601, %604 : vector<2x4x4xf32>
    %606 = vector.broadcast %584 : vector<2x1x1xf32> to vector<2x4x4xf32>
    %607 = arith.mulf %606, %605 : vector<2x4x4xf32>
    %608 = arith.addf %583, %607 : vector<2x4x4xf32>
    %609 = vector.extract_strided_slice %577 {offsets = [0, 0, 1], sizes = [2, 1, 1], strides = [1, 1, 1]} : vector<2x1x4xf32> to vector<2x1x1xf32>
    %610 = vector.extract_strided_slice %580 {offsets = [0, 0, 1], sizes = [2, 4, 1], strides = [1, 1, 1]} : vector<2x4x4xf32> to vector<2x4x1xf32>
    %611 = vector.extract_strided_slice %581 {offsets = [0, 0, 1], sizes = [2, 4, 1], strides = [1, 1, 1]} : vector<2x4x4xf32> to vector<2x4x1xf32>
    %612 = vector.extract_strided_slice %578 {offsets = [0, 1, 0], sizes = [2, 1, 4], strides = [1, 1, 1]} : vector<2x4x4xf32> to vector<2x1x4xf32>
    %613 = vector.extract_strided_slice %579 {offsets = [0, 1, 0], sizes = [2, 1, 4], strides = [1, 1, 1]} : vector<2x4x4xf32> to vector<2x1x4xf32>
    %614 = vector.broadcast %610 : vector<2x4x1xf32> to vector<2x4x4xf32>
    %615 = vector.broadcast %612 : vector<2x1x4xf32> to vector<2x4x4xf32>
    %616 = arith.mulf %614, %615 : vector<2x4x4xf32>
    %617 = vector.broadcast %611 : vector<2x4x1xf32> to vector<2x4x4xf32>
    %618 = vector.broadcast %613 : vector<2x1x4xf32> to vector<2x4x4xf32>
    %619 = arith.mulf %617, %618 : vector<2x4x4xf32>
    %620 = arith.addf %616, %619 : vector<2x4x4xf32>
    %621 = vector.broadcast %609 : vector<2x1x1xf32> to vector<2x4x4xf32>
    %622 = arith.mulf %621, %620 : vector<2x4x4xf32>
    %623 = arith.addf %598, %622 : vector<2x4x4xf32>
    %624 = vector.broadcast %610 : vector<2x4x1xf32> to vector<2x4x4xf32>
    %625 = vector.broadcast %613 : vector<2x1x4xf32> to vector<2x4x4xf32>
    %626 = arith.mulf %624, %625 : vector<2x4x4xf32>
    %627 = vector.broadcast %611 : vector<2x4x1xf32> to vector<2x4x4xf32>
    %628 = vector.broadcast %612 : vector<2x1x4xf32> to vector<2x4x4xf32>
    %629 = arith.mulf %627, %628 : vector<2x4x4xf32>
    %630 = arith.subf %626, %629 : vector<2x4x4xf32>
    %631 = vector.broadcast %609 : vector<2x1x1xf32> to vector<2x4x4xf32>
    %632 = arith.mulf %631, %630 : vector<2x4x4xf32>
    %633 = arith.addf %608, %632 : vector<2x4x4xf32>
    %634 = vector.extract_strided_slice %577 {offsets = [0, 0, 2], sizes = [2, 1, 1], strides = [1, 1, 1]} : vector<2x1x4xf32> to vector<2x1x1xf32>
    %635 = vector.extract_strided_slice %580 {offsets = [0, 0, 2], sizes = [2, 4, 1], strides = [1, 1, 1]} : vector<2x4x4xf32> to vector<2x4x1xf32>
    %636 = vector.extract_strided_slice %581 {offsets = [0, 0, 2], sizes = [2, 4, 1], strides = [1, 1, 1]} : vector<2x4x4xf32> to vector<2x4x1xf32>
    %637 = vector.extract_strided_slice %578 {offsets = [0, 2, 0], sizes = [2, 1, 4], strides = [1, 1, 1]} : vector<2x4x4xf32> to vector<2x1x4xf32>
    %638 = vector.extract_strided_slice %579 {offsets = [0, 2, 0], sizes = [2, 1, 4], strides = [1, 1, 1]} : vector<2x4x4xf32> to vector<2x1x4xf32>
    %639 = vector.broadcast %635 : vector<2x4x1xf32> to vector<2x4x4xf32>
    %640 = vector.broadcast %637 : vector<2x1x4xf32> to vector<2x4x4xf32>
    %641 = arith.mulf %639, %640 : vector<2x4x4xf32>
    %642 = vector.broadcast %636 : vector<2x4x1xf32> to vector<2x4x4xf32>
    %643 = vector.broadcast %638 : vector<2x1x4xf32> to vector<2x4x4xf32>
    %644 = arith.mulf %642, %643 : vector<2x4x4xf32>
    %645 = arith.addf %641, %644 : vector<2x4x4xf32>
    %646 = vector.broadcast %634 : vector<2x1x1xf32> to vector<2x4x4xf32>
    %647 = arith.mulf %646, %645 : vector<2x4x4xf32>
    %648 = arith.addf %623, %647 : vector<2x4x4xf32>
    %649 = vector.broadcast %635 : vector<2x4x1xf32> to vector<2x4x4xf32>
    %650 = vector.broadcast %638 : vector<2x1x4xf32> to vector<2x4x4xf32>
    %651 = arith.mulf %649, %650 : vector<2x4x4xf32>
    %652 = vector.broadcast %636 : vector<2x4x1xf32> to vector<2x4x4xf32>
    %653 = vector.broadcast %637 : vector<2x1x4xf32> to vector<2x4x4xf32>
    %654 = arith.mulf %652, %653 : vector<2x4x4xf32>
    %655 = arith.subf %651, %654 : vector<2x4x4xf32>
    %656 = vector.broadcast %634 : vector<2x1x1xf32> to vector<2x4x4xf32>
    %657 = arith.mulf %656, %655 : vector<2x4x4xf32>
    %658 = arith.addf %633, %657 : vector<2x4x4xf32>
    %659 = vector.extract_strided_slice %577 {offsets = [0, 0, 3], sizes = [2, 1, 1], strides = [1, 1, 1]} : vector<2x1x4xf32> to vector<2x1x1xf32>
    %660 = vector.extract_strided_slice %580 {offsets = [0, 0, 3], sizes = [2, 4, 1], strides = [1, 1, 1]} : vector<2x4x4xf32> to vector<2x4x1xf32>
    %661 = vector.extract_strided_slice %581 {offsets = [0, 0, 3], sizes = [2, 4, 1], strides = [1, 1, 1]} : vector<2x4x4xf32> to vector<2x4x1xf32>
    %662 = vector.extract_strided_slice %578 {offsets = [0, 3, 0], sizes = [2, 1, 4], strides = [1, 1, 1]} : vector<2x4x4xf32> to vector<2x1x4xf32>
    %663 = vector.extract_strided_slice %579 {offsets = [0, 3, 0], sizes = [2, 1, 4], strides = [1, 1, 1]} : vector<2x4x4xf32> to vector<2x1x4xf32>
    %664 = vector.broadcast %660 : vector<2x4x1xf32> to vector<2x4x4xf32>
    %665 = vector.broadcast %662 : vector<2x1x4xf32> to vector<2x4x4xf32>
    %666 = arith.mulf %664, %665 : vector<2x4x4xf32>
    %667 = vector.broadcast %661 : vector<2x4x1xf32> to vector<2x4x4xf32>
    %668 = vector.broadcast %663 : vector<2x1x4xf32> to vector<2x4x4xf32>
    %669 = arith.mulf %667, %668 : vector<2x4x4xf32>
    %670 = arith.addf %666, %669 : vector<2x4x4xf32>
    %671 = vector.broadcast %659 : vector<2x1x1xf32> to vector<2x4x4xf32>
    %672 = arith.mulf %671, %670 : vector<2x4x4xf32>
    %673 = arith.addf %648, %672 : vector<2x4x4xf32>
    %674 = vector.broadcast %660 : vector<2x4x1xf32> to vector<2x4x4xf32>
    %675 = vector.broadcast %663 : vector<2x1x4xf32> to vector<2x4x4xf32>
    %676 = arith.mulf %674, %675 : vector<2x4x4xf32>
    %677 = vector.broadcast %661 : vector<2x4x1xf32> to vector<2x4x4xf32>
    %678 = vector.broadcast %662 : vector<2x1x4xf32> to vector<2x4x4xf32>
    %679 = arith.mulf %677, %678 : vector<2x4x4xf32>
    %680 = arith.subf %676, %679 : vector<2x4x4xf32>
    %681 = vector.broadcast %659 : vector<2x1x1xf32> to vector<2x4x4xf32>
    %682 = arith.mulf %681, %680 : vector<2x4x4xf32>
    %683 = arith.addf %658, %682 : vector<2x4x4xf32>
    %684 = tpu.iota {dimensions = array<i32: 0>} : vector<4x4xi32>
    %685 = tpu.iota {dimensions = array<i32: 1>} : vector<4x4xi32>
    %686 = arith.cmpi eq, %684, %685 : vector<4x4xi32>
    %687 = arith.extui %686 : vector<4x4xi1> to vector<4x4xi32>
    %688 = arith.sitofp %687 : vector<4x4xi32> to vector<4x4xf32>
    %689 = vector.shape_cast %688 : vector<4x4xf32> to vector<1x4x4xf32>
    %690 = vector.broadcast %689 : vector<1x4x4xf32> to vector<2x4x4xf32>
    %691 = arith.addf %690, %673 : vector<2x4x4xf32>
    %692 = tpu.concatenate %691, %580 in 2 : vector<2x4x4xf32>, vector<2x4x4xf32> -> vector<2x4x8xf32>
    %cst_91 = arith.constant 0.000000e+00 : f32
    %693 = vector.broadcast %cst_91 : f32 to vector<2x4x4xf32>
    %694 = arith.subf %693, %581 : vector<2x4x4xf32>
    %695 = tpu.concatenate %683, %694 in 2 : vector<2x4x4xf32>, vector<2x4x4xf32> -> vector<2x4x8xf32>
    %696 = tpu.iota {dimensions = array<i32: 0>} : vector<4x8xi32>
    %697 = vector.extract_strided_slice %692 {offsets = [0, 0, 0], sizes = [2, 1, 1], strides = [1, 1, 1]} : vector<2x4x8xf32> to vector<2x1x1xf32>
    %698 = vector.extract_strided_slice %695 {offsets = [0, 0, 0], sizes = [2, 1, 1], strides = [1, 1, 1]} : vector<2x4x8xf32> to vector<2x1x1xf32>
    %699 = arith.mulf %697, %697 : vector<2x1x1xf32>
    %700 = arith.mulf %698, %698 : vector<2x1x1xf32>
    %701 = arith.addf %699, %700 : vector<2x1x1xf32>
    %702 = arith.divf %697, %701 : vector<2x1x1xf32>
    %cst_92 = arith.constant 0.000000e+00 : f32
    %703 = vector.broadcast %cst_92 : f32 to vector<2x1x1xf32>
    %704 = arith.subf %703, %698 : vector<2x1x1xf32>
    %705 = arith.divf %704, %701 : vector<2x1x1xf32>
    %706 = vector.extract_strided_slice %692 {offsets = [0, 0, 0], sizes = [2, 1, 8], strides = [1, 1, 1]} : vector<2x4x8xf32> to vector<2x1x8xf32>
    %707 = vector.extract_strided_slice %695 {offsets = [0, 0, 0], sizes = [2, 1, 8], strides = [1, 1, 1]} : vector<2x4x8xf32> to vector<2x1x8xf32>
    %708 = vector.broadcast %702 : vector<2x1x1xf32> to vector<2x1x8xf32>
    %709 = arith.mulf %706, %708 : vector<2x1x8xf32>
    %710 = vector.broadcast %705 : vector<2x1x1xf32> to vector<2x1x8xf32>
    %711 = arith.mulf %707, %710 : vector<2x1x8xf32>
    %712 = arith.subf %709, %711 : vector<2x1x8xf32>
    %713 = vector.broadcast %705 : vector<2x1x1xf32> to vector<2x1x8xf32>
    %714 = arith.mulf %706, %713 : vector<2x1x8xf32>
    %715 = vector.broadcast %702 : vector<2x1x1xf32> to vector<2x1x8xf32>
    %716 = arith.mulf %707, %715 : vector<2x1x8xf32>
    %717 = arith.addf %714, %716 : vector<2x1x8xf32>
    %718 = vector.extract_strided_slice %692 {offsets = [0, 0, 0], sizes = [2, 4, 1], strides = [1, 1, 1]} : vector<2x4x8xf32> to vector<2x4x1xf32>
    %719 = vector.extract_strided_slice %695 {offsets = [0, 0, 0], sizes = [2, 4, 1], strides = [1, 1, 1]} : vector<2x4x8xf32> to vector<2x4x1xf32>
    %720 = vector.broadcast %718 : vector<2x4x1xf32> to vector<2x4x8xf32>
    %721 = vector.broadcast %712 : vector<2x1x8xf32> to vector<2x4x8xf32>
    %722 = arith.mulf %720, %721 : vector<2x4x8xf32>
    %723 = vector.broadcast %719 : vector<2x4x1xf32> to vector<2x4x8xf32>
    %724 = vector.broadcast %717 : vector<2x1x8xf32> to vector<2x4x8xf32>
    %725 = arith.mulf %723, %724 : vector<2x4x8xf32>
    %726 = arith.subf %722, %725 : vector<2x4x8xf32>
    %727 = arith.subf %692, %726 : vector<2x4x8xf32>
    %728 = vector.broadcast %718 : vector<2x4x1xf32> to vector<2x4x8xf32>
    %729 = vector.broadcast %717 : vector<2x1x8xf32> to vector<2x4x8xf32>
    %730 = arith.mulf %728, %729 : vector<2x4x8xf32>
    %731 = vector.broadcast %719 : vector<2x4x1xf32> to vector<2x4x8xf32>
    %732 = vector.broadcast %712 : vector<2x1x8xf32> to vector<2x4x8xf32>
    %733 = arith.mulf %731, %732 : vector<2x4x8xf32>
    %734 = arith.addf %730, %733 : vector<2x4x8xf32>
    %735 = arith.subf %695, %734 : vector<2x4x8xf32>
    %c0_i32 = arith.constant 0 : i32
    %736 = vector.broadcast %c0_i32 : i32 to vector<4x8xi32>
    %737 = arith.cmpi eq, %696, %736 : vector<4x8xi32>
    %738 = vector.shape_cast %737 : vector<4x8xi1> to vector<1x4x8xi1>
    %739 = vector.broadcast %738 : vector<1x4x8xi1> to vector<2x4x8xi1>
    %740 = vector.shape_cast %712 : vector<2x1x8xf32> to vector<2x1x8xf32>
    %741 = vector.broadcast %740 : vector<2x1x8xf32> to vector<2x4x8xf32>
    %742 = arith.select %739, %741, %727 : vector<2x4x8xi1>, vector<2x4x8xf32>
    %743 = vector.shape_cast %737 : vector<4x8xi1> to vector<1x4x8xi1>
    %744 = vector.broadcast %743 : vector<1x4x8xi1> to vector<2x4x8xi1>
    %745 = vector.shape_cast %717 : vector<2x1x8xf32> to vector<2x1x8xf32>
    %746 = vector.broadcast %745 : vector<2x1x8xf32> to vector<2x4x8xf32>
    %747 = arith.select %744, %746, %735 : vector<2x4x8xi1>, vector<2x4x8xf32>
    %748 = vector.extract_strided_slice %742 {offsets = [0, 1, 1], sizes = [2, 1, 1], strides = [1, 1, 1]} : vector<2x4x8xf32> to vector<2x1x1xf32>
    %749 = vector.extract_strided_slice %747 {offsets = [0, 1, 1], sizes = [2, 1, 1], strides = [1, 1, 1]} : vector<2x4x8xf32> to vector<2x1x1xf32>
    %750 = arith.mulf %748, %748 : vector<2x1x1xf32>
    %751 = arith.mulf %749, %749 : vector<2x1x1xf32>
    %752 = arith.addf %750, %751 : vector<2x1x1xf32>
    %753 = arith.divf %748, %752 : vector<2x1x1xf32>
    %cst_93 = arith.constant 0.000000e+00 : f32
    %754 = vector.broadcast %cst_93 : f32 to vector<2x1x1xf32>
    %755 = arith.subf %754, %749 : vector<2x1x1xf32>
    %756 = arith.divf %755, %752 : vector<2x1x1xf32>
    %757 = vector.extract_strided_slice %742 {offsets = [0, 1, 0], sizes = [2, 1, 8], strides = [1, 1, 1]} : vector<2x4x8xf32> to vector<2x1x8xf32>
    %758 = vector.extract_strided_slice %747 {offsets = [0, 1, 0], sizes = [2, 1, 8], strides = [1, 1, 1]} : vector<2x4x8xf32> to vector<2x1x8xf32>
    %759 = vector.broadcast %753 : vector<2x1x1xf32> to vector<2x1x8xf32>
    %760 = arith.mulf %757, %759 : vector<2x1x8xf32>
    %761 = vector.broadcast %756 : vector<2x1x1xf32> to vector<2x1x8xf32>
    %762 = arith.mulf %758, %761 : vector<2x1x8xf32>
    %763 = arith.subf %760, %762 : vector<2x1x8xf32>
    %764 = vector.broadcast %756 : vector<2x1x1xf32> to vector<2x1x8xf32>
    %765 = arith.mulf %757, %764 : vector<2x1x8xf32>
    %766 = vector.broadcast %753 : vector<2x1x1xf32> to vector<2x1x8xf32>
    %767 = arith.mulf %758, %766 : vector<2x1x8xf32>
    %768 = arith.addf %765, %767 : vector<2x1x8xf32>
    %769 = vector.extract_strided_slice %742 {offsets = [0, 0, 1], sizes = [2, 4, 1], strides = [1, 1, 1]} : vector<2x4x8xf32> to vector<2x4x1xf32>
    %770 = vector.extract_strided_slice %747 {offsets = [0, 0, 1], sizes = [2, 4, 1], strides = [1, 1, 1]} : vector<2x4x8xf32> to vector<2x4x1xf32>
    %771 = vector.broadcast %769 : vector<2x4x1xf32> to vector<2x4x8xf32>
    %772 = vector.broadcast %763 : vector<2x1x8xf32> to vector<2x4x8xf32>
    %773 = arith.mulf %771, %772 : vector<2x4x8xf32>
    %774 = vector.broadcast %770 : vector<2x4x1xf32> to vector<2x4x8xf32>
    %775 = vector.broadcast %768 : vector<2x1x8xf32> to vector<2x4x8xf32>
    %776 = arith.mulf %774, %775 : vector<2x4x8xf32>
    %777 = arith.subf %773, %776 : vector<2x4x8xf32>
    %778 = arith.subf %742, %777 : vector<2x4x8xf32>
    %779 = vector.broadcast %769 : vector<2x4x1xf32> to vector<2x4x8xf32>
    %780 = vector.broadcast %768 : vector<2x1x8xf32> to vector<2x4x8xf32>
    %781 = arith.mulf %779, %780 : vector<2x4x8xf32>
    %782 = vector.broadcast %770 : vector<2x4x1xf32> to vector<2x4x8xf32>
    %783 = vector.broadcast %763 : vector<2x1x8xf32> to vector<2x4x8xf32>
    %784 = arith.mulf %782, %783 : vector<2x4x8xf32>
    %785 = arith.addf %781, %784 : vector<2x4x8xf32>
    %786 = arith.subf %747, %785 : vector<2x4x8xf32>
    %c1_i32_94 = arith.constant 1 : i32
    %787 = vector.broadcast %c1_i32_94 : i32 to vector<4x8xi32>
    %788 = arith.cmpi eq, %696, %787 : vector<4x8xi32>
    %789 = vector.shape_cast %788 : vector<4x8xi1> to vector<1x4x8xi1>
    %790 = vector.broadcast %789 : vector<1x4x8xi1> to vector<2x4x8xi1>
    %791 = vector.shape_cast %763 : vector<2x1x8xf32> to vector<2x1x8xf32>
    %792 = vector.broadcast %791 : vector<2x1x8xf32> to vector<2x4x8xf32>
    %793 = arith.select %790, %792, %778 : vector<2x4x8xi1>, vector<2x4x8xf32>
    %794 = vector.shape_cast %788 : vector<4x8xi1> to vector<1x4x8xi1>
    %795 = vector.broadcast %794 : vector<1x4x8xi1> to vector<2x4x8xi1>
    %796 = vector.shape_cast %768 : vector<2x1x8xf32> to vector<2x1x8xf32>
    %797 = vector.broadcast %796 : vector<2x1x8xf32> to vector<2x4x8xf32>
    %798 = arith.select %795, %797, %786 : vector<2x4x8xi1>, vector<2x4x8xf32>
    %799 = vector.extract_strided_slice %793 {offsets = [0, 2, 2], sizes = [2, 1, 1], strides = [1, 1, 1]} : vector<2x4x8xf32> to vector<2x1x1xf32>
    %800 = vector.extract_strided_slice %798 {offsets = [0, 2, 2], sizes = [2, 1, 1], strides = [1, 1, 1]} : vector<2x4x8xf32> to vector<2x1x1xf32>
    %801 = arith.mulf %799, %799 : vector<2x1x1xf32>
    %802 = arith.mulf %800, %800 : vector<2x1x1xf32>
    %803 = arith.addf %801, %802 : vector<2x1x1xf32>
    %804 = arith.divf %799, %803 : vector<2x1x1xf32>
    %cst_95 = arith.constant 0.000000e+00 : f32
    %805 = vector.broadcast %cst_95 : f32 to vector<2x1x1xf32>
    %806 = arith.subf %805, %800 : vector<2x1x1xf32>
    %807 = arith.divf %806, %803 : vector<2x1x1xf32>
    %808 = vector.extract_strided_slice %793 {offsets = [0, 2, 0], sizes = [2, 1, 8], strides = [1, 1, 1]} : vector<2x4x8xf32> to vector<2x1x8xf32>
    %809 = vector.extract_strided_slice %798 {offsets = [0, 2, 0], sizes = [2, 1, 8], strides = [1, 1, 1]} : vector<2x4x8xf32> to vector<2x1x8xf32>
    %810 = vector.broadcast %804 : vector<2x1x1xf32> to vector<2x1x8xf32>
    %811 = arith.mulf %808, %810 : vector<2x1x8xf32>
    %812 = vector.broadcast %807 : vector<2x1x1xf32> to vector<2x1x8xf32>
    %813 = arith.mulf %809, %812 : vector<2x1x8xf32>
    %814 = arith.subf %811, %813 : vector<2x1x8xf32>
    %815 = vector.broadcast %807 : vector<2x1x1xf32> to vector<2x1x8xf32>
    %816 = arith.mulf %808, %815 : vector<2x1x8xf32>
    %817 = vector.broadcast %804 : vector<2x1x1xf32> to vector<2x1x8xf32>
    %818 = arith.mulf %809, %817 : vector<2x1x8xf32>
    %819 = arith.addf %816, %818 : vector<2x1x8xf32>
    %820 = vector.extract_strided_slice %793 {offsets = [0, 0, 2], sizes = [2, 4, 1], strides = [1, 1, 1]} : vector<2x4x8xf32> to vector<2x4x1xf32>
    %821 = vector.extract_strided_slice %798 {offsets = [0, 0, 2], sizes = [2, 4, 1], strides = [1, 1, 1]} : vector<2x4x8xf32> to vector<2x4x1xf32>
    %822 = vector.broadcast %820 : vector<2x4x1xf32> to vector<2x4x8xf32>
    %823 = vector.broadcast %814 : vector<2x1x8xf32> to vector<2x4x8xf32>
    %824 = arith.mulf %822, %823 : vector<2x4x8xf32>
    %825 = vector.broadcast %821 : vector<2x4x1xf32> to vector<2x4x8xf32>
    %826 = vector.broadcast %819 : vector<2x1x8xf32> to vector<2x4x8xf32>
    %827 = arith.mulf %825, %826 : vector<2x4x8xf32>
    %828 = arith.subf %824, %827 : vector<2x4x8xf32>
    %829 = arith.subf %793, %828 : vector<2x4x8xf32>
    %830 = vector.broadcast %820 : vector<2x4x1xf32> to vector<2x4x8xf32>
    %831 = vector.broadcast %819 : vector<2x1x8xf32> to vector<2x4x8xf32>
    %832 = arith.mulf %830, %831 : vector<2x4x8xf32>
    %833 = vector.broadcast %821 : vector<2x4x1xf32> to vector<2x4x8xf32>
    %834 = vector.broadcast %814 : vector<2x1x8xf32> to vector<2x4x8xf32>
    %835 = arith.mulf %833, %834 : vector<2x4x8xf32>
    %836 = arith.addf %832, %835 : vector<2x4x8xf32>
    %837 = arith.subf %798, %836 : vector<2x4x8xf32>
    %c2_i32 = arith.constant 2 : i32
    %838 = vector.broadcast %c2_i32 : i32 to vector<4x8xi32>
    %839 = arith.cmpi eq, %696, %838 : vector<4x8xi32>
    %840 = vector.shape_cast %839 : vector<4x8xi1> to vector<1x4x8xi1>
    %841 = vector.broadcast %840 : vector<1x4x8xi1> to vector<2x4x8xi1>
    %842 = vector.shape_cast %814 : vector<2x1x8xf32> to vector<2x1x8xf32>
    %843 = vector.broadcast %842 : vector<2x1x8xf32> to vector<2x4x8xf32>
    %844 = arith.select %841, %843, %829 : vector<2x4x8xi1>, vector<2x4x8xf32>
    %845 = vector.shape_cast %839 : vector<4x8xi1> to vector<1x4x8xi1>
    %846 = vector.broadcast %845 : vector<1x4x8xi1> to vector<2x4x8xi1>
    %847 = vector.shape_cast %819 : vector<2x1x8xf32> to vector<2x1x8xf32>
    %848 = vector.broadcast %847 : vector<2x1x8xf32> to vector<2x4x8xf32>
    %849 = arith.select %846, %848, %837 : vector<2x4x8xi1>, vector<2x4x8xf32>
    %850 = vector.extract_strided_slice %844 {offsets = [0, 3, 3], sizes = [2, 1, 1], strides = [1, 1, 1]} : vector<2x4x8xf32> to vector<2x1x1xf32>
    %851 = vector.extract_strided_slice %849 {offsets = [0, 3, 3], sizes = [2, 1, 1], strides = [1, 1, 1]} : vector<2x4x8xf32> to vector<2x1x1xf32>
    %852 = arith.mulf %850, %850 : vector<2x1x1xf32>
    %853 = arith.mulf %851, %851 : vector<2x1x1xf32>
    %854 = arith.addf %852, %853 : vector<2x1x1xf32>
    %855 = arith.divf %850, %854 : vector<2x1x1xf32>
    %cst_96 = arith.constant 0.000000e+00 : f32
    %856 = vector.broadcast %cst_96 : f32 to vector<2x1x1xf32>
    %857 = arith.subf %856, %851 : vector<2x1x1xf32>
    %858 = arith.divf %857, %854 : vector<2x1x1xf32>
    %859 = vector.extract_strided_slice %844 {offsets = [0, 3, 0], sizes = [2, 1, 8], strides = [1, 1, 1]} : vector<2x4x8xf32> to vector<2x1x8xf32>
    %860 = vector.extract_strided_slice %849 {offsets = [0, 3, 0], sizes = [2, 1, 8], strides = [1, 1, 1]} : vector<2x4x8xf32> to vector<2x1x8xf32>
    %861 = vector.broadcast %855 : vector<2x1x1xf32> to vector<2x1x8xf32>
    %862 = arith.mulf %859, %861 : vector<2x1x8xf32>
    %863 = vector.broadcast %858 : vector<2x1x1xf32> to vector<2x1x8xf32>
    %864 = arith.mulf %860, %863 : vector<2x1x8xf32>
    %865 = arith.subf %862, %864 : vector<2x1x8xf32>
    %866 = vector.broadcast %858 : vector<2x1x1xf32> to vector<2x1x8xf32>
    %867 = arith.mulf %859, %866 : vector<2x1x8xf32>
    %868 = vector.broadcast %855 : vector<2x1x1xf32> to vector<2x1x8xf32>
    %869 = arith.mulf %860, %868 : vector<2x1x8xf32>
    %870 = arith.addf %867, %869 : vector<2x1x8xf32>
    %871 = vector.extract_strided_slice %844 {offsets = [0, 0, 3], sizes = [2, 4, 1], strides = [1, 1, 1]} : vector<2x4x8xf32> to vector<2x4x1xf32>
    %872 = vector.extract_strided_slice %849 {offsets = [0, 0, 3], sizes = [2, 4, 1], strides = [1, 1, 1]} : vector<2x4x8xf32> to vector<2x4x1xf32>
    %873 = vector.broadcast %871 : vector<2x4x1xf32> to vector<2x4x8xf32>
    %874 = vector.broadcast %865 : vector<2x1x8xf32> to vector<2x4x8xf32>
    %875 = arith.mulf %873, %874 : vector<2x4x8xf32>
    %876 = vector.broadcast %872 : vector<2x4x1xf32> to vector<2x4x8xf32>
    %877 = vector.broadcast %870 : vector<2x1x8xf32> to vector<2x4x8xf32>
    %878 = arith.mulf %876, %877 : vector<2x4x8xf32>
    %879 = arith.subf %875, %878 : vector<2x4x8xf32>
    %880 = arith.subf %844, %879 : vector<2x4x8xf32>
    %881 = vector.broadcast %871 : vector<2x4x1xf32> to vector<2x4x8xf32>
    %882 = vector.broadcast %870 : vector<2x1x8xf32> to vector<2x4x8xf32>
    %883 = arith.mulf %881, %882 : vector<2x4x8xf32>
    %884 = vector.broadcast %872 : vector<2x4x1xf32> to vector<2x4x8xf32>
    %885 = vector.broadcast %865 : vector<2x1x8xf32> to vector<2x4x8xf32>
    %886 = arith.mulf %884, %885 : vector<2x4x8xf32>
    %887 = arith.addf %883, %886 : vector<2x4x8xf32>
    %888 = arith.subf %849, %887 : vector<2x4x8xf32>
    %c3_i32 = arith.constant 3 : i32
    %889 = vector.broadcast %c3_i32 : i32 to vector<4x8xi32>
    %890 = arith.cmpi eq, %696, %889 : vector<4x8xi32>
    %891 = vector.shape_cast %890 : vector<4x8xi1> to vector<1x4x8xi1>
    %892 = vector.broadcast %891 : vector<1x4x8xi1> to vector<2x4x8xi1>
    %893 = vector.shape_cast %865 : vector<2x1x8xf32> to vector<2x1x8xf32>
    %894 = vector.broadcast %893 : vector<2x1x8xf32> to vector<2x4x8xf32>
    %895 = arith.select %892, %894, %880 : vector<2x4x8xi1>, vector<2x4x8xf32>
    %896 = vector.shape_cast %890 : vector<4x8xi1> to vector<1x4x8xi1>
    %897 = vector.broadcast %896 : vector<1x4x8xi1> to vector<2x4x8xi1>
    %898 = vector.shape_cast %870 : vector<2x1x8xf32> to vector<2x1x8xf32>
    %899 = vector.broadcast %898 : vector<2x1x8xf32> to vector<2x4x8xf32>
    %900 = arith.select %897, %899, %888 : vector<2x4x8xi1>, vector<2x4x8xf32>
    %901 = vector.extract_strided_slice %895 {offsets = [0, 0, 4], sizes = [2, 4, 4], strides = [1, 1, 1]} : vector<2x4x8xf32> to vector<2x4x4xf32>
    %902 = vector.extract_strided_slice %900 {offsets = [0, 0, 4], sizes = [2, 4, 4], strides = [1, 1, 1]} : vector<2x4x8xf32> to vector<2x4x4xf32>
    %903 = arith.mulf %901, %901 : vector<2x4x4xf32>
    %904 = arith.mulf %902, %902 : vector<2x4x4xf32>
    %905 = arith.addf %903, %904 : vector<2x4x4xf32>
    %cst_97 = arith.constant dense<0.000000e+00> : vector<2x4xf32>
    %906 = vector.multi_reduction <add>, %905, %cst_97 [1] : vector<2x4x4xf32> to vector<2x4xf32>
    %907 = vector.shape_cast %906 : vector<2x4xf32> to vector<2x1x4xf32>
    %908 = arith.divf %571, %907 : vector<2x1x4xf32>
    %909 = math.sqrt %908 : vector<2x1x4xf32>
    %910 = vector.broadcast %909 : vector<2x1x4xf32> to vector<2x4x4xf32>
    %911 = arith.mulf %901, %910 : vector<2x4x4xf32>
    %912 = vector.broadcast %909 : vector<2x1x4xf32> to vector<2x4x4xf32>
    %913 = arith.mulf %902, %912 : vector<2x4x4xf32>
    %914 = tpu.concatenate %911, %913 in 2 : vector<2x4x4xf32>, vector<2x4x4xf32> -> vector<2x4x8xf32>
    %c0_98 = arith.constant 0 : index
    %c0_99 = arith.constant 0 : index
    %c0_100 = arith.constant 0 : index
    %915 = vector.load %arg27[%c0_98, %c0_99, %c0_100] : memref<2x4x8xf32, #tpu.memory_space<vmem>>, vector<2x4x8xf32>
    tpu.vector_store %arg27[%c0_98, %c0_99, %c0_100], %914 {strides = array<i32>} : memref<2x4x8xf32, #tpu.memory_space<vmem>>, vector<2x4x8xf32>,
    %cst_101 = arith.constant 0.000000e+00 : f32
    %916 = vector.broadcast %cst_101 : f32 to vector<2x4x4xf32>
    %cst_102 = arith.constant 0.000000e+00 : f32
    %917 = vector.broadcast %cst_102 : f32 to vector<2x4x4xf32>
    %918 = vector.extract_strided_slice %578 {offsets = [0, 0, 0], sizes = [2, 4, 1], strides = [1, 1, 1]} : vector<2x4x4xf32> to vector<2x4x1xf32>
    %919 = vector.extract_strided_slice %579 {offsets = [0, 0, 0], sizes = [2, 4, 1], strides = [1, 1, 1]} : vector<2x4x4xf32> to vector<2x4x1xf32>
    %920 = vector.extract_strided_slice %911 {offsets = [0, 0, 0], sizes = [2, 1, 4], strides = [1, 1, 1]} : vector<2x4x4xf32> to vector<2x1x4xf32>
    %921 = vector.extract_strided_slice %913 {offsets = [0, 0, 0], sizes = [2, 1, 4], strides = [1, 1, 1]} : vector<2x4x4xf32> to vector<2x1x4xf32>
    %922 = vector.broadcast %918 : vector<2x4x1xf32> to vector<2x4x4xf32>
    %923 = vector.broadcast %920 : vector<2x1x4xf32> to vector<2x4x4xf32>
    %924 = arith.mulf %922, %923 : vector<2x4x4xf32>
    %925 = arith.addf %916, %924 : vector<2x4x4xf32>
    %926 = vector.broadcast %919 : vector<2x4x1xf32> to vector<2x4x4xf32>
    %927 = vector.broadcast %921 : vector<2x1x4xf32> to vector<2x4x4xf32>
    %928 = arith.mulf %926, %927 : vector<2x4x4xf32>
    %929 = arith.subf %925, %928 : vector<2x4x4xf32>
    %930 = vector.broadcast %918 : vector<2x4x1xf32> to vector<2x4x4xf32>
    %931 = vector.broadcast %921 : vector<2x1x4xf32> to vector<2x4x4xf32>
    %932 = arith.mulf %930, %931 : vector<2x4x4xf32>
    %933 = arith.addf %917, %932 : vector<2x4x4xf32>
    %934 = vector.broadcast %919 : vector<2x4x1xf32> to vector<2x4x4xf32>
    %935 = vector.broadcast %920 : vector<2x1x4xf32> to vector<2x4x4xf32>
    %936 = arith.mulf %934, %935 : vector<2x4x4xf32>
    %937 = arith.addf %933, %936 : vector<2x4x4xf32>
    %938 = vector.extract_strided_slice %578 {offsets = [0, 0, 1], sizes = [2, 4, 1], strides = [1, 1, 1]} : vector<2x4x4xf32> to vector<2x4x1xf32>
    %939 = vector.extract_strided_slice %579 {offsets = [0, 0, 1], sizes = [2, 4, 1], strides = [1, 1, 1]} : vector<2x4x4xf32> to vector<2x4x1xf32>
    %940 = vector.extract_strided_slice %911 {offsets = [0, 1, 0], sizes = [2, 1, 4], strides = [1, 1, 1]} : vector<2x4x4xf32> to vector<2x1x4xf32>
    %941 = vector.extract_strided_slice %913 {offsets = [0, 1, 0], sizes = [2, 1, 4], strides = [1, 1, 1]} : vector<2x4x4xf32> to vector<2x1x4xf32>
    %942 = vector.broadcast %938 : vector<2x4x1xf32> to vector<2x4x4xf32>
    %943 = vector.broadcast %940 : vector<2x1x4xf32> to vector<2x4x4xf32>
    %944 = arith.mulf %942, %943 : vector<2x4x4xf32>
    %945 = arith.addf %929, %944 : vector<2x4x4xf32>
    %946 = vector.broadcast %939 : vector<2x4x1xf32> to vector<2x4x4xf32>
    %947 = vector.broadcast %941 : vector<2x1x4xf32> to vector<2x4x4xf32>
    %948 = arith.mulf %946, %947 : vector<2x4x4xf32>
    %949 = arith.subf %945, %948 : vector<2x4x4xf32>
    %950 = vector.broadcast %938 : vector<2x4x1xf32> to vector<2x4x4xf32>
    %951 = vector.broadcast %941 : vector<2x1x4xf32> to vector<2x4x4xf32>
    %952 = arith.mulf %950, %951 : vector<2x4x4xf32>
    %953 = arith.addf %937, %952 : vector<2x4x4xf32>
    %954 = vector.broadcast %939 : vector<2x4x1xf32> to vector<2x4x4xf32>
    %955 = vector.broadcast %940 : vector<2x1x4xf32> to vector<2x4x4xf32>
    %956 = arith.mulf %954, %955 : vector<2x4x4xf32>
    %957 = arith.addf %953, %956 : vector<2x4x4xf32>
    %958 = vector.extract_strided_slice %578 {offsets = [0, 0, 2], sizes = [2, 4, 1], strides = [1, 1, 1]} : vector<2x4x4xf32> to vector<2x4x1xf32>
    %959 = vector.extract_strided_slice %579 {offsets = [0, 0, 2], sizes = [2, 4, 1], strides = [1, 1, 1]} : vector<2x4x4xf32> to vector<2x4x1xf32>
    %960 = vector.extract_strided_slice %911 {offsets = [0, 2, 0], sizes = [2, 1, 4], strides = [1, 1, 1]} : vector<2x4x4xf32> to vector<2x1x4xf32>
    %961 = vector.extract_strided_slice %913 {offsets = [0, 2, 0], sizes = [2, 1, 4], strides = [1, 1, 1]} : vector<2x4x4xf32> to vector<2x1x4xf32>
    %962 = vector.broadcast %958 : vector<2x4x1xf32> to vector<2x4x4xf32>
    %963 = vector.broadcast %960 : vector<2x1x4xf32> to vector<2x4x4xf32>
    %964 = arith.mulf %962, %963 : vector<2x4x4xf32>
    %965 = arith.addf %949, %964 : vector<2x4x4xf32>
    %966 = vector.broadcast %959 : vector<2x4x1xf32> to vector<2x4x4xf32>
    %967 = vector.broadcast %961 : vector<2x1x4xf32> to vector<2x4x4xf32>
    %968 = arith.mulf %966, %967 : vector<2x4x4xf32>
    %969 = arith.subf %965, %968 : vector<2x4x4xf32>
    %970 = vector.broadcast %958 : vector<2x4x1xf32> to vector<2x4x4xf32>
    %971 = vector.broadcast %961 : vector<2x1x4xf32> to vector<2x4x4xf32>
    %972 = arith.mulf %970, %971 : vector<2x4x4xf32>
    %973 = arith.addf %957, %972 : vector<2x4x4xf32>
    %974 = vector.broadcast %959 : vector<2x4x1xf32> to vector<2x4x4xf32>
    %975 = vector.broadcast %960 : vector<2x1x4xf32> to vector<2x4x4xf32>
    %976 = arith.mulf %974, %975 : vector<2x4x4xf32>
    %977 = arith.addf %973, %976 : vector<2x4x4xf32>
    %978 = vector.extract_strided_slice %578 {offsets = [0, 0, 3], sizes = [2, 4, 1], strides = [1, 1, 1]} : vector<2x4x4xf32> to vector<2x4x1xf32>
    %979 = vector.extract_strided_slice %579 {offsets = [0, 0, 3], sizes = [2, 4, 1], strides = [1, 1, 1]} : vector<2x4x4xf32> to vector<2x4x1xf32>
    %980 = vector.extract_strided_slice %911 {offsets = [0, 3, 0], sizes = [2, 1, 4], strides = [1, 1, 1]} : vector<2x4x4xf32> to vector<2x1x4xf32>
    %981 = vector.extract_strided_slice %913 {offsets = [0, 3, 0], sizes = [2, 1, 4], strides = [1, 1, 1]} : vector<2x4x4xf32> to vector<2x1x4xf32>
    %982 = vector.broadcast %978 : vector<2x4x1xf32> to vector<2x4x4xf32>
    %983 = vector.broadcast %980 : vector<2x1x4xf32> to vector<2x4x4xf32>
    %984 = arith.mulf %982, %983 : vector<2x4x4xf32>
    %985 = arith.addf %969, %984 : vector<2x4x4xf32>
    %986 = vector.broadcast %979 : vector<2x4x1xf32> to vector<2x4x4xf32>
    %987 = vector.broadcast %981 : vector<2x1x4xf32> to vector<2x4x4xf32>
    %988 = arith.mulf %986, %987 : vector<2x4x4xf32>
    %989 = arith.subf %985, %988 : vector<2x4x4xf32>
    %990 = vector.broadcast %978 : vector<2x4x1xf32> to vector<2x4x4xf32>
    %991 = vector.broadcast %981 : vector<2x1x4xf32> to vector<2x4x4xf32>
    %992 = arith.mulf %990, %991 : vector<2x4x4xf32>
    %993 = arith.addf %977, %992 : vector<2x4x4xf32>
    %994 = vector.broadcast %979 : vector<2x4x1xf32> to vector<2x4x4xf32>
    %995 = vector.broadcast %980 : vector<2x1x4xf32> to vector<2x4x4xf32>
    %996 = arith.mulf %994, %995 : vector<2x4x4xf32>
    %997 = arith.addf %993, %996 : vector<2x4x4xf32>
    %998 = arith.mulf %989, %989 : vector<2x4x4xf32>
    %999 = arith.mulf %997, %997 : vector<2x4x4xf32>
    %1000 = arith.addf %998, %999 : vector<2x4x4xf32>
    %1001 = tpu.iota {dimensions = array<i32: 0>} : vector<4x4xi32>
    %1002 = tpu.iota {dimensions = array<i32: 1>} : vector<4x4xi32>
    %1003 = arith.cmpi eq, %1001, %1002 : vector<4x4xi32>
    %1004 = arith.extui %1003 : vector<4x4xi1> to vector<4x4xi32>
    %1005 = arith.sitofp %1004 : vector<4x4xi32> to vector<4x4xf32>
    %1006 = vector.shape_cast %1005 : vector<4x4xf32> to vector<1x4x4xf32>
    %1007 = vector.broadcast %1006 : vector<1x4x4xf32> to vector<2x4x4xf32>
    %1008 = arith.mulf %1000, %1007 : vector<2x4x4xf32>
    %cst_103 = arith.constant dense<0.000000e+00> : vector<2x4xf32>
    %1009 = vector.multi_reduction <add>, %1008, %cst_103 [2] : vector<2x4x4xf32> to vector<2x4xf32>
    %1010 = vector.shape_cast %1009 : vector<2x4xf32> to vector<2x4x1xf32>
    %cst_104 = arith.constant dense<0.000000e+00> : vector<2x4xf32>
    %1011 = vector.multi_reduction <add>, %1000, %cst_104 [2] : vector<2x4x4xf32> to vector<2x4xf32>
    %1012 = vector.shape_cast %1011 : vector<2x4xf32> to vector<2x4x1xf32>
    %1013 = arith.subf %1012, %1010 : vector<2x4x1xf32>
    %cst_105 = arith.constant 1.000000e+00 : f32
    %1014 = vector.broadcast %cst_105 : f32 to vector<2x4x1xf32>
    %1015 = arith.addf %1013, %1014 : vector<2x4x1xf32>
    %1016 = arith.divf %1010, %1015 : vector<2x4x1xf32>
    %cst_106 = arith.constant 1.000000e+00 : f32
    %1017 = vector.broadcast %cst_106 : f32 to vector<2x4x1xf32>
    %1018 = arith.addf %1017, %1016 : vector<2x4x1xf32>
    %1019 = math.log %1018 : vector<2x4x1xf32>
    %cst_107 = arith.constant 1.44269502 : f32
    %1020 = vector.broadcast %cst_107 : f32 to vector<2x4x1xf32>
    %1021 = arith.mulf %1019, %1020 : vector<2x4x1xf32>
    %cst_108 = arith.constant dense<0.000000e+00> : vector<2x1xf32>
    %1022 = vector.multi_reduction <add>, %1021, %cst_108 [1] : vector<2x4x1xf32> to vector<2x1xf32>
    %1023 = vector.shape_cast %1022 : vector<2x1xf32> to vector<2x1x1xf32>
    %c0_109 = arith.constant 0 : index
    %c0_110 = arith.constant 0 : index
    %c0_111 = arith.constant 0 : index
    %1024 = vector.load %arg28[%c0_109, %c0_110, %c0_111] : memref<2x1x1xf32, #tpu.memory_space<vmem>>, vector<2x1x1xf32>
    tpu.vector_store %arg28[%c0_109, %c0_110, %c0_111], %1023 {strides = array<i32>} : memref<2x1x1xf32, #tpu.memory_space<vmem>>, vector<2x1x1xf32>,
    return
  }
}

</mosaic_0001>

<llo_original>
// kernel: custom-call
$region0: #{custom-call}
  %s0 = inlined_call_operand.vmem [shape: f32[2,4,4], index: 0, kind: input, shape index: {}]
  %s1 = inlined_call_operand.vmem [shape: f32[2,4,4], index: 1, kind: input, shape index: {}]
  %s2 = inlined_call_operand.hbm [shape: c64[2,4,4], index: 2, kind: output, shape index: {}]
  %s3 = scalar_lea.hbm %s2, 128
  $region1: #{custom-call} parent=0
    #allocation0 [shape = 's32[1]{0}', space=sflag, size = 0x4, scoped, tag = 'scoped memory for custom-call']
    %4 = vsyncpa [#allocation0], 0
    %s5 = sshll.u32 %s0, 4
    %s6 = int_to_ptr.vmem [resolvable:$true] %s5
    %8 = dma.vmem_to_hbm [thread:$0]  %s6, 128, %s2, [#allocation0]
    %9 = dma.done [#allocation0], 128
    %10 = vsyncpa [#allocation0], 1
  $region2: #{custom-call} parent=0
    #allocation1 [shape = 's32[1]{0}', space=sflag, size = 0x4, scoped, tag = 'scoped memory for custom-call']
    %11 = vsyncpa [#allocation1], 0
    %s12 = sshll.u32 %s1, 4
    %s13 = int_to_ptr.vmem [resolvable:$true] %s12
    %15 = dma.vmem_to_hbm [thread:$0]  %s13, 128, %s3, [#allocation1]
    %16 = dma.done [#allocation1], 128
    %17 = vsyncpa [#allocation1], 1

// kernel: db_fc_cnn_forward.1
$region0: #{db_fc_cnn_forward.1}
  #allocation0 [shape = 'u32[]', space=smem, size = 0x4, offset = 0x4, fixed_abs, tag = 'smem constant byte address 0x4 - core index']
  #allocation1 [shape = 'u32[144,128]{1,0:T(1,128)}', space=vmem, size = 0x12000, scoped, tag = 'internal scratch']
  #allocation2 [shape = 'f32[1,1]{1,0:T(1,128)S(1)}', space=vmem, size = 0x200, scoped, tag = 'scoped memory for db_fc_cnn_forward.1']
  #allocation3 [shape = 'f32[1,1]{1,0:T(1,128)S(1)}', space=vmem, size = 0x200, scoped, tag = 'scoped memory for db_fc_cnn_forward.1']
  #allocation4 [shape = 'f32[1,1]{1,0:T(1,128)S(1)}', space=vmem, size = 0x200, scoped, tag = 'scoped memory for db_fc_cnn_forward.1']
  %s0 = inlined_call_operand.vmem [shape: f32[1,64], index: 0, kind: input, shape index: {}]
  %s1 = inlined_call_operand.vmem [shape: f32[1,64], index: 1, kind: input, shape index: {}]
  %s2 = inlined_call_operand.vmem [shape: f32[1,64], index: 2, kind: input, shape index: {}]
  %s3 = inlined_call_operand.vmem [shape: f32[4,1], index: 3, kind: input, shape index: {}]
  %s4 = inlined_call_operand.vmem [shape: f32[4,1], index: 4, kind: input, shape index: {}]
  %s5 = inlined_call_operand.vmem [shape: f32[4,1], index: 5, kind: input, shape index: {}]
  %s6 = inlined_call_operand.vmem [shape: f32[4,1], index: 6, kind: input, shape index: {}]
  %s7 = inlined_call_operand.vmem [shape: f32[4,1], index: 7, kind: input, shape index: {}]
  %s8 = inlined_call_operand.vmem [shape: f32[4,1], index: 8, kind: input, shape index: {}]
  %s9 = inlined_call_operand.vmem [shape: f32[8,4], index: 9, kind: input, shape index: {}]
  %s10 = inlined_call_operand.vmem [shape: f32[8,4], index: 10, kind: input, shape index: {}]
  %s11 = inlined_call_operand.vmem [shape: f32[8,4], index: 11, kind: input, shape index: {}]
  %s12 = inlined_call_operand.vmem [shape: f32[8,1], index: 12, kind: input, shape index: {}]
  %s13 = inlined_call_operand.vmem [shape: f32[8,1], index: 13, kind: input, shape index: {}]
  %s14 = inlined_call_operand.vmem [shape: f32[8,1], index: 14, kind: input, shape index: {}]
  %s15 = inlined_call_operand.vmem [shape: f32[1,8], index: 15, kind: input, shape index: {}]
  %s16 = inlined_call_operand.vmem [shape: f32[1,8], index: 16, kind: input, shape index: {}]
  %s17 = inlined_call_operand.vmem [shape: f32[1,8], index: 17, kind: input, shape index: {}]
  %s18 = inlined_call_operand.<no memory space> [shape: f32[1,1], index: 18, kind: input, shape index: {}]
  %s19 = inlined_call_operand.<no memory space> [shape: f32[1,1], index: 19, kind: input, shape index: {}]
  %s20 = inlined_call_operand.<no memory space> [shape: f32[1,1], index: 20, kind: input, shape index: {}]
  %s21 = inlined_call_operand.vmem [shape: f32[32,8], index: 21, kind: input, shape index: {}]
  %s22 = inlined_call_operand.vmem [shape: f32[1,8], index: 22, kind: input, shape index: {}]
  %s23 = inlined_call_operand.vmem [shape: f32[2,4,4], index: 23, kind: input, shape index: {}]
  %s24 = inlined_call_operand.vmem [shape: f32[2,4,4], index: 24, kind: input, shape index: {}]
  %s25 = inlined_call_operand.vmem [shape: f32[2,4,4], index: 25, kind: input, shape index: {}]
  %s26 = inlined_call_operand.vmem [shape: f32[2,4,4], index: 26, kind: input, shape index: {}]
  %s27 = inlined_call_operand.vmem [shape: f32[2,4,8], index: 27, kind: output, shape index: {0}]
  %s28 = inlined_call_operand.vmem [shape: f32[2,1,1], index: 28, kind: output, shape index: {1}]
  %29 = xla_tuple %s27, %s28
  %s30 = sld [smem:[#allocation0]]
  $region126: #{db_fc_cnn_forward.1} parent=0
    _
  %s32 = ssub.s32 1, %s30
  %s33 = scalar_select 0, %s32, %s30
  %v34 = vstv %s18
  %35 = vst [vmem:[#allocation2] sm:$0x1] %v34
  %v36 = vstv %s19
  %37 = vst [vmem:[#allocation3] sm:$0x1] %v36
  %v38 = vstv %s20
  %39 = vst [vmem:[#allocation4] sm:$0x1] %v38
  // Predicated region
  $region2: #{db_fc_cnn_forward.1} parent=0 // pred_check
    _
  $region3: #{db_fc_cnn_forward.1} parent=0 // pred_check_branch
    %41 = sbr.rel (0) target = $region5
  $region4: #{db_fc_cnn_forward.1} parent=0 // pred_region
    _
  $region5: #{db_fc_cnn_forward.1} parent=0 // pred_fallthru
    _
  // Predicated region
  $region6: #{db_fc_cnn_forward.1} parent=0 // pred_check
    _
  $region7: #{db_fc_cnn_forward.1} parent=0 // pred_check_branch
    %43 = sbr.rel (0) target = $region9
  $region8: #{db_fc_cnn_forward.1} parent=0 // pred_region
    _
  $region9: #{db_fc_cnn_forward.1} parent=0 // pred_fallthru
    _
  // Predicated region
  $region10: #{db_fc_cnn_forward.1} parent=0 // pred_check
    _
  $region11: #{db_fc_cnn_forward.1} parent=0 // pred_check_branch
    %45 = sbr.rel (0) target = $region13
  $region12: #{db_fc_cnn_forward.1} parent=0 // pred_region
    _
  $region13: #{db_fc_cnn_forward.1} parent=0 // pred_fallthru
    _
  // Predicated region
  $region14: #{db_fc_cnn_forward.1} parent=0 // pred_check
    _
  $region15: #{db_fc_cnn_forward.1} parent=0 // pred_check_branch
    %47 = sbr.rel (0) target = $region17
  $region16: #{db_fc_cnn_forward.1} parent=0 // pred_region
    _
  $region17: #{db_fc_cnn_forward.1} parent=0 // pred_fallthru
    _
  // Predicated region
  $region18: #{db_fc_cnn_forward.1} parent=0 // pred_check
    _
  $region19: #{db_fc_cnn_forward.1} parent=0 // pred_check_branch
    %49 = sbr.rel (0) target = $region21
  $region20: #{db_fc_cnn_forward.1} parent=0 // pred_region
    _
  $region21: #{db_fc_cnn_forward.1} parent=0 // pred_fallthru
    _
  // Predicated region
  $region22: #{db_fc_cnn_forward.1} parent=0 // pred_check
    _
  $region23: #{db_fc_cnn_forward.1} parent=0 // pred_check_branch
    %51 = sbr.rel (0) target = $region25
  $region24: #{db_fc_cnn_forward.1} parent=0 // pred_region
    _
  $region25: #{db_fc_cnn_forward.1} parent=0 // pred_fallthru
    _
  // Predicated region
  $region26: #{db_fc_cnn_forward.1} parent=0 // pred_check
    _
  $region27: #{db_fc_cnn_forward.1} parent=0 // pred_check_branch
    %53 = sbr.rel (0) target = $region29
  $region28: #{db_fc_cnn_forward.1} parent=0 // pred_region
    _
  $region29: #{db_fc_cnn_forward.1} parent=0 // pred_fallthru
    _
  // Predicated region
  $region30: #{db_fc_cnn_forward.1} parent=0 // pred_check
    _
  $region31: #{db_fc_cnn_forward.1} parent=0 // pred_check_branch
    %55 = sbr.rel (0) target = $region33
  $region32: #{db_fc_cnn_forward.1} parent=0 // pred_region
    _
  $region33: #{db_fc_cnn_forward.1} parent=0 // pred_fallthru
    _
  // Predicated region
  $region34: #{db_fc_cnn_forward.1} parent=0 // pred_check
    _
  $region35: #{db_fc_cnn_forward.1} parent=0 // pred_check_branch
    %57 = sbr.rel (0) target = $region37
  $region36: #{db_fc_cnn_forward.1} parent=0 // pred_region
    _
  $region37: #{db_fc_cnn_forward.1} parent=0 // pred_fallthru
    _
  // Predicated region
  $region38: #{db_fc_cnn_forward.1} parent=0 // pred_check
    _
  $region39: #{db_fc_cnn_forward.1} parent=0 // pred_check_branch
    %59 = sbr.rel (0) target = $region41
  $region40: #{db_fc_cnn_forward.1} parent=0 // pred_region
    _
  $region41: #{db_fc_cnn_forward.1} parent=0 // pred_fallthru
    _
  // Predicated region
  $region42: #{db_fc_cnn_forward.1} parent=0 // pred_check
    _
  $region43: #{db_fc_cnn_forward.1} parent=0 // pred_check_branch
    %61 = sbr.rel (0) target = $region45
  $region44: #{db_fc_cnn_forward.1} parent=0 // pred_region
    _
  $region45: #{db_fc_cnn_forward.1} parent=0 // pred_fallthru
    _
  // Predicated region
  $region46: #{db_fc_cnn_forward.1} parent=0 // pred_check
    _
  $region47: #{db_fc_cnn_forward.1} parent=0 // pred_check_branch
    %63 = sbr.rel (0) target = $region49
  $region48: #{db_fc_cnn_forward.1} parent=0 // pred_region
    _
  $region49: #{db_fc_cnn_forward.1} parent=0 // pred_fallthru
    _
  // Predicated region
  $region50: #{db_fc_cnn_forward.1} parent=0 // pred_check
    _
  $region51: #{db_fc_cnn_forward.1} parent=0 // pred_check_branch
    %65 = sbr.rel (0) target = $region53
  $region52: #{db_fc_cnn_forward.1} parent=0 // pred_region
    _
  $region53: #{db_fc_cnn_forward.1} parent=0 // pred_fallthru
    _
  // Predicated region
  $region54: #{db_fc_cnn_forward.1} parent=0 // pred_check
    _
  $region55: #{db_fc_cnn_forward.1} parent=0 // pred_check_branch
    %67 = sbr.rel (0) target = $region57
  $region56: #{db_fc_cnn_forward.1} parent=0 // pred_region
    _
  $region57: #{db_fc_cnn_forward.1} parent=0 // pred_fallthru
    _
  // Predicated region
  $region58: #{db_fc_cnn_forward.1} parent=0 // pred_check
    _
  $region59: #{db_fc_cnn_forward.1} parent=0 // pred_check_branch
    %69 = sbr.rel (0) target = $region61
  $region60: #{db_fc_cnn_forward.1} parent=0 // pred_region
    _
  $region61: #{db_fc_cnn_forward.1} parent=0 // pred_fallthru
    _
  // Predicated region
  $region62: #{db_fc_cnn_forward.1} parent=0 // pred_check
    _
  $region63: #{db_fc_cnn_forward.1} parent=0 // pred_check_branch
    %71 = sbr.rel (0) target = $region65
  $region64: #{db_fc_cnn_forward.1} parent=0 // pred_region
    _
  $region65: #{db_fc_cnn_forward.1} parent=0 // pred_fallthru
    _
  // Predicated region
  $region66: #{db_fc_cnn_forward.1} parent=0 // pred_check
    _
  $region67: #{db_fc_cnn_forward.1} parent=0 // pred_check_branch
    %73 = sbr.rel (0) target = $region69
  $region68: #{db_fc_cnn_forward.1} parent=0 // pred_region
    _
  $region69: #{db_fc_cnn_forward.1} parent=0 // pred_fallthru
    _
  // Predicated region
  $region70: #{db_fc_cnn_forward.1} parent=0 // pred_check
    _
  $region71: #{db_fc_cnn_forward.1} parent=0 // pred_check_branch
    %75 = sbr.rel (0) target = $region73
  $region72: #{db_fc_cnn_forward.1} parent=0 // pred_region
    _
  $region73: #{db_fc_cnn_forward.1} parent=0 // pred_fallthru
    _
  // Predicated region
  $region74: #{db_fc_cnn_forward.1} parent=0 // pred_check
    _
  $region75: #{db_fc_cnn_forward.1} parent=0 // pred_check_branch
    %77 = sbr.rel (0) target = $region77
  $region76: #{db_fc_cnn_forward.1} parent=0 // pred_region
    _
  $region77: #{db_fc_cnn_forward.1} parent=0 // pred_fallthru
    _
  // Predicated region
  $region78: #{db_fc_cnn_forward.1} parent=0 // pred_check
    _
  $region79: #{db_fc_cnn_forward.1} parent=0 // pred_check_branch
    %79 = sbr.rel (0) target = $region81
  $region80: #{db_fc_cnn_forward.1} parent=0 // pred_region
    _
  $region81: #{db_fc_cnn_forward.1} parent=0 // pred_fallthru
    _
  // Predicated region
  $region82: #{db_fc_cnn_forward.1} parent=0 // pred_check
    _
  $region83: #{db_fc_cnn_forward.1} parent=0 // pred_check_branch
    %81 = sbr.rel (0) target = $region85
  $region84: #{db_fc_cnn_forward.1} parent=0 // pred_region
    _
  $region85: #{db_fc_cnn_forward.1} parent=0 // pred_fallthru
    _
  // Predicated region
  $region86: #{db_fc_cnn_forward.1} parent=0 // pred_check
    _
  $region87: #{db_fc_cnn_forward.1} parent=0 // pred_check_branch
    %83 = sbr.rel (0) target = $region89
  $region88: #{db_fc_cnn_forward.1} parent=0 // pred_region
    _
  $region89: #{db_fc_cnn_forward.1} parent=0 // pred_fallthru
    _
  // Predicated region
  $region90: #{db_fc_cnn_forward.1} parent=0 // pred_check
    _
  $region91: #{db_fc_cnn_forward.1} parent=0 // pred_check_branch
    %85 = sbr.rel (0) target = $region93
  $region92: #{db_fc_cnn_forward.1} parent=0 // pred_region
    _
  $region93: #{db_fc_cnn_forward.1} parent=0 // pred_fallthru
    _
  // Predicated region
  $region94: #{db_fc_cnn_forward.1} parent=0 // pred_check
    _
  $region95: #{db_fc_cnn_forward.1} parent=0 // pred_check_branch
    %87 = sbr.rel (0) target = $region97
  $region96: #{db_fc_cnn_forward.1} parent=0 // pred_region
    _
  $region97: #{db_fc_cnn_forward.1} parent=0 // pred_fallthru
    _
  // Predicated region
  $region98: #{db_fc_cnn_forward.1} parent=0 // pred_check
    _
  $region99: #{db_fc_cnn_forward.1} parent=0 // pred_check_branch
    %89 = sbr.rel (0) target = $region101
  $region100: #{db_fc_cnn_forward.1} parent=0 // pred_region
    _
  $region101: #{db_fc_cnn_forward.1} parent=0 // pred_fallthru
    _
  // Predicated region
  $region102: #{db_fc_cnn_forward.1} parent=0 // pred_check
    _
  $region103: #{db_fc_cnn_forward.1} parent=0 // pred_check_branch
    %91 = sbr.rel (0) target = $region105
  $region104: #{db_fc_cnn_forward.1} parent=0 // pred_region
    _
  $region105: #{db_fc_cnn_forward.1} parent=0 // pred_fallthru
    _
  // Predicated region
  $region106: #{db_fc_cnn_forward.1} parent=0 // pred_check
    _
  $region107: #{db_fc_cnn_forward.1} parent=0 // pred_check_branch
    %93 = sbr.rel (0) target = $region109
  $region108: #{db_fc_cnn_forward.1} parent=0 // pred_region
    _
  $region109: #{db_fc_cnn_forward.1} parent=0 // pred_fallthru
    _
  %v94 = vld [vmem:[%s0] sm:$0x1]
  %v95 = vld [vmem:[%s1] sm:$0x1]
  %v96 = vld [vmem:[%s2] sm:$0x1]
  %v97 = vld [vmem:[%s3] sm:$0xf]
  %v98 = vld [vmem:[%s4] sm:$0xf]
  %v99 = vld [vmem:[%s5] sm:$0xf]
  %v100 = vld [vmem:[%s6] sm:$0xf]
  %v101 = vld [vmem:[%s7] sm:$0xf]
  %v102 = vld [vmem:[%s8] sm:$0xf]
  %vm103 = vcmask 1048064
  %104 = vrot.lane.b32.xlu0 %v94, 64
  %v105 = vpop.permute.xlu0 %104
  %v106 = vsel %vm103, %v105, %v94
  %107 = vrot.lane.b32.xlu0 %v106, 64
  %v108 = vpop.permute.xlu0 %107
  %v109 = vsel %vm103, %v108, %v94
  %v111 = vlaneseq
  %v112 = vshrl.u32 %v111, 7
  %v113 = vsub.s32 0, %v112
  %v114 = vrot.slane %v95, %v113
  %115 = vrot.lane.b32.xlu0 %v114, 63
  %v116 = vpop.permute.xlu0 %115
  %v118 = vmul.f32 %v109, %v116
  %v120 = vlaneseq
  %v121 = vshrl.u32 %v120, 7
  %v122 = vsub.s32 0, %v121
  %v123 = vrot.slane %v96, %v122
  %124 = vrot.lane.b32.xlu0 %v123, 1
  %v125 = vpop.permute.xlu0 %124
  %v127 = vmul.f32 %v109, %v125
  %129 = vset.pattern.permute.xlu0 0
  %130 = vperm.xlu0 %129, %v100
  %v131 = vpop.permute.xlu0 %130
  %v133 = vadd.f32 %v131, 0.0
  %135 = vset.pattern.permute.xlu0 0
  %136 = vperm.xlu0 %135, %v97
  %v137 = vpop.permute.xlu0 %136
  %v139 = vlaneseq
  %v140 = vshrl.u32 %v139, 7
  %v141 = vsub.s32 0, %v140
  %v142 = vrot.slane %v118, %v141
  %v143 = vmul.f32 %v137, %v142
  %v144 = vadd.f32 %v133, %v143
  %146 = vset.pattern.permute.xlu0 0
  %147 = vperm.xlu0 %146, %v98
  %v148 = vpop.permute.xlu0 %147
  %v151 = vlaneseq
  %v152 = vshrl.u32 %v151, 7
  %v153 = vsub.s32 0, %v152
  %v154 = vrot.slane %v94, %v153
  %v156 = vmul.f32 %v148, %v154
  %158 = vrot.lane.b32.xlu0 %v156, 63
  %v159 = vpop.permute.xlu0 %158
  %v161 = vadd.f32 %v144, %v159
  %163 = vset.pattern.permute.xlu0 0
  %164 = vperm.xlu0 %163, %v99
  %v165 = vpop.permute.xlu0 %164
  %v167 = vlaneseq
  %v168 = vshrl.u32 %v167, 7
  %v169 = vsub.s32 0, %v168
  %v170 = vrot.slane %v127, %v169
  %v171 = vmul.f32 %v165, %v170
  %173 = vrot.lane.b32.xlu0 %v171, 62
  %v174 = vpop.permute.xlu0 %173
  %v176 = vadd.f32 %v161, %v174
  %178 = vrot.lane.b32.xlu0 %v176, 65
  %v179 = vpop.permute.xlu0 %178
  %vm181 = vcmask 519168
  %v182 = vsel %vm181, %v179, 0.0
  %183 = vadd.xlane.f32.xlu0 %v182
  %v184 = vpop.xlane.xlu0 %183
  %v185 = vrcp.pop 64.0
  %v186 = vmul.f32 %v184, %v185
  %v187 = vsub.f32 %v176, %v186
  %v188 = vmul.f32 %v187, %v187
  %190 = vrot.lane.b32.xlu0 %v188, 65
  %v191 = vpop.permute.xlu0 %190
  %v193 = vsel %vm181, %v191, 0.0
  %194 = vadd.xlane.f32.xlu0 %v193
  %v195 = vpop.xlane.xlu0 %194
  %v196 = vmul.f32 %v195, %v185
  %v197 = vadd.f32 %v196, 1e-05
  %v198 = vrsqrt.pop %v197
  %v199 = vmul.f32 %v187, %v198
  %201 = vset.pattern.permute.xlu0 0
  %202 = vperm.xlu0 %201, %v101
  %v203 = vpop.permute.xlu0 %202
  %v205 = vmul.f32 %v199, %v203
  %207 = vset.pattern.permute.xlu0 0
  %208 = vperm.xlu0 %207, %v102
  %v209 = vpop.permute.xlu0 %208
  %v211 = vadd.f32 %v205, %v209
  %v212 = vmax.f32 %v211, 0.0
  %v213 = vld [vmem:[%s9] sm:$0xff]
  %v214 = vld [vmem:[%s10] sm:$0xff]
  %v215 = vld [vmem:[%s11] sm:$0xff]
  %v216 = vld [vmem:[%s12] sm:$0xff]
  %v217 = vld [vmem:[%s13] sm:$0xff]
  %v218 = vld [vmem:[%s14] sm:$0xff]
  %220 = vrot.lane.b32.xlu0 %v212, 65
  %v221 = vpop.permute.xlu0 %220
  %223 = vrot.lane.b32.xlu0 %v221, 64
  %v224 = vpop.permute.xlu0 %223
  %v225 = vsel %vm103, %v224, %v221
  %226 = vrot.lane.b32.xlu0 %v225, 64
  %v227 = vpop.permute.xlu0 %226
  %v228 = vsel %vm103, %v227, %v221
  %v229 = vmul.f32 %v228, %v116
  %v230 = vmul.f32 %v228, %v125
  %232 = vset.pattern.permute.xlu0 0
  %233 = vperm.xlu0 %232, %v216
  %v234 = vpop.permute.xlu0 %233
  %v236 = vadd.f32 %v234, 0.0
  %238 = vset.pattern.permute.xlu0 0
  %239 = vperm.xlu0 %238, %v213
  %v240 = vpop.permute.xlu0 %239
  %v242 = vlaneseq
  %v243 = vshrl.u32 %v242, 7
  %v244 = vsub.s32 0, %v243
  %v245 = vrot.slane %v229, %v244
  %v246 = vmul.f32 %v240, %v245
  %v247 = vadd.f32 %v236, %v246
  %249 = vset.pattern.permute.xlu0 0
  %250 = vperm.xlu0 %249, %v214
  %v251 = vpop.permute.xlu0 %250
  %v253 = vlaneseq
  %v254 = vshrl.u32 %v253, 7
  %v255 = vsub.s32 0, %v254
  %v256 = vrot.slane %v212, %v255
  %v257 = vmul.f32 %v251, %v256
  %v258 = vadd.f32 %v247, %v257
  %260 = vset.pattern.permute.xlu0 0
  %261 = vperm.xlu0 %260, %v215
  %v262 = vpop.permute.xlu0 %261
  %v264 = vlaneseq
  %v265 = vshrl.u32 %v264, 7
  %v266 = vsub.s32 0, %v265
  %v267 = vrot.slane %v230, %v266
  %v268 = vmul.f32 %v262, %v267
  %270 = vrot.lane.b32.xlu0 %v268, 62
  %v271 = vpop.permute.xlu0 %270
  %v273 = vadd.f32 %v258, %v271
  %274 = vset.pattern.permute.xlu0 1
  %275 = vperm.xlu0 %274, %v213
  %v276 = vpop.permute.xlu0 %275
  %v278 = vlaneseq
  %v279 = vshrl.u32 %v278, 7
  %v280 = vsub.s32 1, %v279
  %v281 = vrot.slane %v229, %v280
  %v282 = vmul.f32 %v276, %v281
  %v283 = vadd.f32 %v273, %v282
  %284 = vset.pattern.permute.xlu0 1
  %285 = vperm.xlu0 %284, %v214
  %v286 = vpop.permute.xlu0 %285
  %v288 = vlaneseq
  %v289 = vshrl.u32 %v288, 7
  %v290 = vsub.s32 1, %v289
  %v291 = vrot.slane %v212, %v290
  %v292 = vmul.f32 %v286, %v291
  %v293 = vadd.f32 %v283, %v292
  %294 = vset.pattern.permute.xlu0 1
  %295 = vperm.xlu0 %294, %v215
  %v296 = vpop.permute.xlu0 %295
  %v298 = vlaneseq
  %v299 = vshrl.u32 %v298, 7
  %v300 = vsub.s32 1, %v299
  %v301 = vrot.slane %v230, %v300
  %v302 = vmul.f32 %v296, %v301
  %304 = vrot.lane.b32.xlu0 %v302, 62
  %v305 = vpop.permute.xlu0 %304
  %v307 = vadd.f32 %v293, %v305
  %308 = vset.pattern.permute.xlu0 2
  %309 = vperm.xlu0 %308, %v213
  %v310 = vpop.permute.xlu0 %309
  %v312 = vlaneseq
  %v313 = vshrl.u32 %v312, 7
  %v314 = vsub.s32 2, %v313
  %v315 = vrot.slane %v229, %v314
  %v316 = vmul.f32 %v310, %v315
  %v317 = vadd.f32 %v307, %v316
  %318 = vset.pattern.permute.xlu0 2
  %319 = vperm.xlu0 %318, %v214
  %v320 = vpop.permute.xlu0 %319
  %v322 = vlaneseq
  %v323 = vshrl.u32 %v322, 7
  %v324 = vsub.s32 2, %v323
  %v325 = vrot.slane %v212, %v324
  %v326 = vmul.f32 %v320, %v325
  %v327 = vadd.f32 %v317, %v326
  %328 = vset.pattern.permute.xlu0 2
  %329 = vperm.xlu0 %328, %v215
  %v330 = vpop.permute.xlu0 %329
  %v332 = vlaneseq
  %v333 = vshrl.u32 %v332, 7
  %v334 = vsub.s32 2, %v333
  %v335 = vrot.slane %v230, %v334
  %v336 = vmul.f32 %v330, %v335
  %338 = vrot.lane.b32.xlu0 %v336, 62
  %v339 = vpop.permute.xlu0 %338
  %v341 = vadd.f32 %v327, %v339
  %342 = vset.pattern.permute.xlu0 3
  %343 = vperm.xlu0 %342, %v213
  %v344 = vpop.permute.xlu0 %343
  %v346 = vlaneseq
  %v347 = vshrl.u32 %v346, 7
  %v348 = vsub.s32 3, %v347
  %v349 = vrot.slane %v229, %v348
  %v350 = vmul.f32 %v344, %v349
  %v351 = vadd.f32 %v341, %v350
  %352 = vset.pattern.permute.xlu0 3
  %353 = vperm.xlu0 %352, %v214
  %v354 = vpop.permute.xlu0 %353
  %v356 = vlaneseq
  %v357 = vshrl.u32 %v356, 7
  %v358 = vsub.s32 3, %v357
  %v359 = vrot.slane %v212, %v358
  %v360 = vmul.f32 %v354, %v359
  %v361 = vadd.f32 %v351, %v360
  %362 = vset.pattern.permute.xlu0 3
  %363 = vperm.xlu0 %362, %v215
  %v364 = vpop.permute.xlu0 %363
  %v366 = vlaneseq
  %v367 = vshrl.u32 %v366, 7
  %v368 = vsub.s32 3, %v367
  %v369 = vrot.slane %v230, %v368
  %v370 = vmul.f32 %v364, %v369
  %372 = vrot.lane.b32.xlu0 %v370, 62
  %v373 = vpop.permute.xlu0 %372
  %v375 = vadd.f32 %v361, %v373
  %377 = vrot.lane.b32.xlu0 %v375, 65
  %v378 = vpop.permute.xlu0 %377
  %vm380 = vcmask 523264
  %v381 = vsel %vm380, %v378, 0.0
  %382 = vadd.xlane.f32.xlu0 %v381
  %v383 = vpop.xlane.xlu0 %382
  %v384 = vmul.f32 %v383, %v185
  %v385 = vsub.f32 %v375, %v384
  %v386 = vmul.f32 %v385, %v385
  %388 = vrot.lane.b32.xlu0 %v386, 65
  %v389 = vpop.permute.xlu0 %388
  %v391 = vsel %vm380, %v389, 0.0
  %392 = vadd.xlane.f32.xlu0 %v391
  %v393 = vpop.xlane.xlu0 %392
  %v394 = vmul.f32 %v393, %v185
  %v395 = vadd.f32 %v394, 1e-05
  %v396 = vrsqrt.pop %v395
  %v397 = vmul.f32 %v385, %v396
  %399 = vset.pattern.permute.xlu0 0
  %400 = vperm.xlu0 %399, %v217
  %v401 = vpop.permute.xlu0 %400
  %v403 = vmul.f32 %v397, %v401
  %405 = vset.pattern.permute.xlu0 0
  %406 = vperm.xlu0 %405, %v218
  %v407 = vpop.permute.xlu0 %406
  %v409 = vadd.f32 %v403, %v407
  %v410 = vmax.f32 %v409, 0.0
  %v411 = vld [vmem:[%s15] sm:$0x1]
  %v412 = vld [vmem:[%s16] sm:$0x1]
  %v413 = vld [vmem:[%s17] sm:$0x1]
  %v414 = vld [vmem:[#allocation2] sm:$0x1]
  %v415 = vld [vmem:[#allocation3] sm:$0x1]
  %v416 = vld [vmem:[#allocation4] sm:$0x1]
  %418 = vrot.lane.b32.xlu0 %v410, 65
  %v419 = vpop.permute.xlu0 %418
  %421 = vrot.lane.b32.xlu0 %v419, 64
  %v422 = vpop.permute.xlu0 %421
  %v423 = vsel %vm103, %v422, %v419
  %424 = vrot.lane.b32.xlu0 %v423, 64
  %v425 = vpop.permute.xlu0 %424
  %v426 = vsel %vm103, %v425, %v419
  %v427 = vmul.f32 %v426, %v116
  %v428 = vmul.f32 %v426, %v125
  %430 = vset.pattern.permute.xlu0 0
  %431 = vperm.xlu0 %430, %v414
  %v432 = vpop.permute.xlu0 %431
  %v434 = vlaneseq
  %v435 = vshrl.u32 %v434, 7
  %v436 = vsub.s32 0, %v435
  %v437 = vrot.slane %v432, %v436
  %v438 = vadd.f32 %v437, 0.0
  %440 = vset.pattern.permute.xlu0 0
  %441 = vperm.xlu0 %440, %v411
  %v442 = vpop.permute.xlu0 %441
  %v444 = vlaneseq
  %v445 = vshrl.u32 %v444, 7
  %v446 = vsub.s32 0, %v445
  %v447 = vrot.slane %v442, %v446
  %v448 = vmul.f32 %v447, %v427
  %v449 = vadd.f32 %v438, %v448
  %451 = vset.pattern.permute.xlu0 0
  %452 = vperm.xlu0 %451, %v412
  %v453 = vpop.permute.xlu0 %452
  %v455 = vlaneseq
  %v456 = vshrl.u32 %v455, 7
  %v457 = vsub.s32 0, %v456
  %v458 = vrot.slane %v453, %v457
  %v459 = vmul.f32 %v458, %v410
  %v460 = vadd.f32 %v449, %v459
  %462 = vset.pattern.permute.xlu0 0
  %463 = vperm.xlu0 %462, %v413
  %v464 = vpop.permute.xlu0 %463
  %v466 = vlaneseq
  %v467 = vshrl.u32 %v466, 7
  %v468 = vsub.s32 0, %v467
  %v469 = vrot.slane %v464, %v468
  %v470 = vmul.f32 %v469, %v428
  %472 = vrot.lane.b32.xlu0 %v470, 62
  %v473 = vpop.permute.xlu0 %472
  %v475 = vadd.f32 %v460, %v473
  %476 = vset.pattern.permute.xlu0 1
  %477 = vperm.xlu0 %476, %v411
  %v478 = vpop.permute.xlu0 %477
  %v480 = vlaneseq
  %v481 = vshrl.u32 %v480, 7
  %v482 = vsub.s32 0, %v481
  %v483 = vrot.slane %v478, %v482
  %v484 = vmul.f32 %v483, %v427
  %v486 = vrot.slane %v484, 1
  %v488 = vadd.f32 %v475, %v486
  %489 = vset.pattern.permute.xlu0 1
  %490 = vperm.xlu0 %489, %v412
  %v491 = vpop.permute.xlu0 %490
  %v493 = vlaneseq
  %v494 = vshrl.u32 %v493, 7
  %v495 = vsub.s32 0, %v494
  %v496 = vrot.slane %v491, %v495
  %v497 = vmul.f32 %v496, %v410
  %v499 = vrot.slane %v497, 1
  %v501 = vadd.f32 %v488, %v499
  %502 = vset.pattern.permute.xlu0 1
  %503 = vperm.xlu0 %502, %v413
  %v504 = vpop.permute.xlu0 %503
  %v506 = vlaneseq
  %v507 = vshrl.u32 %v506, 7
  %v508 = vsub.s32 0, %v507
  %v509 = vrot.slane %v504, %v508
  %v510 = vmul.f32 %v509, %v428
  %v512 = vrot.slane %v510, 1
  %513 = vrot.lane.b32.xlu0 %v512, 62
  %v514 = vpop.permute.xlu0 %513
  %v516 = vadd.f32 %v501, %v514
  %517 = vset.pattern.permute.xlu0 2
  %518 = vperm.xlu0 %517, %v411
  %v519 = vpop.permute.xlu0 %518
  %v521 = vlaneseq
  %v522 = vshrl.u32 %v521, 7
  %v523 = vsub.s32 0, %v522
  %v524 = vrot.slane %v519, %v523
  %v525 = vmul.f32 %v524, %v427
  %v527 = vrot.slane %v525, 2
  %v529 = vadd.f32 %v516, %v527
  %530 = vset.pattern.permute.xlu0 2
  %531 = vperm.xlu0 %530, %v412
  %v532 = vpop.permute.xlu0 %531
  %v534 = vlaneseq
  %v535 = vshrl.u32 %v534, 7
  %v536 = vsub.s32 0, %v535
  %v537 = vrot.slane %v532, %v536
  %v538 = vmul.f32 %v537, %v410
  %v540 = vrot.slane %v538, 2
  %v542 = vadd.f32 %v529, %v540
  %543 = vset.pattern.permute.xlu0 2
  %544 = vperm.xlu0 %543, %v413
  %v545 = vpop.permute.xlu0 %544
  %v547 = vlaneseq
  %v548 = vshrl.u32 %v547, 7
  %v549 = vsub.s32 0, %v548
  %v550 = vrot.slane %v545, %v549
  %v551 = vmul.f32 %v550, %v428
  %v553 = vrot.slane %v551, 2
  %554 = vrot.lane.b32.xlu0 %v553, 62
  %v555 = vpop.permute.xlu0 %554
  %v557 = vadd.f32 %v542, %v555
  %558 = vset.pattern.permute.xlu0 3
  %559 = vperm.xlu0 %558, %v411
  %v560 = vpop.permute.xlu0 %559
  %v562 = vlaneseq
  %v563 = vshrl.u32 %v562, 7
  %v564 = vsub.s32 0, %v563
  %v565 = vrot.slane %v560, %v564
  %v566 = vmul.f32 %v565, %v427
  %v568 = vrot.slane %v566, 3
  %v570 = vadd.f32 %v557, %v568
  %571 = vset.pattern.permute.xlu0 3
  %572 = vperm.xlu0 %571, %v412
  %v573 = vpop.permute.xlu0 %572
  %v575 = vlaneseq
  %v576 = vshrl.u32 %v575, 7
  %v577 = vsub.s32 0, %v576
  %v578 = vrot.slane %v573, %v577
  %v579 = vmul.f32 %v578, %v410
  %v581 = vrot.slane %v579, 3
  %v583 = vadd.f32 %v570, %v581
  %584 = vset.pattern.permute.xlu0 3
  %585 = vperm.xlu0 %584, %v413
  %v586 = vpop.permute.xlu0 %585
  %v588 = vlaneseq
  %v589 = vshrl.u32 %v588, 7
  %v590 = vsub.s32 0, %v589
  %v591 = vrot.slane %v586, %v590
  %v592 = vmul.f32 %v591, %v428
  %v594 = vrot.slane %v592, 3
  %595 = vrot.lane.b32.xlu0 %v594, 62
  %v596 = vpop.permute.xlu0 %595
  %v598 = vadd.f32 %v583, %v596
  %599 = vset.pattern.permute.xlu0 4
  %600 = vperm.xlu0 %599, %v411
  %v601 = vpop.permute.xlu0 %600
  %v603 = vlaneseq
  %v604 = vshrl.u32 %v603, 7
  %v605 = vsub.s32 0, %v604
  %v606 = vrot.slane %v601, %v605
  %v607 = vmul.f32 %v606, %v427
  %v609 = vrot.slane %v607, 4
  %v611 = vadd.f32 %v598, %v609
  %612 = vset.pattern.permute.xlu0 4
  %613 = vperm.xlu0 %612, %v412
  %v614 = vpop.permute.xlu0 %613
  %v616 = vlaneseq
  %v617 = vshrl.u32 %v616, 7
  %v618 = vsub.s32 0, %v617
  %v619 = vrot.slane %v614, %v618
  %v620 = vmul.f32 %v619, %v410
  %v622 = vrot.slane %v620, 4
  %v624 = vadd.f32 %v611, %v622
  %625 = vset.pattern.permute.xlu0 4
  %626 = vperm.xlu0 %625, %v413
  %v627 = vpop.permute.xlu0 %626
  %v629 = vlaneseq
  %v630 = vshrl.u32 %v629, 7
  %v631 = vsub.s32 0, %v630
  %v632 = vrot.slane %v627, %v631
  %v633 = vmul.f32 %v632, %v428
  %v635 = vrot.slane %v633, 4
  %636 = vrot.lane.b32.xlu0 %v635, 62
  %v637 = vpop.permute.xlu0 %636
  %v639 = vadd.f32 %v624, %v637
  %640 = vset.pattern.permute.xlu0 5
  %641 = vperm.xlu0 %640, %v411
  %v642 = vpop.permute.xlu0 %641
  %v644 = vlaneseq
  %v645 = vshrl.u32 %v644, 7
  %v646 = vsub.s32 0, %v645
  %v647 = vrot.slane %v642, %v646
  %v648 = vmul.f32 %v647, %v427
  %v650 = vrot.slane %v648, 5
  %v652 = vadd.f32 %v639, %v650
  %653 = vset.pattern.permute.xlu0 5
  %654 = vperm.xlu0 %653, %v412
  %v655 = vpop.permute.xlu0 %654
  %v657 = vlaneseq
  %v658 = vshrl.u32 %v657, 7
  %v659 = vsub.s32 0, %v658
  %v660 = vrot.slane %v655, %v659
  %v661 = vmul.f32 %v660, %v410
  %v663 = vrot.slane %v661, 5
  %v665 = vadd.f32 %v652, %v663
  %666 = vset.pattern.permute.xlu0 5
  %667 = vperm.xlu0 %666, %v413
  %v668 = vpop.permute.xlu0 %667
  %v670 = vlaneseq
  %v671 = vshrl.u32 %v670, 7
  %v672 = vsub.s32 0, %v671
  %v673 = vrot.slane %v668, %v672
  %v674 = vmul.f32 %v673, %v428
  %v676 = vrot.slane %v674, 5
  %677 = vrot.lane.b32.xlu0 %v676, 62
  %v678 = vpop.permute.xlu0 %677
  %v680 = vadd.f32 %v665, %v678
  %681 = vset.pattern.permute.xlu0 6
  %682 = vperm.xlu0 %681, %v411
  %v683 = vpop.permute.xlu0 %682
  %v685 = vlaneseq
  %v686 = vshrl.u32 %v685, 7
  %v687 = vsub.s32 0, %v686
  %v688 = vrot.slane %v683, %v687
  %v689 = vmul.f32 %v688, %v427
  %v691 = vrot.slane %v689, 6
  %v693 = vadd.f32 %v680, %v691
  %694 = vset.pattern.permute.xlu0 6
  %695 = vperm.xlu0 %694, %v412
  %v696 = vpop.permute.xlu0 %695
  %v698 = vlaneseq
  %v699 = vshrl.u32 %v698, 7
  %v700 = vsub.s32 0, %v699
  %v701 = vrot.slane %v696, %v700
  %v702 = vmul.f32 %v701, %v410
  %v704 = vrot.slane %v702, 6
  %v706 = vadd.f32 %v693, %v704
  %707 = vset.pattern.permute.xlu0 6
  %708 = vperm.xlu0 %707, %v413
  %v709 = vpop.permute.xlu0 %708
  %v711 = vlaneseq
  %v712 = vshrl.u32 %v711, 7
  %v713 = vsub.s32 0, %v712
  %v714 = vrot.slane %v709, %v713
  %v715 = vmul.f32 %v714, %v428
  %v717 = vrot.slane %v715, 6
  %718 = vrot.lane.b32.xlu0 %v717, 62
  %v719 = vpop.permute.xlu0 %718
  %v721 = vadd.f32 %v706, %v719
  %722 = vset.pattern.permute.xlu0 7
  %723 = vperm.xlu0 %722, %v411
  %v724 = vpop.permute.xlu0 %723
  %v726 = vlaneseq
  %v727 = vshrl.u32 %v726, 7
  %v728 = vsub.s32 0, %v727
  %v729 = vrot.slane %v724, %v728
  %v730 = vmul.f32 %v729, %v427
  %v732 = vrot.slane %v730, 7
  %v734 = vadd.f32 %v721, %v732
  %735 = vset.pattern.permute.xlu0 7
  %736 = vperm.xlu0 %735, %v412
  %v737 = vpop.permute.xlu0 %736
  %v739 = vlaneseq
  %v740 = vshrl.u32 %v739, 7
  %v741 = vsub.s32 0, %v740
  %v742 = vrot.slane %v737, %v741
  %v743 = vmul.f32 %v742, %v410
  %v745 = vrot.slane %v743, 7
  %v747 = vadd.f32 %v734, %v745
  %748 = vset.pattern.permute.xlu0 7
  %749 = vperm.xlu0 %748, %v413
  %v750 = vpop.permute.xlu0 %749
  %v752 = vlaneseq
  %v753 = vshrl.u32 %v752, 7
  %v754 = vsub.s32 0, %v753
  %v755 = vrot.slane %v750, %v754
  %v756 = vmul.f32 %v755, %v428
  %v758 = vrot.slane %v756, 7
  %759 = vrot.lane.b32.xlu0 %v758, 62
  %v760 = vpop.permute.xlu0 %759
  %v762 = vadd.f32 %v747, %v760
  %764 = vrot.lane.b32.xlu0 %v762, 65
  %v765 = vpop.permute.xlu0 %764
  %vm767 = vcmask 516096
  %v768 = vsel %vm767, %v765, 0.0
  %769 = vadd.xlane.f32.xlu0 %v768
  %v770 = vpop.xlane.xlu0 %769
  %v771 = vmul.f32 %v770, %v185
  %v772 = vsub.f32 %v762, %v771
  %v773 = vmul.f32 %v772, %v772
  %775 = vrot.lane.b32.xlu0 %v773, 65
  %v776 = vpop.permute.xlu0 %775
  %v778 = vsel %vm767, %v776, 0.0
  %779 = vadd.xlane.f32.xlu0 %v778
  %v780 = vpop.xlane.xlu0 %779
  %v781 = vmul.f32 %v780, %v185
  %v782 = vadd.f32 %v781, 1e-05
  %v783 = vrsqrt.pop %v782
  %v784 = vmul.f32 %v772, %v783
  %786 = vset.pattern.permute.xlu0 0
  %787 = vperm.xlu0 %786, %v415
  %v788 = vpop.permute.xlu0 %787
  %v790 = vlaneseq
  %v791 = vshrl.u32 %v790, 7
  %v792 = vsub.s32 0, %v791
  %v793 = vrot.slane %v788, %v792
  %v794 = vmul.f32 %v784, %v793
  %796 = vset.pattern.permute.xlu0 0
  %797 = vperm.xlu0 %796, %v416
  %v798 = vpop.permute.xlu0 %797
  %v800 = vlaneseq
  %v801 = vshrl.u32 %v800, 7
  %v802 = vsub.s32 0, %v801
  %v803 = vrot.slane %v798, %v802
  %v804 = vadd.f32 %v794, %v803
  %v805 = vmax.f32 %v804, 0.0
  %807 = vrot.lane.b32.xlu0 %v805, 96
  %v808 = vpop.permute.xlu0 %807
  %v809 = vld [vmem:[%s21] sm:$0xff]
  %v810 = vld [vmem:[%s21 + $0x8] sm:$0xff]
  %v811 = vld [vmem:[%s21 + $0x10] sm:$0xff]
  %v812 = vld [vmem:[%s21 + $0x18] sm:$0xff]
  %v813 = vld [vmem:[%s22] sm:$0x1]
  %v814 = vadd.f32 %v813, 0.0
  %815 = vset.pattern.permute.xlu0 63
  %816 = vperm.xlu0 %815, %v805
  %v817 = vpop.permute.xlu0 %816
  %819 = vset.pattern.permute.xlu0 63
  %820 = vperm.xlu0 %819, %v808
  %v821 = vpop.permute.xlu0 %820
  %v823 = vmul.f32 %v817, %v809
  %v824 = vmul.f32 %v821, %v809
  %v825 = vadd.f32 %v814, %v823
  %v826 = vadd.f32 %v814, %v824
  %827 = vset.pattern.permute.xlu0 64
  %828 = vperm.xlu0 %827, %v805
  %v829 = vpop.permute.xlu0 %828
  %831 = vset.pattern.permute.xlu0 64
  %832 = vperm.xlu0 %831, %v808
  %v833 = vpop.permute.xlu0 %832
  %v836 = vrot.slane %v809, 1
  %v838 = vmul.f32 %v829, %v836
  %v839 = vmul.f32 %v833, %v836
  %v840 = vadd.f32 %v825, %v838
  %v841 = vadd.f32 %v826, %v839
  %842 = vset.pattern.permute.xlu0 65
  %843 = vperm.xlu0 %842, %v805
  %v844 = vpop.permute.xlu0 %843
  %846 = vset.pattern.permute.xlu0 65
  %847 = vperm.xlu0 %846, %v808
  %v848 = vpop.permute.xlu0 %847
  %v850 = vrot.slane %v809, 2
  %v852 = vmul.f32 %v844, %v850
  %v853 = vmul.f32 %v848, %v850
  %v854 = vadd.f32 %v840, %v852
  %v855 = vadd.f32 %v841, %v853
  %856 = vset.pattern.permute.xlu0 66
  %857 = vperm.xlu0 %856, %v805
  %v858 = vpop.permute.xlu0 %857
  %860 = vset.pattern.permute.xlu0 66
  %861 = vperm.xlu0 %860, %v808
  %v862 = vpop.permute.xlu0 %861
  %v864 = vrot.slane %v809, 3
  %v866 = vmul.f32 %v858, %v864
  %v867 = vmul.f32 %v862, %v864
  %v868 = vadd.f32 %v854, %v866
  %v869 = vadd.f32 %v855, %v867
  %870 = vset.pattern.permute.xlu0 67
  %871 = vperm.xlu0 %870, %v805
  %v872 = vpop.permute.xlu0 %871
  %874 = vset.pattern.permute.xlu0 67
  %875 = vperm.xlu0 %874, %v808
  %v876 = vpop.permute.xlu0 %875
  %v878 = vrot.slane %v809, 4
  %v880 = vmul.f32 %v872, %v878
  %v881 = vmul.f32 %v876, %v878
  %v882 = vadd.f32 %v868, %v880
  %v883 = vadd.f32 %v869, %v881
  %884 = vset.pattern.permute.xlu0 68
  %885 = vperm.xlu0 %884, %v805
  %v886 = vpop.permute.xlu0 %885
  %888 = vset.pattern.permute.xlu0 68
  %889 = vperm.xlu0 %888, %v808
  %v890 = vpop.permute.xlu0 %889
  %v892 = vrot.slane %v809, 5
  %v894 = vmul.f32 %v886, %v892
  %v895 = vmul.f32 %v890, %v892
  %v896 = vadd.f32 %v882, %v894
  %v897 = vadd.f32 %v883, %v895
  %898 = vset.pattern.permute.xlu0 69
  %899 = vperm.xlu0 %898, %v805
  %v900 = vpop.permute.xlu0 %899
  %902 = vset.pattern.permute.xlu0 69
  %903 = vperm.xlu0 %902, %v808
  %v904 = vpop.permute.xlu0 %903
  %v906 = vrot.slane %v809, 6
  %v908 = vmul.f32 %v900, %v906
  %v909 = vmul.f32 %v904, %v906
  %v910 = vadd.f32 %v896, %v908
  %v911 = vadd.f32 %v897, %v909
  %912 = vset.pattern.permute.xlu0 70
  %913 = vperm.xlu0 %912, %v805
  %v914 = vpop.permute.xlu0 %913
  %916 = vset.pattern.permute.xlu0 70
  %917 = vperm.xlu0 %916, %v808
  %v918 = vpop.permute.xlu0 %917
  %v920 = vrot.slane %v809, 7
  %v922 = vmul.f32 %v914, %v920
  %v923 = vmul.f32 %v918, %v920
  %v924 = vadd.f32 %v910, %v922
  %v925 = vadd.f32 %v911, %v923
  %926 = vset.pattern.permute.xlu0 71
  %927 = vperm.xlu0 %926, %v805
  %v928 = vpop.permute.xlu0 %927
  %930 = vset.pattern.permute.xlu0 71
  %931 = vperm.xlu0 %930, %v808
  %v932 = vpop.permute.xlu0 %931
  %v934 = vmul.f32 %v928, %v810
  %v935 = vmul.f32 %v932, %v810
  %v936 = vadd.f32 %v924, %v934
  %v937 = vadd.f32 %v925, %v935
  %938 = vset.pattern.permute.xlu0 72
  %939 = vperm.xlu0 %938, %v805
  %v940 = vpop.permute.xlu0 %939
  %942 = vset.pattern.permute.xlu0 72
  %943 = vperm.xlu0 %942, %v808
  %v944 = vpop.permute.xlu0 %943
  %v947 = vrot.slane %v810, 1
  %v949 = vmul.f32 %v940, %v947
  %v950 = vmul.f32 %v944, %v947
  %v951 = vadd.f32 %v936, %v949
  %v952 = vadd.f32 %v937, %v950
  %953 = vset.pattern.permute.xlu0 73
  %954 = vperm.xlu0 %953, %v805
  %v955 = vpop.permute.xlu0 %954
  %957 = vset.pattern.permute.xlu0 73
  %958 = vperm.xlu0 %957, %v808
  %v959 = vpop.permute.xlu0 %958
  %v961 = vrot.slane %v810, 2
  %v963 = vmul.f32 %v955, %v961
  %v964 = vmul.f32 %v959, %v961
  %v965 = vadd.f32 %v951, %v963
  %v966 = vadd.f32 %v952, %v964
  %967 = vset.pattern.permute.xlu0 74
  %968 = vperm.xlu0 %967, %v805
  %v969 = vpop.permute.xlu0 %968
  %971 = vset.pattern.permute.xlu0 74
  %972 = vperm.xlu0 %971, %v808
  %v973 = vpop.permute.xlu0 %972
  %v975 = vrot.slane %v810, 3
  %v977 = vmul.f32 %v969, %v975
  %v978 = vmul.f32 %v973, %v975
  %v979 = vadd.f32 %v965, %v977
  %v980 = vadd.f32 %v966, %v978
  %981 = vset.pattern.permute.xlu0 75
  %982 = vperm.xlu0 %981, %v805
  %v983 = vpop.permute.xlu0 %982
  %985 = vset.pattern.permute.xlu0 75
  %986 = vperm.xlu0 %985, %v808
  %v987 = vpop.permute.xlu0 %986
  %v989 = vrot.slane %v810, 4
  %v991 = vmul.f32 %v983, %v989
  %v992 = vmul.f32 %v987, %v989
  %v993 = vadd.f32 %v979, %v991
  %v994 = vadd.f32 %v980, %v992
  %995 = vset.pattern.permute.xlu0 76
  %996 = vperm.xlu0 %995, %v805
  %v997 = vpop.permute.xlu0 %996
  %999 = vset.pattern.permute.xlu0 76
  %1000 = vperm.xlu0 %999, %v808
  %v1001 = vpop.permute.xlu0 %1000
  %v1003 = vrot.slane %v810, 5
  %v1005 = vmul.f32 %v997, %v1003
  %v1006 = vmul.f32 %v1001, %v1003
  %v1007 = vadd.f32 %v993, %v1005
  %v1008 = vadd.f32 %v994, %v1006
  %1009 = vset.pattern.permute.xlu0 77
  %1010 = vperm.xlu0 %1009, %v805
  %v1011 = vpop.permute.xlu0 %1010
  %1013 = vset.pattern.permute.xlu0 77
  %1014 = vperm.xlu0 %1013, %v808
  %v1015 = vpop.permute.xlu0 %1014
  %v1017 = vrot.slane %v810, 6
  %v1019 = vmul.f32 %v1011, %v1017
  %v1020 = vmul.f32 %v1015, %v1017
  %v1021 = vadd.f32 %v1007, %v1019
  %v1022 = vadd.f32 %v1008, %v1020
  %1023 = vset.pattern.permute.xlu0 78
  %1024 = vperm.xlu0 %1023, %v805
  %v1025 = vpop.permute.xlu0 %1024
  %1027 = vset.pattern.permute.xlu0 78
  %1028 = vperm.xlu0 %1027, %v808
  %v1029 = vpop.permute.xlu0 %1028
  %v1031 = vrot.slane %v810, 7
  %v1033 = vmul.f32 %v1025, %v1031
  %v1034 = vmul.f32 %v1029, %v1031
  %v1035 = vadd.f32 %v1021, %v1033
  %v1036 = vadd.f32 %v1022, %v1034
  %1037 = vset.pattern.permute.xlu0 79
  %1038 = vperm.xlu0 %1037, %v805
  %v1039 = vpop.permute.xlu0 %1038
  %1041 = vset.pattern.permute.xlu0 79
  %1042 = vperm.xlu0 %1041, %v808
  %v1043 = vpop.permute.xlu0 %1042
  %v1045 = vmul.f32 %v1039, %v811
  %v1046 = vmul.f32 %v1043, %v811
  %v1047 = vadd.f32 %v1035, %v1045
  %v1048 = vadd.f32 %v1036, %v1046
  %1049 = vset.pattern.permute.xlu0 80
  %1050 = vperm.xlu0 %1049, %v805
  %v1051 = vpop.permute.xlu0 %1050
  %1053 = vset.pattern.permute.xlu0 80
  %1054 = vperm.xlu0 %1053, %v808
  %v1055 = vpop.permute.xlu0 %1054
  %v1058 = vrot.slane %v811, 1
  %v1060 = vmul.f32 %v1051, %v1058
  %v1061 = vmul.f32 %v1055, %v1058
  %v1062 = vadd.f32 %v1047, %v1060
  %v1063 = vadd.f32 %v1048, %v1061
  %1064 = vset.pattern.permute.xlu0 81
  %1065 = vperm.xlu0 %1064, %v805
  %v1066 = vpop.permute.xlu0 %1065
  %1068 = vset.pattern.permute.xlu0 81
  %1069 = vperm.xlu0 %1068, %v808
  %v1070 = vpop.permute.xlu0 %1069
  %v1072 = vrot.slane %v811, 2
  %v1074 = vmul.f32 %v1066, %v1072
  %v1075 = vmul.f32 %v1070, %v1072
  %v1076 = vadd.f32 %v1062, %v1074
  %v1077 = vadd.f32 %v1063, %v1075
  %1078 = vset.pattern.permute.xlu0 82
  %1079 = vperm.xlu0 %1078, %v805
  %v1080 = vpop.permute.xlu0 %1079
  %1082 = vset.pattern.permute.xlu0 82
  %1083 = vperm.xlu0 %1082, %v808
  %v1084 = vpop.permute.xlu0 %1083
  %v1086 = vrot.slane %v811, 3
  %v1088 = vmul.f32 %v1080, %v1086
  %v1089 = vmul.f32 %v1084, %v1086
  %v1090 = vadd.f32 %v1076, %v1088
  %v1091 = vadd.f32 %v1077, %v1089
  %1092 = vset.pattern.permute.xlu0 83
  %1093 = vperm.xlu0 %1092, %v805
  %v1094 = vpop.permute.xlu0 %1093
  %1096 = vset.pattern.permute.xlu0 83
  %1097 = vperm.xlu0 %1096, %v808
  %v1098 = vpop.permute.xlu0 %1097
  %v1100 = vrot.slane %v811, 4
  %v1102 = vmul.f32 %v1094, %v1100
  %v1103 = vmul.f32 %v1098, %v1100
  %v1104 = vadd.f32 %v1090, %v1102
  %v1105 = vadd.f32 %v1091, %v1103
  %1106 = vset.pattern.permute.xlu0 84
  %1107 = vperm.xlu0 %1106, %v805
  %v1108 = vpop.permute.xlu0 %1107
  %1110 = vset.pattern.permute.xlu0 84
  %1111 = vperm.xlu0 %1110, %v808
  %v1112 = vpop.permute.xlu0 %1111
  %v1114 = vrot.slane %v811, 5
  %v1116 = vmul.f32 %v1108, %v1114
  %v1117 = vmul.f32 %v1112, %v1114
  %v1118 = vadd.f32 %v1104, %v1116
  %v1119 = vadd.f32 %v1105, %v1117
  %1120 = vset.pattern.permute.xlu0 85
  %1121 = vperm.xlu0 %1120, %v805
  %v1122 = vpop.permute.xlu0 %1121
  %1124 = vset.pattern.permute.xlu0 85
  %1125 = vperm.xlu0 %1124, %v808
  %v1126 = vpop.permute.xlu0 %1125
  %v1128 = vrot.slane %v811, 6
  %v1130 = vmul.f32 %v1122, %v1128
  %v1131 = vmul.f32 %v1126, %v1128
  %v1132 = vadd.f32 %v1118, %v1130
  %v1133 = vadd.f32 %v1119, %v1131
  %1134 = vset.pattern.permute.xlu0 86
  %1135 = vperm.xlu0 %1134, %v805
  %v1136 = vpop.permute.xlu0 %1135
  %1138 = vset.pattern.permute.xlu0 86
  %1139 = vperm.xlu0 %1138, %v808
  %v1140 = vpop.permute.xlu0 %1139
  %v1142 = vrot.slane %v811, 7
  %v1144 = vmul.f32 %v1136, %v1142
  %v1145 = vmul.f32 %v1140, %v1142
  %v1146 = vadd.f32 %v1132, %v1144
  %v1147 = vadd.f32 %v1133, %v1145
  %1148 = vset.pattern.permute.xlu0 87
  %1149 = vperm.xlu0 %1148, %v805
  %v1150 = vpop.permute.xlu0 %1149
  %1152 = vset.pattern.permute.xlu0 87
  %1153 = vperm.xlu0 %1152, %v808
  %v1154 = vpop.permute.xlu0 %1153
  %v1156 = vmul.f32 %v1150, %v812
  %v1157 = vmul.f32 %v1154, %v812
  %v1158 = vadd.f32 %v1146, %v1156
  %v1159 = vadd.f32 %v1147, %v1157
  %1160 = vset.pattern.permute.xlu0 88
  %1161 = vperm.xlu0 %1160, %v805
  %v1162 = vpop.permute.xlu0 %1161
  %1164 = vset.pattern.permute.xlu0 88
  %1165 = vperm.xlu0 %1164, %v808
  %v1166 = vpop.permute.xlu0 %1165
  %v1169 = vrot.slane %v812, 1
  %v1171 = vmul.f32 %v1162, %v1169
  %v1172 = vmul.f32 %v1166, %v1169
  %v1173 = vadd.f32 %v1158, %v1171
  %v1174 = vadd.f32 %v1159, %v1172
  %1175 = vset.pattern.permute.xlu0 89
  %1176 = vperm.xlu0 %1175, %v805
  %v1177 = vpop.permute.xlu0 %1176
  %1179 = vset.pattern.permute.xlu0 89
  %1180 = vperm.xlu0 %1179, %v808
  %v1181 = vpop.permute.xlu0 %1180
  %v1183 = vrot.slane %v812, 2
  %v1185 = vmul.f32 %v1177, %v1183
  %v1186 = vmul.f32 %v1181, %v1183
  %v1187 = vadd.f32 %v1173, %v1185
  %v1188 = vadd.f32 %v1174, %v1186
  %1189 = vset.pattern.permute.xlu0 90
  %1190 = vperm.xlu0 %1189, %v805
  %v1191 = vpop.permute.xlu0 %1190
  %1193 = vset.pattern.permute.xlu0 90
  %1194 = vperm.xlu0 %1193, %v808
  %v1195 = vpop.permute.xlu0 %1194
  %v1197 = vrot.slane %v812, 3
  %v1199 = vmul.f32 %v1191, %v1197
  %v1200 = vmul.f32 %v1195, %v1197
  %v1201 = vadd.f32 %v1187, %v1199
  %v1202 = vadd.f32 %v1188, %v1200
  %1203 = vset.pattern.permute.xlu0 91
  %1204 = vperm.xlu0 %1203, %v805
  %v1205 = vpop.permute.xlu0 %1204
  %1207 = vset.pattern.permute.xlu0 91
  %1208 = vperm.xlu0 %1207, %v808
  %v1209 = vpop.permute.xlu0 %1208
  %v1211 = vrot.slane %v812, 4
  %v1213 = vmul.f32 %v1205, %v1211
  %v1214 = vmul.f32 %v1209, %v1211
  %v1215 = vadd.f32 %v1201, %v1213
  %v1216 = vadd.f32 %v1202, %v1214
  %1217 = vset.pattern.permute.xlu0 92
  %1218 = vperm.xlu0 %1217, %v805
  %v1219 = vpop.permute.xlu0 %1218
  %1221 = vset.pattern.permute.xlu0 92
  %1222 = vperm.xlu0 %1221, %v808
  %v1223 = vpop.permute.xlu0 %1222
  %v1225 = vrot.slane %v812, 5
  %v1227 = vmul.f32 %v1219, %v1225
  %v1228 = vmul.f32 %v1223, %v1225
  %v1229 = vadd.f32 %v1215, %v1227
  %v1230 = vadd.f32 %v1216, %v1228
  %1231 = vset.pattern.permute.xlu0 93
  %1232 = vperm.xlu0 %1231, %v805
  %v1233 = vpop.permute.xlu0 %1232
  %1235 = vset.pattern.permute.xlu0 93
  %1236 = vperm.xlu0 %1235, %v808
  %v1237 = vpop.permute.xlu0 %1236
  %v1239 = vrot.slane %v812, 6
  %v1241 = vmul.f32 %v1233, %v1239
  %v1242 = vmul.f32 %v1237, %v1239
  %v1243 = vadd.f32 %v1229, %v1241
  %v1244 = vadd.f32 %v1230, %v1242
  %1245 = vset.pattern.permute.xlu0 94
  %1246 = vperm.xlu0 %1245, %v805
  %v1247 = vpop.permute.xlu0 %1246
  %1249 = vset.pattern.permute.xlu0 94
  %1250 = vperm.xlu0 %1249, %v808
  %v1251 = vpop.permute.xlu0 %1250
  %v1253 = vrot.slane %v812, 7
  %v1255 = vmul.f32 %v1247, %v1253
  %v1256 = vmul.f32 %v1251, %v1253
  %v1257 = vadd.f32 %v1243, %v1255
  %v1258 = vadd.f32 %v1244, %v1256
  %v1259 = vsub.f32 0.0, %v1257
  %v1260 = vsub.f32 0.0, %v1258
  %v1261 = vmul.f32 %v1259, 1.442695
  %v1262 = vpow.pop %v1261
  %v1263 = vmul.f32 %v1260, 1.442695
  %v1264 = vpow.pop %v1263
  %v1265 = vadd.f32 %v1262, 1.0
  %v1266 = vadd.f32 %v1264, 1.0
  %v1267 = vrcp.pop %v1265
  %v1268 = vmul.f32 1.0, %v1267
  %v1269 = vrcp.pop %v1266
  %v1270 = vmul.f32 1.0, %v1269
  %v1271 = vmul.f32 %v1268, 10.0
  %v1272 = vmul.f32 %v1270, 10.0
  %vm1273 = vcmask 24576
  %v1274 = vsel %vm1273, %v1268, 0.0
  %1275 = vadd.xlane.f32.xlu0 %v1274
  %v1276 = vpop.xlane.xlu0 %1275
  %v1277 = vsel %vm1273, %v1270, 0.0
  %1278 = vadd.xlane.f32.xlu0 %v1277
  %v1279 = vpop.xlane.xlu0 %1278
  %v1280 = vrcp.pop %v1276
  %v1281 = vmul.f32 %v1271, %v1280
  %v1282 = vrcp.pop %v1279
  %v1283 = vmul.f32 %v1272, %v1282
  %v1286 = vlaneseq
  %v1287 = vshrl.u32 %v1286, 7
  %v1288 = vsub.s32 0, %v1287
  %v1289 = vrot.slane %v1268, %v1288
  %v1290 = vlaneseq
  %v1291 = vshrl.u32 %v1290, 7
  %v1292 = vsub.s32 0, %v1291
  %v1293 = vrot.slane %v1270, %v1292
  %1294 = vrot.lane.b32.xlu0 %v1289, 124
  %v1295 = vpop.permute.xlu0 %1294
  %1296 = vrot.lane.b32.xlu0 %v1293, 124
  %v1297 = vpop.permute.xlu0 %1296
  %v1300 = vsel %vm1273, %v1295, 0.0
  %1301 = vadd.xlane.f32.xlu0 %v1300
  %v1302 = vpop.xlane.xlu0 %1301
  %v1303 = vsel %vm1273, %v1297, 0.0
  %1304 = vadd.xlane.f32.xlu0 %v1303
  %v1305 = vpop.xlane.xlu0 %1304
  %v1306 = vrcp.pop %v1302
  %v1307 = vmul.f32 %v1271, %v1306
  %v1308 = vrcp.pop %v1305
  %v1309 = vmul.f32 %v1272, %v1308
  %v1310 = vld [vmem:[%s23] sm:$0xf]
  %v1311 = vld [vmem:[%s23 + $0x4] sm:$0xf]
  %v1312 = vld [vmem:[%s24] sm:$0xf]
  %v1313 = vld [vmem:[%s24 + $0x4] sm:$0xf]
  %v1314 = vld [vmem:[%s25] sm:$0xf]
  %v1315 = vld [vmem:[%s25 + $0x4] sm:$0xf]
  %v1316 = vld [vmem:[%s26] sm:$0xf]
  %v1317 = vld [vmem:[%s26 + $0x4] sm:$0xf]
  %1319 = vset.pattern.permute.xlu0 0
  %1320 = vperm.xlu0 %1319, %v1314
  %v1321 = vpop.permute.xlu0 %1320
  %1324 = vset.pattern.permute.xlu0 0
  %1325 = vperm.xlu0 %1324, %v1315
  %v1326 = vpop.permute.xlu0 %1325
  %v1328 = vlaneseq
  %v1329 = vshrl.u32 %v1328, 7
  %v1330 = vsub.s32 0, %v1329
  %v1331 = vrot.slane %v1310, %v1330
  %v1332 = vlaneseq
  %v1333 = vshrl.u32 %v1332, 7
  %v1334 = vsub.s32 0, %v1333
  %v1335 = vrot.slane %v1311, %v1334
  %v1336 = vmul.f32 %v1321, %v1331
  %v1337 = vmul.f32 %v1326, %v1335
  %1339 = vset.pattern.permute.xlu0 0
  %1340 = vperm.xlu0 %1339, %v1316
  %v1341 = vpop.permute.xlu0 %1340
  %1344 = vset.pattern.permute.xlu0 0
  %1345 = vperm.xlu0 %1344, %v1317
  %v1346 = vpop.permute.xlu0 %1345
  %v1348 = vlaneseq
  %v1349 = vshrl.u32 %v1348, 7
  %v1350 = vsub.s32 0, %v1349
  %v1351 = vrot.slane %v1312, %v1350
  %v1352 = vlaneseq
  %v1353 = vshrl.u32 %v1352, 7
  %v1354 = vsub.s32 0, %v1353
  %v1355 = vrot.slane %v1313, %v1354
  %v1356 = vmul.f32 %v1341, %v1351
  %v1357 = vmul.f32 %v1346, %v1355
  %v1358 = vadd.f32 %v1336, %v1356
  %v1359 = vadd.f32 %v1337, %v1357
  %v1362 = vlaneseq
  %v1363 = vshrl.u32 %v1362, 7
  %v1364 = vsub.s32 0, %v1363
  %v1365 = vrot.slane %v1307, %v1364
  %v1366 = vlaneseq
  %v1367 = vshrl.u32 %v1366, 7
  %v1368 = vsub.s32 0, %v1367
  %v1369 = vrot.slane %v1309, %v1368
  %1370 = vset.pattern.permute.xlu0 4
  %1371 = vperm.xlu0 %1370, %v1365
  %v1372 = vpop.permute.xlu0 %1371
  %1374 = vset.pattern.permute.xlu0 4
  %1375 = vperm.xlu0 %1374, %v1369
  %v1376 = vpop.permute.xlu0 %1375
  %v1378 = vmul.f32 %v1372, %v1358
  %v1379 = vmul.f32 %v1376, %v1359
  %v1380 = vadd.f32 %v1378, 0.0
  %v1381 = vadd.f32 %v1379, 0.0
  %v1382 = vmul.f32 %v1321, %v1351
  %v1383 = vmul.f32 %v1326, %v1355
  %v1384 = vmul.f32 %v1341, %v1331
  %v1385 = vmul.f32 %v1346, %v1335
  %v1386 = vsub.f32 %v1382, %v1384
  %v1387 = vsub.f32 %v1383, %v1385
  %v1388 = vmul.f32 %v1372, %v1386
  %v1389 = vmul.f32 %v1376, %v1387
  %v1390 = vadd.f32 %v1388, 0.0
  %v1391 = vadd.f32 %v1389, 0.0
  %1392 = vset.pattern.permute.xlu0 1
  %1393 = vperm.xlu0 %1392, %v1314
  %v1394 = vpop.permute.xlu0 %1393
  %1396 = vset.pattern.permute.xlu0 1
  %1397 = vperm.xlu0 %1396, %v1315
  %v1398 = vpop.permute.xlu0 %1397
  %v1400 = vlaneseq
  %v1401 = vshrl.u32 %v1400, 7
  %v1402 = vsub.s32 1, %v1401
  %v1403 = vrot.slane %v1310, %v1402
  %v1404 = vlaneseq
  %v1405 = vshrl.u32 %v1404, 7
  %v1406 = vsub.s32 1, %v1405
  %v1407 = vrot.slane %v1311, %v1406
  %v1408 = vmul.f32 %v1394, %v1403
  %v1409 = vmul.f32 %v1398, %v1407
  %1410 = vset.pattern.permute.xlu0 1
  %1411 = vperm.xlu0 %1410, %v1316
  %v1412 = vpop.permute.xlu0 %1411
  %1414 = vset.pattern.permute.xlu0 1
  %1415 = vperm.xlu0 %1414, %v1317
  %v1416 = vpop.permute.xlu0 %1415
  %v1418 = vlaneseq
  %v1419 = vshrl.u32 %v1418, 7
  %v1420 = vsub.s32 1, %v1419
  %v1421 = vrot.slane %v1312, %v1420
  %v1422 = vlaneseq
  %v1423 = vshrl.u32 %v1422, 7
  %v1424 = vsub.s32 1, %v1423
  %v1425 = vrot.slane %v1313, %v1424
  %v1426 = vmul.f32 %v1412, %v1421
  %v1427 = vmul.f32 %v1416, %v1425
  %v1428 = vadd.f32 %v1408, %v1426
  %v1429 = vadd.f32 %v1409, %v1427
  %1430 = vset.pattern.permute.xlu0 5
  %1431 = vperm.xlu0 %1430, %v1365
  %v1432 = vpop.permute.xlu0 %1431
  %1434 = vset.pattern.permute.xlu0 5
  %1435 = vperm.xlu0 %1434, %v1369
  %v1436 = vpop.permute.xlu0 %1435
  %v1438 = vmul.f32 %v1432, %v1428
  %v1439 = vmul.f32 %v1436, %v1429
  %v1440 = vadd.f32 %v1380, %v1438
  %v1441 = vadd.f32 %v1381, %v1439
  %v1442 = vmul.f32 %v1394, %v1421
  %v1443 = vmul.f32 %v1398, %v1425
  %v1444 = vmul.f32 %v1412, %v1403
  %v1445 = vmul.f32 %v1416, %v1407
  %v1446 = vsub.f32 %v1442, %v1444
  %v1447 = vsub.f32 %v1443, %v1445
  %v1448 = vmul.f32 %v1432, %v1446
  %v1449 = vmul.f32 %v1436, %v1447
  %v1450 = vadd.f32 %v1390, %v1448
  %v1451 = vadd.f32 %v1391, %v1449
  %1452 = vset.pattern.permute.xlu0 2
  %1453 = vperm.xlu0 %1452, %v1314
  %v1454 = vpop.permute.xlu0 %1453
  %1456 = vset.pattern.permute.xlu0 2
  %1457 = vperm.xlu0 %1456, %v1315
  %v1458 = vpop.permute.xlu0 %1457
  %v1460 = vlaneseq
  %v1461 = vshrl.u32 %v1460, 7
  %v1462 = vsub.s32 2, %v1461
  %v1463 = vrot.slane %v1310, %v1462
  %v1464 = vlaneseq
  %v1465 = vshrl.u32 %v1464, 7
  %v1466 = vsub.s32 2, %v1465
  %v1467 = vrot.slane %v1311, %v1466
  %v1468 = vmul.f32 %v1454, %v1463
  %v1469 = vmul.f32 %v1458, %v1467
  %1470 = vset.pattern.permute.xlu0 2
  %1471 = vperm.xlu0 %1470, %v1316
  %v1472 = vpop.permute.xlu0 %1471
  %1474 = vset.pattern.permute.xlu0 2
  %1475 = vperm.xlu0 %1474, %v1317
  %v1476 = vpop.permute.xlu0 %1475
  %v1478 = vlaneseq
  %v1479 = vshrl.u32 %v1478, 7
  %v1480 = vsub.s32 2, %v1479
  %v1481 = vrot.slane %v1312, %v1480
  %v1482 = vlaneseq
  %v1483 = vshrl.u32 %v1482, 7
  %v1484 = vsub.s32 2, %v1483
  %v1485 = vrot.slane %v1313, %v1484
  %v1486 = vmul.f32 %v1472, %v1481
  %v1487 = vmul.f32 %v1476, %v1485
  %v1488 = vadd.f32 %v1468, %v1486
  %v1489 = vadd.f32 %v1469, %v1487
  %1490 = vset.pattern.permute.xlu0 6
  %1491 = vperm.xlu0 %1490, %v1365
  %v1492 = vpop.permute.xlu0 %1491
  %1494 = vset.pattern.permute.xlu0 6
  %1495 = vperm.xlu0 %1494, %v1369
  %v1496 = vpop.permute.xlu0 %1495
  %v1498 = vmul.f32 %v1492, %v1488
  %v1499 = vmul.f32 %v1496, %v1489
  %v1500 = vadd.f32 %v1440, %v1498
  %v1501 = vadd.f32 %v1441, %v1499
  %v1502 = vmul.f32 %v1454, %v1481
  %v1503 = vmul.f32 %v1458, %v1485
  %v1504 = vmul.f32 %v1472, %v1463
  %v1505 = vmul.f32 %v1476, %v1467
  %v1506 = vsub.f32 %v1502, %v1504
  %v1507 = vsub.f32 %v1503, %v1505
  %v1508 = vmul.f32 %v1492, %v1506
  %v1509 = vmul.f32 %v1496, %v1507
  %v1510 = vadd.f32 %v1450, %v1508
  %v1511 = vadd.f32 %v1451, %v1509
  %1512 = vset.pattern.permute.xlu0 3
  %1513 = vperm.xlu0 %1512, %v1314
  %v1514 = vpop.permute.xlu0 %1513
  %1516 = vset.pattern.permute.xlu0 3
  %1517 = vperm.xlu0 %1516, %v1315
  %v1518 = vpop.permute.xlu0 %1517
  %v1520 = vlaneseq
  %v1521 = vshrl.u32 %v1520, 7
  %v1522 = vsub.s32 3, %v1521
  %v1523 = vrot.slane %v1310, %v1522
  %v1524 = vlaneseq
  %v1525 = vshrl.u32 %v1524, 7
  %v1526 = vsub.s32 3, %v1525
  %v1527 = vrot.slane %v1311, %v1526
  %v1528 = vmul.f32 %v1514, %v1523
  %v1529 = vmul.f32 %v1518, %v1527
  %1530 = vset.pattern.permute.xlu0 3
  %1531 = vperm.xlu0 %1530, %v1316
  %v1532 = vpop.permute.xlu0 %1531
  %1534 = vset.pattern.permute.xlu0 3
  %1535 = vperm.xlu0 %1534, %v1317
  %v1536 = vpop.permute.xlu0 %1535
  %v1538 = vlaneseq
  %v1539 = vshrl.u32 %v1538, 7
  %v1540 = vsub.s32 3, %v1539
  %v1541 = vrot.slane %v1312, %v1540
  %v1542 = vlaneseq
  %v1543 = vshrl.u32 %v1542, 7
  %v1544 = vsub.s32 3, %v1543
  %v1545 = vrot.slane %v1313, %v1544
  %v1546 = vmul.f32 %v1532, %v1541
  %v1547 = vmul.f32 %v1536, %v1545
  %v1548 = vadd.f32 %v1528, %v1546
  %v1549 = vadd.f32 %v1529, %v1547
  %1550 = vset.pattern.permute.xlu0 7
  %1551 = vperm.xlu0 %1550, %v1365
  %v1552 = vpop.permute.xlu0 %1551
  %1554 = vset.pattern.permute.xlu0 7
  %1555 = vperm.xlu0 %1554, %v1369
  %v1556 = vpop.permute.xlu0 %1555
  %v1558 = vmul.f32 %v1552, %v1548
  %v1559 = vmul.f32 %v1556, %v1549
  %v1560 = vadd.f32 %v1500, %v1558
  %v1561 = vadd.f32 %v1501, %v1559
  %v1562 = vmul.f32 %v1514, %v1541
  %v1563 = vmul.f32 %v1518, %v1545
  %v1564 = vmul.f32 %v1532, %v1523
  %v1565 = vmul.f32 %v1536, %v1527
  %v1566 = vsub.f32 %v1562, %v1564
  %v1567 = vsub.f32 %v1563, %v1565
  %v1568 = vmul.f32 %v1552, %v1566
  %v1569 = vmul.f32 %v1556, %v1567
  %v1570 = vadd.f32 %v1510, %v1568
  %v1571 = vadd.f32 %v1511, %v1569
  %v1572 = vlaneseq
  %v1573 = vshrl.u32 %v1572, 7
  %v1574 = vlaneseq
  %v1575 = vand.u32 %v1574, 127
  %vm1576 = vcmp.eq.s32.totalorder %v1573, %v1575
  %v1577 = vsel %vm1576, 1, 0
  %v1578 = vcvt.s32.f32 %v1577
  %v1579 = vadd.f32 %v1578, %v1560
  %v1580 = vadd.f32 %v1578, %v1561
  %1581 = vrot.lane.b32.xlu0 %v1314, 4
  %v1582 = vpop.permute.xlu0 %1581
  %1583 = vrot.lane.b32.xlu0 %v1315, 4
  %v1584 = vpop.permute.xlu0 %1583
  %vm1587 = vcmask 31744
  %v1588 = vsel %vm1587, %v1579, %v1582
  %v1589 = vsel %vm1587, %v1580, %v1584
  %v1590 = vsub.f32 0.0, %v1316
  %v1591 = vsub.f32 0.0, %v1317
  %1594 = vrot.lane.b32.xlu0 %v1590, 4
  %v1595 = vpop.permute.xlu0 %1594
  %1596 = vrot.lane.b32.xlu0 %v1591, 4
  %v1597 = vpop.permute.xlu0 %1596
  %v1600 = vsel %vm1587, %v1570, %v1595
  %v1601 = vsel %vm1587, %v1571, %v1597
  %v1602 = vmul.f32 %v1588, %v1588
  %v1603 = vmul.f32 %v1589, %v1589
  %v1604 = vmul.f32 %v1600, %v1600
  %v1605 = vmul.f32 %v1601, %v1601
  %v1606 = vadd.f32 %v1602, %v1604
  %v1607 = vadd.f32 %v1603, %v1605
  %v1608 = vrcp.pop %v1606
  %v1609 = vmul.f32 %v1588, %v1608
  %v1610 = vrcp.pop %v1607
  %v1611 = vmul.f32 %v1589, %v1610
  %v1612 = vsub.f32 0.0, %v1600
  %v1613 = vsub.f32 0.0, %v1601
  %v1614 = vmul.f32 %v1612, %v1608
  %v1615 = vmul.f32 %v1613, %v1610
  %1617 = vset.pattern.permute.xlu0 0
  %1618 = vperm.xlu0 %1617, %v1609
  %v1619 = vpop.permute.xlu0 %1618
  %1622 = vset.pattern.permute.xlu0 0
  %1623 = vperm.xlu0 %1622, %v1611
  %v1624 = vpop.permute.xlu0 %1623
  %v1626 = vmul.f32 %v1588, %v1619
  %v1627 = vmul.f32 %v1589, %v1624
  %1629 = vset.pattern.permute.xlu0 0
  %1630 = vperm.xlu0 %1629, %v1614
  %v1631 = vpop.permute.xlu0 %1630
  %1634 = vset.pattern.permute.xlu0 0
  %1635 = vperm.xlu0 %1634, %v1615
  %v1636 = vpop.permute.xlu0 %1635
  %v1638 = vmul.f32 %v1600, %v1631
  %v1639 = vmul.f32 %v1601, %v1636
  %v1640 = vsub.f32 %v1626, %v1638
  %v1641 = vsub.f32 %v1627, %v1639
  %v1642 = vmul.f32 %v1588, %v1631
  %v1643 = vmul.f32 %v1589, %v1636
  %v1644 = vmul.f32 %v1600, %v1619
  %v1645 = vmul.f32 %v1601, %v1624
  %v1646 = vadd.f32 %v1642, %v1644
  %v1647 = vadd.f32 %v1643, %v1645
  %1649 = vset.pattern.permute.xlu0 0
  %1650 = vperm.xlu0 %1649, %v1588
  %v1651 = vpop.permute.xlu0 %1650
  %1654 = vset.pattern.permute.xlu0 0
  %1655 = vperm.xlu0 %1654, %v1589
  %v1656 = vpop.permute.xlu0 %1655
  %v1658 = vlaneseq
  %v1659 = vshrl.u32 %v1658, 7
  %v1660 = vsub.s32 0, %v1659
  %v1661 = vrot.slane %v1640, %v1660
  %v1662 = vlaneseq
  %v1663 = vshrl.u32 %v1662, 7
  %v1664 = vsub.s32 0, %v1663
  %v1665 = vrot.slane %v1641, %v1664
  %v1666 = vmul.f32 %v1651, %v1661
  %v1667 = vmul.f32 %v1656, %v1665
  %1669 = vset.pattern.permute.xlu0 0
  %1670 = vperm.xlu0 %1669, %v1600
  %v1671 = vpop.permute.xlu0 %1670
  %1674 = vset.pattern.permute.xlu0 0
  %1675 = vperm.xlu0 %1674, %v1601
  %v1676 = vpop.permute.xlu0 %1675
  %v1678 = vlaneseq
  %v1679 = vshrl.u32 %v1678, 7
  %v1680 = vsub.s32 0, %v1679
  %v1681 = vrot.slane %v1646, %v1680
  %v1682 = vlaneseq
  %v1683 = vshrl.u32 %v1682, 7
  %v1684 = vsub.s32 0, %v1683
  %v1685 = vrot.slane %v1647, %v1684
  %v1686 = vmul.f32 %v1671, %v1681
  %v1687 = vmul.f32 %v1676, %v1685
  %v1688 = vsub.f32 %v1666, %v1686
  %v1689 = vsub.f32 %v1667, %v1687
  %v1690 = vsub.f32 %v1588, %v1688
  %v1691 = vsub.f32 %v1589, %v1689
  %v1692 = vmul.f32 %v1651, %v1681
  %v1693 = vmul.f32 %v1656, %v1685
  %v1694 = vmul.f32 %v1671, %v1661
  %v1695 = vmul.f32 %v1676, %v1665
  %v1696 = vadd.f32 %v1692, %v1694
  %v1697 = vadd.f32 %v1693, %v1695
  %v1698 = vsub.f32 %v1600, %v1696
  %v1699 = vsub.f32 %v1601, %v1697
  %vm1700 = vcmp.eq.s32.totalorder %v1573, 0
  %v1701 = vsel %vm1700, 1, 0
  %vm1702 = vcmp.eq.s32.totalorder %v1701, 1
  %v1703 = vsel %vm1702, %v1661, %v1690
  %v1704 = vsel %vm1702, %v1665, %v1691
  %v1705 = vsel %vm1702, %v1681, %v1698
  %v1706 = vsel %vm1702, %v1685, %v1699
  %v1707 = vmul.f32 %v1703, %v1703
  %v1708 = vmul.f32 %v1704, %v1704
  %v1709 = vmul.f32 %v1705, %v1705
  %v1710 = vmul.f32 %v1706, %v1706
  %v1711 = vadd.f32 %v1707, %v1709
  %v1712 = vadd.f32 %v1708, %v1710
  %v1713 = vrcp.pop %v1711
  %v1714 = vmul.f32 %v1703, %v1713
  %v1715 = vrcp.pop %v1712
  %v1716 = vmul.f32 %v1704, %v1715
  %v1717 = vsub.f32 0.0, %v1705
  %v1718 = vsub.f32 0.0, %v1706
  %v1719 = vmul.f32 %v1717, %v1713
  %v1720 = vmul.f32 %v1718, %v1715
  %1722 = vset.pattern.permute.xlu0 1
  %1723 = vperm.xlu0 %1722, %v1714
  %v1724 = vpop.permute.xlu0 %1723
  %1727 = vset.pattern.permute.xlu0 1
  %1728 = vperm.xlu0 %1727, %v1716
  %v1729 = vpop.permute.xlu0 %1728
  %v1731 = vmul.f32 %v1703, %v1724
  %v1732 = vmul.f32 %v1704, %v1729
  %1734 = vset.pattern.permute.xlu0 1
  %1735 = vperm.xlu0 %1734, %v1719
  %v1736 = vpop.permute.xlu0 %1735
  %1739 = vset.pattern.permute.xlu0 1
  %1740 = vperm.xlu0 %1739, %v1720
  %v1741 = vpop.permute.xlu0 %1740
  %v1743 = vmul.f32 %v1705, %v1736
  %v1744 = vmul.f32 %v1706, %v1741
  %v1745 = vsub.f32 %v1731, %v1743
  %v1746 = vsub.f32 %v1732, %v1744
  %v1747 = vmul.f32 %v1703, %v1736
  %v1748 = vmul.f32 %v1704, %v1741
  %v1749 = vmul.f32 %v1705, %v1724
  %v1750 = vmul.f32 %v1706, %v1729
  %v1751 = vadd.f32 %v1747, %v1749
  %v1752 = vadd.f32 %v1748, %v1750
  %1754 = vset.pattern.permute.xlu0 1
  %1755 = vperm.xlu0 %1754, %v1703
  %v1756 = vpop.permute.xlu0 %1755
  %1759 = vset.pattern.permute.xlu0 1
  %1760 = vperm.xlu0 %1759, %v1704
  %v1761 = vpop.permute.xlu0 %1760
  %v1763 = vlaneseq
  %v1764 = vshrl.u32 %v1763, 7
  %v1765 = vsub.s32 1, %v1764
  %v1766 = vrot.slane %v1745, %v1765
  %v1767 = vlaneseq
  %v1768 = vshrl.u32 %v1767, 7
  %v1769 = vsub.s32 1, %v1768
  %v1770 = vrot.slane %v1746, %v1769
  %v1771 = vmul.f32 %v1756, %v1766
  %v1772 = vmul.f32 %v1761, %v1770
  %1774 = vset.pattern.permute.xlu0 1
  %1775 = vperm.xlu0 %1774, %v1705
  %v1776 = vpop.permute.xlu0 %1775
  %1779 = vset.pattern.permute.xlu0 1
  %1780 = vperm.xlu0 %1779, %v1706
  %v1781 = vpop.permute.xlu0 %1780
  %v1783 = vlaneseq
  %v1784 = vshrl.u32 %v1783, 7
  %v1785 = vsub.s32 1, %v1784
  %v1786 = vrot.slane %v1751, %v1785
  %v1787 = vlaneseq
  %v1788 = vshrl.u32 %v1787, 7
  %v1789 = vsub.s32 1, %v1788
  %v1790 = vrot.slane %v1752, %v1789
  %v1791 = vmul.f32 %v1776, %v1786
  %v1792 = vmul.f32 %v1781, %v1790
  %v1793 = vsub.f32 %v1771, %v1791
  %v1794 = vsub.f32 %v1772, %v1792
  %v1795 = vsub.f32 %v1703, %v1793
  %v1796 = vsub.f32 %v1704, %v1794
  %v1797 = vmul.f32 %v1756, %v1786
  %v1798 = vmul.f32 %v1761, %v1790
  %v1799 = vmul.f32 %v1776, %v1766
  %v1800 = vmul.f32 %v1781, %v1770
  %v1801 = vadd.f32 %v1797, %v1799
  %v1802 = vadd.f32 %v1798, %v1800
  %v1803 = vsub.f32 %v1705, %v1801
  %v1804 = vsub.f32 %v1706, %v1802
  %vm1805 = vcmp.eq.s32.totalorder %v1573, 1
  %v1806 = vsel %vm1805, 1, 0
  %vm1807 = vcmp.eq.s32.totalorder %v1806, 1
  %v1808 = vsel %vm1807, %v1766, %v1795
  %v1809 = vsel %vm1807, %v1770, %v1796
  %v1810 = vsel %vm1807, %v1786, %v1803
  %v1811 = vsel %vm1807, %v1790, %v1804
  %v1812 = vmul.f32 %v1808, %v1808
  %v1813 = vmul.f32 %v1809, %v1809
  %v1814 = vmul.f32 %v1810, %v1810
  %v1815 = vmul.f32 %v1811, %v1811
  %v1816 = vadd.f32 %v1812, %v1814
  %v1817 = vadd.f32 %v1813, %v1815
  %v1818 = vrcp.pop %v1816
  %v1819 = vmul.f32 %v1808, %v1818
  %v1820 = vrcp.pop %v1817
  %v1821 = vmul.f32 %v1809, %v1820
  %v1822 = vsub.f32 0.0, %v1810
  %v1823 = vsub.f32 0.0, %v1811
  %v1824 = vmul.f32 %v1822, %v1818
  %v1825 = vmul.f32 %v1823, %v1820
  %1827 = vset.pattern.permute.xlu0 2
  %1828 = vperm.xlu0 %1827, %v1819
  %v1829 = vpop.permute.xlu0 %1828
  %1832 = vset.pattern.permute.xlu0 2
  %1833 = vperm.xlu0 %1832, %v1821
  %v1834 = vpop.permute.xlu0 %1833
  %v1836 = vmul.f32 %v1808, %v1829
  %v1837 = vmul.f32 %v1809, %v1834
  %1839 = vset.pattern.permute.xlu0 2
  %1840 = vperm.xlu0 %1839, %v1824
  %v1841 = vpop.permute.xlu0 %1840
  %1844 = vset.pattern.permute.xlu0 2
  %1845 = vperm.xlu0 %1844, %v1825
  %v1846 = vpop.permute.xlu0 %1845
  %v1848 = vmul.f32 %v1810, %v1841
  %v1849 = vmul.f32 %v1811, %v1846
  %v1850 = vsub.f32 %v1836, %v1848
  %v1851 = vsub.f32 %v1837, %v1849
  %v1852 = vmul.f32 %v1808, %v1841
  %v1853 = vmul.f32 %v1809, %v1846
  %v1854 = vmul.f32 %v1810, %v1829
  %v1855 = vmul.f32 %v1811, %v1834
  %v1856 = vadd.f32 %v1852, %v1854
  %v1857 = vadd.f32 %v1853, %v1855
  %1859 = vset.pattern.permute.xlu0 2
  %1860 = vperm.xlu0 %1859, %v1808
  %v1861 = vpop.permute.xlu0 %1860
  %1864 = vset.pattern.permute.xlu0 2
  %1865 = vperm.xlu0 %1864, %v1809
  %v1866 = vpop.permute.xlu0 %1865
  %v1868 = vlaneseq
  %v1869 = vshrl.u32 %v1868, 7
  %v1870 = vsub.s32 2, %v1869
  %v1871 = vrot.slane %v1850, %v1870
  %v1872 = vlaneseq
  %v1873 = vshrl.u32 %v1872, 7
  %v1874 = vsub.s32 2, %v1873
  %v1875 = vrot.slane %v1851, %v1874
  %v1876 = vmul.f32 %v1861, %v1871
  %v1877 = vmul.f32 %v1866, %v1875
  %1879 = vset.pattern.permute.xlu0 2
  %1880 = vperm.xlu0 %1879, %v1810
  %v1881 = vpop.permute.xlu0 %1880
  %1884 = vset.pattern.permute.xlu0 2
  %1885 = vperm.xlu0 %1884, %v1811
  %v1886 = vpop.permute.xlu0 %1885
  %v1888 = vlaneseq
  %v1889 = vshrl.u32 %v1888, 7
  %v1890 = vsub.s32 2, %v1889
  %v1891 = vrot.slane %v1856, %v1890
  %v1892 = vlaneseq
  %v1893 = vshrl.u32 %v1892, 7
  %v1894 = vsub.s32 2, %v1893
  %v1895 = vrot.slane %v1857, %v1894
  %v1896 = vmul.f32 %v1881, %v1891
  %v1897 = vmul.f32 %v1886, %v1895
  %v1898 = vsub.f32 %v1876, %v1896
  %v1899 = vsub.f32 %v1877, %v1897
  %v1900 = vsub.f32 %v1808, %v1898
  %v1901 = vsub.f32 %v1809, %v1899
  %v1902 = vmul.f32 %v1861, %v1891
  %v1903 = vmul.f32 %v1866, %v1895
  %v1904 = vmul.f32 %v1881, %v1871
  %v1905 = vmul.f32 %v1886, %v1875
  %v1906 = vadd.f32 %v1902, %v1904
  %v1907 = vadd.f32 %v1903, %v1905
  %v1908 = vsub.f32 %v1810, %v1906
  %v1909 = vsub.f32 %v1811, %v1907
  %vm1910 = vcmp.eq.s32.totalorder %v1573, 2
  %v1911 = vsel %vm1910, 1, 0
  %vm1912 = vcmp.eq.s32.totalorder %v1911, 1
  %v1913 = vsel %vm1912, %v1871, %v1900
  %v1914 = vsel %vm1912, %v1875, %v1901
  %v1915 = vsel %vm1912, %v1891, %v1908
  %v1916 = vsel %vm1912, %v1895, %v1909
  %v1917 = vmul.f32 %v1913, %v1913
  %v1918 = vmul.f32 %v1914, %v1914
  %v1919 = vmul.f32 %v1915, %v1915
  %v1920 = vmul.f32 %v1916, %v1916
  %v1921 = vadd.f32 %v1917, %v1919
  %v1922 = vadd.f32 %v1918, %v1920
  %v1923 = vrcp.pop %v1921
  %v1924 = vmul.f32 %v1913, %v1923
  %v1925 = vrcp.pop %v1922
  %v1926 = vmul.f32 %v1914, %v1925
  %v1927 = vsub.f32 0.0, %v1915
  %v1928 = vsub.f32 0.0, %v1916
  %v1929 = vmul.f32 %v1927, %v1923
  %v1930 = vmul.f32 %v1928, %v1925
  %1932 = vset.pattern.permute.xlu0 3
  %1933 = vperm.xlu0 %1932, %v1924
  %v1934 = vpop.permute.xlu0 %1933
  %1937 = vset.pattern.permute.xlu0 3
  %1938 = vperm.xlu0 %1937, %v1926
  %v1939 = vpop.permute.xlu0 %1938
  %v1941 = vmul.f32 %v1913, %v1934
  %v1942 = vmul.f32 %v1914, %v1939
  %1944 = vset.pattern.permute.xlu0 3
  %1945 = vperm.xlu0 %1944, %v1929
  %v1946 = vpop.permute.xlu0 %1945
  %1949 = vset.pattern.permute.xlu0 3
  %1950 = vperm.xlu0 %1949, %v1930
  %v1951 = vpop.permute.xlu0 %1950
  %v1953 = vmul.f32 %v1915, %v1946
  %v1954 = vmul.f32 %v1916, %v1951
  %v1955 = vsub.f32 %v1941, %v1953
  %v1956 = vsub.f32 %v1942, %v1954
  %v1957 = vmul.f32 %v1913, %v1946
  %v1958 = vmul.f32 %v1914, %v1951
  %v1959 = vmul.f32 %v1915, %v1934
  %v1960 = vmul.f32 %v1916, %v1939
  %v1961 = vadd.f32 %v1957, %v1959
  %v1962 = vadd.f32 %v1958, %v1960
  %1964 = vset.pattern.permute.xlu0 3
  %1965 = vperm.xlu0 %1964, %v1913
  %v1966 = vpop.permute.xlu0 %1965
  %1969 = vset.pattern.permute.xlu0 3
  %1970 = vperm.xlu0 %1969, %v1914
  %v1971 = vpop.permute.xlu0 %1970
  %v1973 = vlaneseq
  %v1974 = vshrl.u32 %v1973, 7
  %v1975 = vsub.s32 3, %v1974
  %v1976 = vrot.slane %v1955, %v1975
  %v1977 = vlaneseq
  %v1978 = vshrl.u32 %v1977, 7
  %v1979 = vsub.s32 3, %v1978
  %v1980 = vrot.slane %v1956, %v1979
  %v1981 = vmul.f32 %v1966, %v1976
  %v1982 = vmul.f32 %v1971, %v1980
  %1984 = vset.pattern.permute.xlu0 3
  %1985 = vperm.xlu0 %1984, %v1915
  %v1986 = vpop.permute.xlu0 %1985
  %1989 = vset.pattern.permute.xlu0 3
  %1990 = vperm.xlu0 %1989, %v1916
  %v1991 = vpop.permute.xlu0 %1990
  %v1993 = vlaneseq
  %v1994 = vshrl.u32 %v1993, 7
  %v1995 = vsub.s32 3, %v1994
  %v1996 = vrot.slane %v1961, %v1995
  %v1997 = vlaneseq
  %v1998 = vshrl.u32 %v1997, 7
  %v1999 = vsub.s32 3, %v1998
  %v2000 = vrot.slane %v1962, %v1999
  %v2001 = vmul.f32 %v1986, %v1996
  %v2002 = vmul.f32 %v1991, %v2000
  %v2003 = vsub.f32 %v1981, %v2001
  %v2004 = vsub.f32 %v1982, %v2002
  %v2005 = vsub.f32 %v1913, %v2003
  %v2006 = vsub.f32 %v1914, %v2004
  %v2007 = vmul.f32 %v1966, %v1996
  %v2008 = vmul.f32 %v1971, %v2000
  %v2009 = vmul.f32 %v1986, %v1976
  %v2010 = vmul.f32 %v1991, %v1980
  %v2011 = vadd.f32 %v2007, %v2009
  %v2012 = vadd.f32 %v2008, %v2010
  %v2013 = vsub.f32 %v1915, %v2011
  %v2014 = vsub.f32 %v1916, %v2012
  %vm2015 = vcmp.eq.s32.totalorder %v1573, 3
  %v2016 = vsel %vm2015, 1, 0
  %vm2017 = vcmp.eq.s32.totalorder %v2016, 1
  %v2018 = vsel %vm2017, %v1976, %v2005
  %v2019 = vsel %vm2017, %v1980, %v2006
  %v2020 = vsel %vm2017, %v1996, %v2013
  %v2021 = vsel %vm2017, %v2000, %v2014
  %v2022 = vmul.f32 %v2018, %v2018
  %v2023 = vmul.f32 %v2019, %v2019
  %v2024 = vmul.f32 %v2020, %v2020
  %v2025 = vmul.f32 %v2021, %v2021
  %v2026 = vadd.f32 %v2022, %v2024
  %v2027 = vadd.f32 %v2023, %v2025
  %vm2028 = vcmask 60448
  %v2029 = vsel %vm2028, %v2026, 0.0
  %v2030 = vrot.slane %v2029, 4
  %v2031 = vadd.f32 %v2029, %v2030
  %v2032 = vrot.slane %v2031, 2
  %v2033 = vadd.f32 %v2031, %v2032
  %v2034 = vrot.slane %v2033, 1
  %v2035 = vadd.f32 %v2033, %v2034
  %v2036 = vsel %vm2028, %v2027, 0.0
  %v2037 = vrot.slane %v2036, 4
  %v2038 = vadd.f32 %v2036, %v2037
  %v2039 = vrot.slane %v2038, 2
  %v2040 = vadd.f32 %v2038, %v2039
  %v2041 = vrot.slane %v2040, 1
  %v2042 = vadd.f32 %v2040, %v2041
  %v2046 = vunpack.c.l.s4 1966171168
  %v2047 = vunpack.c.0.s8 %v2046
  %v2048 = vlaneseq
  %v2049 = vshrl.u32 %v2048, 7
  %v2050 = vsub.s32 %v2047, %v2049
  %v2051 = vrot.slane %v2035, %v2050
  %v2053 = vunpack.c.l.s4 1966171168
  %v2054 = vunpack.c.0.s8 %v2053
  %v2055 = vlaneseq
  %v2056 = vshrl.u32 %v2055, 7
  %v2057 = vsub.s32 %v2054, %v2056
  %v2058 = vrot.slane %v2051, %v2057
  %v2060 = vunpack.c.l.s4 1966171168
  %v2061 = vunpack.c.0.s8 %v2060
  %v2062 = vlaneseq
  %v2063 = vshrl.u32 %v2062, 7
  %v2064 = vsub.s32 %v2061, %v2063
  %v2065 = vrot.slane %v2042, %v2064
  %v2067 = vunpack.c.l.s4 1966171168
  %v2068 = vunpack.c.0.s8 %v2067
  %v2069 = vlaneseq
  %v2070 = vshrl.u32 %v2069, 7
  %v2071 = vsub.s32 %v2068, %v2070
  %v2072 = vrot.slane %v2065, %v2071
  %2073 = vrot.lane.b32.xlu0 %v2058, 124
  %v2074 = vpop.permute.xlu0 %2073
  %2075 = vrot.lane.b32.xlu0 %v2072, 124
  %v2076 = vpop.permute.xlu0 %2075
  %v2079 = vrcp.pop %v2074
  %v2080 = vmul.f32 %v1281, %v2079
  %v2081 = vrcp.pop %v2076
  %v2082 = vmul.f32 %v1283, %v2081
  %v2083 = vrsqrt.pop %v2080
  %v2084 = vmul.f32 %v2080, %v2083
  %vm2085 = vcmp.eq.f32.partialorder %v2080, inf
  %v2086 = vsel %vm2085, %v2080, %v2084
  %vm2087 = vcmp.eq.f32.partialorder %v2080, 0.0
  %v2088 = vand.u32 %v2080, 2147483648
  %v2089 = vsel %vm2087, %v2088, %v2086
  %v2090 = vrsqrt.pop %v2082
  %v2091 = vmul.f32 %v2082, %v2090
  %vm2092 = vcmp.eq.f32.partialorder %v2082, inf
  %v2093 = vsel %vm2092, %v2082, %v2091
  %vm2094 = vcmp.eq.f32.partialorder %v2082, 0.0
  %v2095 = vand.u32 %v2082, 2147483648
  %v2096 = vsel %vm2094, %v2095, %v2093
  %v2099 = vlaneseq
  %v2100 = vshrl.u32 %v2099, 7
  %v2101 = vsub.s32 0, %v2100
  %v2102 = vrot.slane %v2089, %v2101
  %v2103 = vlaneseq
  %v2104 = vshrl.u32 %v2103, 7
  %v2105 = vsub.s32 0, %v2104
  %v2106 = vrot.slane %v2096, %v2105
  %2107 = vrot.lane.b32.xlu0 %v2102, 4
  %v2108 = vpop.permute.xlu0 %2107
  %2109 = vrot.lane.b32.xlu0 %v2106, 4
  %v2110 = vpop.permute.xlu0 %2109
  %v2113 = vmul.f32 %v2018, %v2108
  %v2114 = vmul.f32 %v2019, %v2110
  %v2115 = vmul.f32 %v2020, %v2108
  %v2116 = vmul.f32 %v2021, %v2110
  %2119 = vrot.lane.b32.xlu0 %v2113, 124
  %v2120 = vpop.permute.xlu0 %2119
  %2121 = vrot.lane.b32.xlu0 %v2114, 124
  %v2122 = vpop.permute.xlu0 %2121
  %v2125 = vsel %vm1587, %v2120, %v2115
  %v2126 = vsel %vm1587, %v2122, %v2116
  %vm2127 = vcmask 60416
  %2128 = vst.msk [vmem:[%s27] sm:$0xf] %vm2127, %v2125
  %2129 = vst.msk [vmem:[%s27 + $0x4] sm:$0xf] %vm2127, %v2126
  %2131 = vset.pattern.permute.xlu0 0
  %2132 = vperm.xlu0 %2131, %v1310
  %v2133 = vpop.permute.xlu0 %2132
  %2136 = vset.pattern.permute.xlu0 0
  %2137 = vperm.xlu0 %2136, %v1311
  %v2138 = vpop.permute.xlu0 %2137
  %v2140 = vlaneseq
  %v2141 = vshrl.u32 %v2140, 7
  %v2142 = vsub.s32 0, %v2141
  %v2143 = vrot.slane %v2113, %v2142
  %v2144 = vlaneseq
  %v2145 = vshrl.u32 %v2144, 7
  %v2146 = vsub.s32 0, %v2145
  %v2147 = vrot.slane %v2114, %v2146
  %v2148 = vmul.f32 %v2133, %v2143
  %v2149 = vmul.f32 %v2138, %v2147
  %v2150 = vadd.f32 %v2148, 0.0
  %v2151 = vadd.f32 %v2149, 0.0
  %2153 = vset.pattern.permute.xlu0 0
  %2154 = vperm.xlu0 %2153, %v1312
  %v2155 = vpop.permute.xlu0 %2154
  %2158 = vset.pattern.permute.xlu0 0
  %2159 = vperm.xlu0 %2158, %v1313
  %v2160 = vpop.permute.xlu0 %2159
  %v2162 = vlaneseq
  %v2163 = vshrl.u32 %v2162, 7
  %v2164 = vsub.s32 0, %v2163
  %v2165 = vrot.slane %v2115, %v2164
  %v2166 = vlaneseq
  %v2167 = vshrl.u32 %v2166, 7
  %v2168 = vsub.s32 0, %v2167
  %v2169 = vrot.slane %v2116, %v2168
  %v2170 = vmul.f32 %v2155, %v2165
  %v2171 = vmul.f32 %v2160, %v2169
  %v2172 = vsub.f32 %v2150, %v2170
  %v2173 = vsub.f32 %v2151, %v2171
  %v2174 = vmul.f32 %v2133, %v2165
  %v2175 = vmul.f32 %v2138, %v2169
  %v2176 = vadd.f32 %v2174, 0.0
  %v2177 = vadd.f32 %v2175, 0.0
  %v2178 = vmul.f32 %v2155, %v2143
  %v2179 = vmul.f32 %v2160, %v2147
  %v2180 = vadd.f32 %v2176, %v2178
  %v2181 = vadd.f32 %v2177, %v2179
  %2182 = vset.pattern.permute.xlu0 1
  %2183 = vperm.xlu0 %2182, %v1310
  %v2184 = vpop.permute.xlu0 %2183
  %2186 = vset.pattern.permute.xlu0 1
  %2187 = vperm.xlu0 %2186, %v1311
  %v2188 = vpop.permute.xlu0 %2187
  %v2190 = vlaneseq
  %v2191 = vshrl.u32 %v2190, 7
  %v2192 = vsub.s32 1, %v2191
  %v2193 = vrot.slane %v2113, %v2192
  %v2194 = vlaneseq
  %v2195 = vshrl.u32 %v2194, 7
  %v2196 = vsub.s32 1, %v2195
  %v2197 = vrot.slane %v2114, %v2196
  %v2198 = vmul.f32 %v2184, %v2193
  %v2199 = vmul.f32 %v2188, %v2197
  %v2200 = vadd.f32 %v2172, %v2198
  %v2201 = vadd.f32 %v2173, %v2199
  %2202 = vset.pattern.permute.xlu0 1
  %2203 = vperm.xlu0 %2202, %v1312
  %v2204 = vpop.permute.xlu0 %2203
  %2206 = vset.pattern.permute.xlu0 1
  %2207 = vperm.xlu0 %2206, %v1313
  %v2208 = vpop.permute.xlu0 %2207
  %v2210 = vlaneseq
  %v2211 = vshrl.u32 %v2210, 7
  %v2212 = vsub.s32 1, %v2211
  %v2213 = vrot.slane %v2115, %v2212
  %v2214 = vlaneseq
  %v2215 = vshrl.u32 %v2214, 7
  %v2216 = vsub.s32 1, %v2215
  %v2217 = vrot.slane %v2116, %v2216
  %v2218 = vmul.f32 %v2204, %v2213
  %v2219 = vmul.f32 %v2208, %v2217
  %v2220 = vsub.f32 %v2200, %v2218
  %v2221 = vsub.f32 %v2201, %v2219
  %v2222 = vmul.f32 %v2184, %v2213
  %v2223 = vmul.f32 %v2188, %v2217
  %v2224 = vadd.f32 %v2180, %v2222
  %v2225 = vadd.f32 %v2181, %v2223
  %v2226 = vmul.f32 %v2204, %v2193
  %v2227 = vmul.f32 %v2208, %v2197
  %v2228 = vadd.f32 %v2224, %v2226
  %v2229 = vadd.f32 %v2225, %v2227
  %2230 = vset.pattern.permute.xlu0 2
  %2231 = vperm.xlu0 %2230, %v1310
  %v2232 = vpop.permute.xlu0 %2231
  %2234 = vset.pattern.permute.xlu0 2
  %2235 = vperm.xlu0 %2234, %v1311
  %v2236 = vpop.permute.xlu0 %2235
  %v2238 = vlaneseq
  %v2239 = vshrl.u32 %v2238, 7
  %v2240 = vsub.s32 2, %v2239
  %v2241 = vrot.slane %v2113, %v2240
  %v2242 = vlaneseq
  %v2243 = vshrl.u32 %v2242, 7
  %v2244 = vsub.s32 2, %v2243
  %v2245 = vrot.slane %v2114, %v2244
  %v2246 = vmul.f32 %v2232, %v2241
  %v2247 = vmul.f32 %v2236, %v2245
  %v2248 = vadd.f32 %v2220, %v2246
  %v2249 = vadd.f32 %v2221, %v2247
  %2250 = vset.pattern.permute.xlu0 2
  %2251 = vperm.xlu0 %2250, %v1312
  %v2252 = vpop.permute.xlu0 %2251
  %2254 = vset.pattern.permute.xlu0 2
  %2255 = vperm.xlu0 %2254, %v1313
  %v2256 = vpop.permute.xlu0 %2255
  %v2258 = vlaneseq
  %v2259 = vshrl.u32 %v2258, 7
  %v2260 = vsub.s32 2, %v2259
  %v2261 = vrot.slane %v2115, %v2260
  %v2262 = vlaneseq
  %v2263 = vshrl.u32 %v2262, 7
  %v2264 = vsub.s32 2, %v2263
  %v2265 = vrot.slane %v2116, %v2264
  %v2266 = vmul.f32 %v2252, %v2261
  %v2267 = vmul.f32 %v2256, %v2265
  %v2268 = vsub.f32 %v2248, %v2266
  %v2269 = vsub.f32 %v2249, %v2267
  %v2270 = vmul.f32 %v2232, %v2261
  %v2271 = vmul.f32 %v2236, %v2265
  %v2272 = vadd.f32 %v2228, %v2270
  %v2273 = vadd.f32 %v2229, %v2271
  %v2274 = vmul.f32 %v2252, %v2241
  %v2275 = vmul.f32 %v2256, %v2245
  %v2276 = vadd.f32 %v2272, %v2274
  %v2277 = vadd.f32 %v2273, %v2275
  %2278 = vset.pattern.permute.xlu0 3
  %2279 = vperm.xlu0 %2278, %v1310
  %v2280 = vpop.permute.xlu0 %2279
  %2282 = vset.pattern.permute.xlu0 3
  %2283 = vperm.xlu0 %2282, %v1311
  %v2284 = vpop.permute.xlu0 %2283
  %v2286 = vlaneseq
  %v2287 = vshrl.u32 %v2286, 7
  %v2288 = vsub.s32 3, %v2287
  %v2289 = vrot.slane %v2113, %v2288
  %v2290 = vlaneseq
  %v2291 = vshrl.u32 %v2290, 7
  %v2292 = vsub.s32 3, %v2291
  %v2293 = vrot.slane %v2114, %v2292
  %v2294 = vmul.f32 %v2280, %v2289
  %v2295 = vmul.f32 %v2284, %v2293
  %v2296 = vadd.f32 %v2268, %v2294
  %v2297 = vadd.f32 %v2269, %v2295
  %2298 = vset.pattern.permute.xlu0 3
  %2299 = vperm.xlu0 %2298, %v1312
  %v2300 = vpop.permute.xlu0 %2299
  %2302 = vset.pattern.permute.xlu0 3
  %2303 = vperm.xlu0 %2302, %v1313
  %v2304 = vpop.permute.xlu0 %2303
  %v2306 = vlaneseq
  %v2307 = vshrl.u32 %v2306, 7
  %v2308 = vsub.s32 3, %v2307
  %v2309 = vrot.slane %v2115, %v2308
  %v2310 = vlaneseq
  %v2311 = vshrl.u32 %v2310, 7
  %v2312 = vsub.s32 3, %v2311
  %v2313 = vrot.slane %v2116, %v2312
  %v2314 = vmul.f32 %v2300, %v2309
  %v2315 = vmul.f32 %v2304, %v2313
  %v2316 = vsub.f32 %v2296, %v2314
  %v2317 = vsub.f32 %v2297, %v2315
  %v2318 = vmul.f32 %v2280, %v2309
  %v2319 = vmul.f32 %v2284, %v2313
  %v2320 = vadd.f32 %v2276, %v2318
  %v2321 = vadd.f32 %v2277, %v2319
  %v2322 = vmul.f32 %v2300, %v2289
  %v2323 = vmul.f32 %v2304, %v2293
  %v2324 = vadd.f32 %v2320, %v2322
  %v2325 = vadd.f32 %v2321, %v2323
  %v2326 = vmul.f32 %v2316, %v2316
  %v2327 = vmul.f32 %v2317, %v2317
  %v2328 = vmul.f32 %v2324, %v2324
  %v2329 = vmul.f32 %v2325, %v2325
  %v2330 = vadd.f32 %v2326, %v2328
  %v2331 = vadd.f32 %v2327, %v2329
  %2333 = vrot.lane.b32.xlu0 %v1578, 4
  %v2334 = vpop.permute.xlu0 %2333
  %v2336 = vmul.f32 %v2330, %v2334
  %v2337 = vmul.f32 %v2331, %v2334
  %2340 = vrot.lane.b32.xlu0 %v2336, 124
  %v2341 = vpop.permute.xlu0 %2340
  %2342 = vrot.lane.b32.xlu0 %v2337, 124
  %v2343 = vpop.permute.xlu0 %2342
  %vm2346 = vcmask 27648
  %v2347 = vsel %vm2346, %v2341, 0.0
  %2348 = vadd.xlane.f32.xlu0 %v2347
  %v2349 = vpop.xlane.xlu0 %2348
  %v2350 = vsel %vm2346, %v2343, 0.0
  %2351 = vadd.xlane.f32.xlu0 %v2350
  %v2352 = vpop.xlane.xlu0 %2351
  %2355 = vrot.lane.b32.xlu0 %v2330, 124
  %v2356 = vpop.permute.xlu0 %2355
  %2357 = vrot.lane.b32.xlu0 %v2331, 124
  %v2358 = vpop.permute.xlu0 %2357
  %v2361 = vsel %vm2346, %v2356, 0.0
  %2362 = vadd.xlane.f32.xlu0 %v2361
  %v2363 = vpop.xlane.xlu0 %2362
  %v2364 = vsel %vm2346, %v2358, 0.0
  %2365 = vadd.xlane.f32.xlu0 %v2364
  %v2366 = vpop.xlane.xlu0 %2365
  %v2367 = vsub.f32 %v2363, %v2349
  %v2368 = vsub.f32 %v2366, %v2352
  %v2369 = vadd.f32 %v2367, 1.0
  %v2370 = vadd.f32 %v2368, 1.0
  %v2371 = vrcp.pop %v2369
  %v2372 = vmul.f32 %v2349, %v2371
  %v2373 = vrcp.pop %v2370
  %v2374 = vmul.f32 %v2352, %v2373
  %v2375 = vadd.f32 %v2372, 1.0
  %v2376 = vadd.f32 %v2374, 1.0
  %v2377 = vlog2.pop %v2375
  %v2378 = vmul.f32 %v2377, 0.6931472
  %v2379 = vlog2.pop %v2376
  %v2380 = vmul.f32 %v2379, 0.6931472
  %v2381 = vmul.f32 %v2378, 1.442695
  %v2382 = vmul.f32 %v2380, 1.442695
  %vm2383 = vcmask 1043456
  %v2384 = vsel %vm2383, %v2381, 0.0
  %v2385 = vrot.slane %v2384, 4
  %v2386 = vadd.f32 %v2384, %v2385
  %v2387 = vrot.slane %v2386, 2
  %v2388 = vadd.f32 %v2386, %v2387
  %v2389 = vrot.slane %v2388, 1
  %v2390 = vadd.f32 %v2388, %v2389
  %v2391 = vsel %vm2383, %v2382, 0.0
  %v2392 = vrot.slane %v2391, 4
  %v2393 = vadd.f32 %v2391, %v2392
  %v2394 = vrot.slane %v2393, 2
  %v2395 = vadd.f32 %v2393, %v2394
  %v2396 = vrot.slane %v2395, 1
  %v2397 = vadd.f32 %v2395, %v2396
  %vm2398 = vcmask 0
  %2399 = vst.msk [vmem:[%s28] sm:$0x1] %vm2398, %v2390
  %2400 = vst.msk [vmem:[%s28 + $0x1] sm:$0x1] %vm2398, %v2397
  // Predicated region
  $region110: #{db_fc_cnn_forward.1} parent=0 // pred_check
    _
  $region111: #{db_fc_cnn_forward.1} parent=0 // pred_check_branch
    %2402 = sbr.rel (0) target = $region113
  $region112: #{db_fc_cnn_forward.1} parent=0 // pred_region
    _
  $region113: #{db_fc_cnn_forward.1} parent=0 // pred_fallthru
    _
  // Predicated region
  $region114: #{db_fc_cnn_forward.1} parent=0 // pred_check
    _
  $region115: #{db_fc_cnn_forward.1} parent=0 // pred_check_branch
    %2404 = sbr.rel (0) target = $region117
  $region116: #{db_fc_cnn_forward.1} parent=0 // pred_region
    _
  $region117: #{db_fc_cnn_forward.1} parent=0 // pred_fallthru
    _
  // Predicated region
  $region118: #{db_fc_cnn_forward.1} parent=0 // pred_check
    _
  $region119: #{db_fc_cnn_forward.1} parent=0 // pred_check_branch
    %2406 = sbr.rel (0) target = $region121
  $region120: #{db_fc_cnn_forward.1} parent=0 // pred_region
    _
  $region121: #{db_fc_cnn_forward.1} parent=0 // pred_fallthru
    _
  // Predicated region
  $region122: #{db_fc_cnn_forward.1} parent=0 // pred_check
    _
  $region123: #{db_fc_cnn_forward.1} parent=0 // pred_check_branch
    %2408 = sbr.rel (0) target = $region125
  $region124: #{db_fc_cnn_forward.1} parent=0 // pred_region
    _
  $region125: #{db_fc_cnn_forward.1} parent=0 // pred_fallthru
    _

</llo_original>
